<compile_context>
chip_gen: v7x
topology: tpu7x:2x2x1
jax: 0.10.0
libtpu: 0.0.40
codegen_flags: <defaults>
</compile_context>

<pallas_src>
import math
from functools import partial

import jax
import jax.numpy as jnp
from jax import lax
from jax.experimental import pallas as pl
from jax.experimental.pallas import tpu as pltpu

# ---- small synthetic config (CLIP-text-like, shrunk but lane-dense) ----------
B, S, D, H = 2, 8, 128, 4          # batch, seq, hidden, heads
DH = D // H                         # head dim
FF = 4 * D                          # MLP hidden
VOCAB = 100
PROJ = 128                          # text_projection output dim (lane-dense)
N_LAYERS = 2
LN_EPS = 1e-5


# --------------------------- fused Pallas kernel ------------------------------
def clip_encoder_kernel(
    x_ref, onehot_ref,
    ln1_g_ref, ln1_b_ref, qkv_w_ref, qkv_b_ref, o_w_ref, o_b_ref,
    ln2_g_ref, ln2_b_ref, fc1_w_ref, fc1_b_ref, fc2_w_ref, fc2_b_ref,
    lnf_g_ref, lnf_b_ref, proj_ref, out_ref,
):
    """One grid step = one batch element, full forward pass resident in VMEM."""
    s = x_ref.shape[1]
    d = x_ref.shape[2]
    n_layers = qkv_w_ref.shape[0]
    dh = d // H
    scale = 1.0 / math.sqrt(dh)

    def ln(v, g, b):
        v = v.astype(jnp.float32)
        mu = jnp.mean(v, axis=-1, keepdims=True)
        var = jnp.mean(jnp.square(v - mu), axis=-1, keepdims=True)
        return (v - mu) * lax.rsqrt(var + LN_EPS) * g + b

    # causal mask, built once (hoisted) and reused by every layer / head
    row = lax.broadcasted_iota(jnp.int32, (s, s), 0)
    col = lax.broadcasted_iota(jnp.int32, (s, s), 1)
    causal = col <= row

    x = x_ref[0].astype(jnp.float32)                                   # [S, D]

    for l in range(n_layers):                                          # static unroll
        # ---- pre-LN multi-head causal self-attention --------------------------
        x2 = ln(x, ln1_g_ref[l], ln1_b_ref[l])
        qkv = (jnp.dot(x2.astype(jnp.bfloat16), qkv_w_ref[l],
                       preferred_element_type=jnp.float32)
               + qkv_b_ref[l])                                         # [S, 3D] f32

        heads = []
        for hh in range(H):                                            # static unroll
            q_h = qkv[:, hh * dh:(hh + 1) * dh].astype(jnp.bfloat16)
            k_h = qkv[:, d + hh * dh:d + (hh + 1) * dh].astype(jnp.bfloat16)
            v_h = qkv[:, 2 * d + hh * dh:2 * d + (hh + 1) * dh].astype(jnp.bfloat16)
            # contract last dims directly: no explicit K transpose materialized
            sc = lax.dot_general(q_h, k_h, (((1,), (1,)), ((), ())),
                                 preferred_element_type=jnp.float32) * scale
            sc = jnp.where(causal, sc, jnp.float32(-1e9))              # mask in f32
            sc = sc - jnp.max(sc, axis=-1, keepdims=True)
            p = jnp.exp(sc)
            p = p * pl.reciprocal(jnp.sum(p, axis=-1, keepdims=True), approx=True)
            heads.append(jnp.dot(p.astype(jnp.bfloat16), v_h,
                                 preferred_element_type=jnp.float32))  # [S, DH]
        attn = jnp.concatenate(heads, axis=-1)                         # [S, D]

        x = (jnp.dot(attn.astype(jnp.bfloat16), o_w_ref[l],
                     preferred_element_type=jnp.float32)
             + o_b_ref[l] + x)                                         # out-proj + residual

        # ---- pre-LN MLP with quick-GELU ---------------------------------------
        x2 = ln(x, ln2_g_ref[l], ln2_b_ref[l])
        h = (jnp.dot(x2.astype(jnp.bfloat16), fc1_w_ref[l],
                     preferred_element_type=jnp.float32)
             + fc1_b_ref[l])                                           # [S, FF]
        h = h * jax.nn.sigmoid(1.702 * h)                              # quick-gelu (f32, EUP)
        x = (jnp.dot(h.astype(jnp.bfloat16), fc2_w_ref[l],
                     preferred_element_type=jnp.float32)
             + fc2_b_ref[l] + x)                                       # residual

    # ---- EOS pooling (one-hot gather on the MXU) + final LN + projection ------
    pooled = jnp.dot(onehot_ref[0], x, preferred_element_type=jnp.float32)   # [1, D]
    pooled = ln(pooled, lnf_g_ref[...], lnf_b_ref[...])
    feats = jnp.dot(pooled.astype(jnp.bfloat16), proj_ref[...],
                    preferred_element_type=jnp.float32)                      # [1, PROJ]
    out_ref[0] = feats.astype(out_ref.dtype)


# ----------------------- parameters (deterministic) ---------------------------
def init_params(key):
    def nrm(k, shape, scale=0.02):
        return scale * jax.random.normal(k, shape, dtype=jnp.float32)

    k = jax.random.split(key, 7)
    f32, bf16 = jnp.float32, jnp.bfloat16
    return {
        "tok_emb": nrm(k[0], (VOCAB, D)),
        "pos_emb": nrm(k[1], (S, D)),
        # per-layer weights stacked along a leading N_LAYERS axis;
        # matmul weights stored in bf16 (f32 MXU accumulation in-kernel)
        "ln1_g": jnp.ones((N_LAYERS, 1, D), f32),
        "ln1_b": jnp.zeros((N_LAYERS, 1, D), f32),
        "qkv_w": nrm(k[2], (N_LAYERS, D, 3 * D)).astype(bf16),   # fused Q|K|V
        "qkv_b": jnp.zeros((N_LAYERS, 1, 3 * D), f32),
        "o_w": nrm(k[3], (N_LAYERS, D, D)).astype(bf16),
        "o_b": jnp.zeros((N_LAYERS, 1, D), f32),
        "ln2_g": jnp.ones((N_LAYERS, 1, D), f32),
        "ln2_b": jnp.zeros((N_LAYERS, 1, D), f32),
        "fc1_w": nrm(k[4], (N_LAYERS, D, FF)).astype(bf16),
        "fc1_b": jnp.zeros((N_LAYERS, 1, FF), f32),
        "fc2_w": nrm(k[5], (N_LAYERS, FF, D)).astype(bf16),
        "fc2_b": jnp.zeros((N_LAYERS, 1, D), f32),
        "lnf_g": jnp.ones((1, D), f32),
        "lnf_b": jnp.zeros((1, D), f32),
        "text_projection": nrm(k[6], (D, PROJ)).astype(bf16),
    }


# ------------------------------ forward pass ----------------------------------
def clip_text_encode(params, input_ids):
    """MldTextEncoder.forward ('clip' branch): ids -> [B, 1, PROJ]."""
    b, s = input_ids.shape
    d = params["tok_emb"].shape[1]
    proj = params["text_projection"].shape[1]

    # glue: embedding gather + positional embedding, EOS one-hot (CLIP: EOS = max id)
    x = jnp.take(params["tok_emb"], input_ids, axis=0) + params["pos_emb"][None, :s, :]
    eos_onehot = jax.nn.one_hot(jnp.argmax(input_ids, axis=-1), s,
                                dtype=jnp.float32)[:, None, :]          # [B, 1, S]

    w_args = (
        params["ln1_g"], params["ln1_b"], params["qkv_w"], params["qkv_b"],
        params["o_w"], params["o_b"], params["ln2_g"], params["ln2_b"],
        params["fc1_w"], params["fc1_b"], params["fc2_w"], params["fc2_b"],
        params["lnf_g"], params["lnf_b"], params["text_projection"],
    )

    def full_spec(arr):
        # whole weight array resident in VMEM; constant block index => pipeline
        # does not re-fetch it between grid steps
        nd = arr.ndim
        return pl.BlockSpec(arr.shape, lambda i, _nd=nd: (0,) * _nd)

    out = pl.pallas_call(
        clip_encoder_kernel,
        grid=(b,),                                                      # one step per batch elem
        in_specs=[
            pl.BlockSpec((1, s, d), lambda i: (i, 0, 0)),               # activations
            pl.BlockSpec((1, 1, s), lambda i: (i, 0, 0)),               # EOS one-hot
            *[full_spec(w) for w in w_args],
        ],
        out_specs=pl.BlockSpec((1, 1, proj), lambda i: (i, 0, 0)),
        out_shape=jax.ShapeDtypeStruct((b, 1, proj), jnp.float32),
        compiler_params=pltpu.CompilerParams(
            dimension_semantics=("parallel",)),                         # shard batch over TCs (v7x)
    )(x, eos_onehot, *w_args)
    return out                                                          # (B, 1, PROJ)


# --------------------- pure-JAX reference (same numerics) ----------------------
def clip_text_encode_ref(params, input_ids):
    bf16 = jnp.bfloat16
    b, s = input_ids.shape
    d = params["tok_emb"].shape[1]
    dh = d // H
    scale = 1.0 / math.sqrt(dh)

    def ln(v, g, bb):
        v = v.astype(jnp.float32)
        mu = jnp.mean(v, -1, keepdims=True)
        var = jnp.mean(jnp.square(v - mu), -1, keepdims=True)
        return (v - mu) * lax.rsqrt(var + LN_EPS) * g + bb

    x = jnp.take(params["tok_emb"], input_ids, axis=0) + params["pos_emb"][None, :s, :]
    x = x.astype(jnp.float32)
    causal = jnp.arange(s)[None, :] <= jnp.arange(s)[:, None]

    for l in range(N_LAYERS):
        x2 = ln(x, params["ln1_g"][l], params["ln1_b"][l])
        qkv = jnp.einsum("bsd,de->bse", x2.astype(bf16), params["qkv_w"][l],
                         preferred_element_type=jnp.float32) + params["qkv_b"][l]
        q = qkv[..., :d].reshape(b, s, H, dh)
        k = qkv[..., d:2 * d].reshape(b, s, H, dh)
        v = qkv[..., 2 * d:].reshape(b, s, H, dh)
        sc = jnp.einsum("bqhd,bkhd->bhqk", q.astype(bf16), k.astype(bf16),
                        preferred_element_type=jnp.float32) * scale
        sc = jnp.where(causal[None, None], sc, jnp.float32(-1e9))
        sc = sc - sc.max(-1, keepdims=True)
        p = jnp.exp(sc)
        p = p / p.sum(-1, keepdims=True)
        attn = jnp.einsum("bhqk,bkhd->bqhd", p.astype(bf16), v.astype(bf16),
                          preferred_element_type=jnp.float32).reshape(b, s, d)
        x = jnp.einsum("bsd,de->bse", attn.astype(bf16), params["o_w"][l],
                       preferred_element_type=jnp.float32) + params["o_b"][l] + x
        x2 = ln(x, params["ln2_g"][l], params["ln2_b"][l])
        h = jnp.einsum("bsd,df->bsf", x2.astype(bf16), params["fc1_w"][l],
                       preferred_element_type=jnp.float32) + params["fc1_b"][l]
        h = h * jax.nn.sigmoid(1.702 * h)
        x = jnp.einsum("bsf,fd->bsd", h.astype(bf16), params["fc2_w"][l],
                       preferred_element_type=jnp.float32) + params["fc2_b"][l] + x

    eos = jnp.argmax(input_ids, axis=-1)
    pooled = x[jnp.arange(b), eos]                                      # [B, D]
    pooled = ln(pooled, params["lnf_g"][0], params["lnf_b"][0])
    feats = jnp.dot(pooled.astype(bf16), params["text_projection"],
                    preferred_element_type=jnp.float32)
    return feats[:, None, :]                                            # (B, 1, PROJ)


# --------------------------------- main ----------------------------------------
if __name__ == "__main__":
    key = jax.random.PRNGKey(0)
    pkey, ikey = jax.random.split(key)
    params = init_params(pkey)

    # TODO(synk): string tokenization (HF/CLIP tokenizer) has no Pallas equivalent;
    # synthetic token ids stand in for tokenizer(texts).input_ids.
    input_ids = jax.random.randint(ikey, (B, S), 1, VOCAB - 1, dtype=jnp.int32)
    input_ids = input_ids.at[:, -1].set(VOCAB - 1)  # EOS = highest id (CLIP convention)

    out = jax.jit(partial(clip_text_encode, params))(input_ids)
    out = jax.block_until_ready(out)
    assert out.shape == (B, 1, PROJ) and out.dtype == jnp.float32

    # correctness vs. a pure-JAX reference doing identical bf16/f32 casting
    ref = clip_text_encode_ref(params, input_ids)
    err = float(jnp.max(jnp.abs(out - ref)))
    assert err < 5e-2, f"kernel/reference mismatch: max|diff|={err}"

    print("KERNEL_OK")
</pallas_src>

<mosaic_0001>
module attributes {stable_mosaic.version = 11 : i64} {
  func.func @clip_encoder_kernel(%arg0: i32, %arg1: memref<1x8x128xf32, #tpu.memory_space<vmem>>, %arg2: memref<1x1x8xf32, #tpu.memory_space<vmem>>, %arg3: memref<2x1x128xf32, #tpu.memory_space<vmem>>, %arg4: memref<2x1x128xf32, #tpu.memory_space<vmem>>, %arg5: memref<2x128x384xbf16, #tpu.memory_space<vmem>>, %arg6: memref<2x1x384xf32, #tpu.memory_space<vmem>>, %arg7: memref<2x128x128xbf16, #tpu.memory_space<vmem>>, %arg8: memref<2x1x128xf32, #tpu.memory_space<vmem>>, %arg9: memref<2x1x128xf32, #tpu.memory_space<vmem>>, %arg10: memref<2x1x128xf32, #tpu.memory_space<vmem>>, %arg11: memref<2x128x512xbf16, #tpu.memory_space<vmem>>, %arg12: memref<2x1x512xf32, #tpu.memory_space<vmem>>, %arg13: memref<2x512x128xbf16, #tpu.memory_space<vmem>>, %arg14: memref<2x1x128xf32, #tpu.memory_space<vmem>>, %arg15: memref<1x128xf32, #tpu.memory_space<vmem>>, %arg16: memref<1x128xf32, #tpu.memory_space<vmem>>, %arg17: memref<128x128xbf16, #tpu.memory_space<vmem>>, %arg18: memref<1x1x128xf32, #tpu.memory_space<vmem>>) attributes {dimension_semantics = [#tpu.dimension_semantics<parallel>], iteration_bounds = array<i64: 2>, scalar_prefetch = 0 : i64, scratch_operands = 0 : i64, tpu.core_type = #tpu.core_type<tc>, window_params = [{transform_indices = @transform_0, window_bounds = array<i64: 1, 8, 128>}, {transform_indices = @transform_1, window_bounds = array<i64: 1, 1, 8>}, {pipeline_mode = #tpu.pipeline_mode<synchronous>, transform_indices = @transform_2, window_bounds = array<i64: 2, 1, 128>}, {pipeline_mode = #tpu.pipeline_mode<synchronous>, transform_indices = @transform_3, window_bounds = array<i64: 2, 1, 128>}, {pipeline_mode = #tpu.pipeline_mode<synchronous>, transform_indices = @transform_4, window_bounds = array<i64: 2, 128, 384>}, {pipeline_mode = #tpu.pipeline_mode<synchronous>, transform_indices = @transform_5, window_bounds = array<i64: 2, 1, 384>}, {pipeline_mode = #tpu.pipeline_mode<synchronous>, transform_indices = @transform_6, window_bounds = array<i64: 2, 128, 128>}, {pipeline_mode = #tpu.pipeline_mode<synchronous>, transform_indices = @transform_7, window_bounds = array<i64: 2, 1, 128>}, {pipeline_mode = #tpu.pipeline_mode<synchronous>, transform_indices = @transform_8, window_bounds = array<i64: 2, 1, 128>}, {pipeline_mode = #tpu.pipeline_mode<synchronous>, transform_indices = @transform_9, window_bounds = array<i64: 2, 1, 128>}, {pipeline_mode = #tpu.pipeline_mode<synchronous>, transform_indices = @transform_10, window_bounds = array<i64: 2, 128, 512>}, {pipeline_mode = #tpu.pipeline_mode<synchronous>, transform_indices = @transform_11, window_bounds = array<i64: 2, 1, 512>}, {pipeline_mode = #tpu.pipeline_mode<synchronous>, transform_indices = @transform_12, window_bounds = array<i64: 2, 512, 128>}, {pipeline_mode = #tpu.pipeline_mode<synchronous>, transform_indices = @transform_13, window_bounds = array<i64: 2, 1, 128>}, {pipeline_mode = #tpu.pipeline_mode<synchronous>, transform_indices = @transform_14, window_bounds = array<i64: 1, 128>}, {pipeline_mode = #tpu.pipeline_mode<synchronous>, transform_indices = @transform_15, window_bounds = array<i64: 1, 128>}, {pipeline_mode = #tpu.pipeline_mode<synchronous>, transform_indices = @transform_16, window_bounds = array<i64: 128, 128>}, {transform_indices = @transform_17, window_bounds = array<i64: 1, 1, 128>}]} {
    %0 = tpu.iota {dimensions = array<i32: 0>} : vector<8x8xi32>
    %1 = tpu.iota {dimensions = array<i32: 1>} : vector<8x8xi32>
    %2 = arith.cmpi sle, %1, %0 : vector<8x8xi32>
    %c0 = arith.constant 0 : index
    %c0_0 = arith.constant 0 : index
    %c0_1 = arith.constant 0 : index
    %3 = vector.load %arg1[%c0, %c0_0, %c0_1] : memref<1x8x128xf32, #tpu.memory_space<vmem>>, vector<1x8x128xf32>
    %4 = vector.shape_cast %3 : vector<1x8x128xf32> to vector<8x128xf32>
    %c0_2 = arith.constant 0 : index
    %c0_3 = arith.constant 0 : index
    %c0_4 = arith.constant 0 : index
    %5 = vector.load %arg3[%c0_2, %c0_3, %c0_4] : memref<2x1x128xf32, #tpu.memory_space<vmem>>, vector<1x1x128xf32>
    %6 = vector.shape_cast %5 : vector<1x1x128xf32> to vector<1x128xf32>
    %c0_5 = arith.constant 0 : index
    %c0_6 = arith.constant 0 : index
    %c0_7 = arith.constant 0 : index
    %7 = vector.load %arg4[%c0_5, %c0_6, %c0_7] : memref<2x1x128xf32, #tpu.memory_space<vmem>>, vector<1x1x128xf32>
    %8 = vector.shape_cast %7 : vector<1x1x128xf32> to vector<1x128xf32>
    %cst = arith.constant dense<0.000000e+00> : vector<8xf32>
    %9 = vector.multi_reduction <add>, %4, %cst [1] : vector<8x128xf32> to vector<8xf32>
    %10 = vector.shape_cast %9 : vector<8xf32> to vector<8x1xf32>
    %cst_8 = arith.constant 1.280000e+02 : f32
    %11 = vector.broadcast %cst_8 : f32 to vector<8x1xf32>
    %12 = arith.divf %10, %11 : vector<8x1xf32>
    %13 = vector.broadcast %12 : vector<8x1xf32> to vector<8x128xf32>
    %14 = arith.subf %4, %13 : vector<8x128xf32>
    %15 = arith.mulf %14, %14 : vector<8x128xf32>
    %cst_9 = arith.constant dense<0.000000e+00> : vector<8xf32>
    %16 = vector.multi_reduction <add>, %15, %cst_9 [1] : vector<8x128xf32> to vector<8xf32>
    %17 = vector.shape_cast %16 : vector<8xf32> to vector<8x1xf32>
    %cst_10 = arith.constant 1.280000e+02 : f32
    %18 = vector.broadcast %cst_10 : f32 to vector<8x1xf32>
    %19 = arith.divf %17, %18 : vector<8x1xf32>
    %20 = vector.broadcast %12 : vector<8x1xf32> to vector<8x128xf32>
    %21 = arith.subf %4, %20 : vector<8x128xf32>
    %cst_11 = arith.constant 9.99999974E-6 : f32
    %22 = vector.broadcast %cst_11 : f32 to vector<8x1xf32>
    %23 = arith.addf %19, %22 : vector<8x1xf32>
    %24 = math.rsqrt %23 : vector<8x1xf32>
    %25 = vector.broadcast %24 : vector<8x1xf32> to vector<8x128xf32>
    %26 = arith.mulf %21, %25 : vector<8x128xf32>
    %27 = vector.broadcast %6 : vector<1x128xf32> to vector<8x128xf32>
    %28 = arith.mulf %26, %27 : vector<8x128xf32>
    %29 = vector.broadcast %8 : vector<1x128xf32> to vector<8x128xf32>
    %30 = arith.addf %28, %29 : vector<8x128xf32>
    %31 = arith.truncf %30 : vector<8x128xf32> to vector<8x128xbf16>
    %c0_12 = arith.constant 0 : index
    %c0_13 = arith.constant 0 : index
    %c0_14 = arith.constant 0 : index
    %32 = vector.load %arg5[%c0_12, %c0_13, %c0_14] : memref<2x128x384xbf16, #tpu.memory_space<vmem>>, vector<1x128x384xbf16>
    %33 = vector.shape_cast %32 : vector<1x128x384xbf16> to vector<128x384xbf16>
    %cst_15 = arith.constant dense<0.000000e+00> : vector<8x384xf32>
    %34 = tpu.matmul %31, %33, %cst_15 {dimension_numbers = #tpu.dot_dimension_numbers<[1], [0], [0], [1], [0, 0, 1, 1], [], []>} : vector<8x128xbf16>, vector<128x384xbf16>, vector<8x384xf32> -> vector<8x384xf32>
    %c0_16 = arith.constant 0 : index
    %c0_17 = arith.constant 0 : index
    %c0_18 = arith.constant 0 : index
    %35 = vector.load %arg6[%c0_16, %c0_17, %c0_18] : memref<2x1x384xf32, #tpu.memory_space<vmem>>, vector<1x1x384xf32>
    %36 = vector.shape_cast %35 : vector<1x1x384xf32> to vector<1x384xf32>
    %37 = vector.broadcast %36 : vector<1x384xf32> to vector<8x384xf32>
    %38 = arith.addf %34, %37 : vector<8x384xf32>
    %39 = vector.extract_strided_slice %38 {offsets = [0, 0], sizes = [8, 32], strides = [1, 1]} : vector<8x384xf32> to vector<8x32xf32>
    %40 = arith.truncf %39 : vector<8x32xf32> to vector<8x32xbf16>
    %41 = vector.extract_strided_slice %38 {offsets = [0, 128], sizes = [8, 32], strides = [1, 1]} : vector<8x384xf32> to vector<8x32xf32>
    %42 = arith.truncf %41 : vector<8x32xf32> to vector<8x32xbf16>
    %43 = vector.extract_strided_slice %38 {offsets = [0, 256], sizes = [8, 32], strides = [1, 1]} : vector<8x384xf32> to vector<8x32xf32>
    %44 = arith.truncf %43 : vector<8x32xf32> to vector<8x32xbf16>
    %cst_19 = arith.constant dense<0.000000e+00> : vector<8x8xf32>
    %45 = tpu.matmul %40, %42, %cst_19 {dimension_numbers = #tpu.dot_dimension_numbers<[1], [1], [0], [0], [0, 0, 1, 0], [], []>} : vector<8x32xbf16>, vector<8x32xbf16>, vector<8x8xf32> -> vector<8x8xf32>
    %cst_20 = arith.constant 0.176776692 : f32
    %46 = vector.broadcast %cst_20 : f32 to vector<8x8xf32>
    %47 = arith.mulf %45, %46 : vector<8x8xf32>
    %cst_21 = arith.constant -1.000000e+09 : f32
    %48 = vector.broadcast %cst_21 : f32 to vector<8x8xf32>
    %49 = arith.select %2, %47, %48 : vector<8x8xi1>, vector<8x8xf32>
    %cst_22 = arith.constant dense<0xFF800000> : vector<8xf32>
    %50 = vector.multi_reduction <maximumf>, %49, %cst_22 [1] : vector<8x8xf32> to vector<8xf32>
    %51 = vector.shape_cast %50 : vector<8xf32> to vector<8x1xf32>
    %52 = vector.broadcast %51 : vector<8x1xf32> to vector<8x8xf32>
    %53 = arith.subf %49, %52 : vector<8x8xf32>
    %54 = math.exp %53 : vector<8x8xf32>
    %cst_23 = arith.constant dense<0.000000e+00> : vector<8xf32>
    %55 = vector.multi_reduction <add>, %54, %cst_23 [1] : vector<8x8xf32> to vector<8xf32>
    %56 = vector.shape_cast %55 : vector<8xf32> to vector<8x1xf32>
    %57 = tpu.reciprocal %56 {approx = true} : vector<8x1xf32> -> vector<8x1xf32>
    %58 = vector.broadcast %57 : vector<8x1xf32> to vector<8x8xf32>
    %59 = arith.mulf %54, %58 : vector<8x8xf32>
    %60 = arith.truncf %59 : vector<8x8xf32> to vector<8x8xbf16>
    %cst_24 = arith.constant dense<0.000000e+00> : vector<8x32xf32>
    %61 = tpu.matmul %60, %44, %cst_24 {dimension_numbers = #tpu.dot_dimension_numbers<[1], [0], [0], [1], [0, 0, 1, 1], [], []>} : vector<8x8xbf16>, vector<8x32xbf16>, vector<8x32xf32> -> vector<8x32xf32>
    %62 = vector.extract_strided_slice %38 {offsets = [0, 32], sizes = [8, 32], strides = [1, 1]} : vector<8x384xf32> to vector<8x32xf32>
    %63 = arith.truncf %62 : vector<8x32xf32> to vector<8x32xbf16>
    %64 = vector.extract_strided_slice %38 {offsets = [0, 160], sizes = [8, 32], strides = [1, 1]} : vector<8x384xf32> to vector<8x32xf32>
    %65 = arith.truncf %64 : vector<8x32xf32> to vector<8x32xbf16>
    %66 = vector.extract_strided_slice %38 {offsets = [0, 288], sizes = [8, 32], strides = [1, 1]} : vector<8x384xf32> to vector<8x32xf32>
    %67 = arith.truncf %66 : vector<8x32xf32> to vector<8x32xbf16>
    %cst_25 = arith.constant dense<0.000000e+00> : vector<8x8xf32>
    %68 = tpu.matmul %63, %65, %cst_25 {dimension_numbers = #tpu.dot_dimension_numbers<[1], [1], [0], [0], [0, 0, 1, 0], [], []>} : vector<8x32xbf16>, vector<8x32xbf16>, vector<8x8xf32> -> vector<8x8xf32>
    %cst_26 = arith.constant 0.176776692 : f32
    %69 = vector.broadcast %cst_26 : f32 to vector<8x8xf32>
    %70 = arith.mulf %68, %69 : vector<8x8xf32>
    %cst_27 = arith.constant -1.000000e+09 : f32
    %71 = vector.broadcast %cst_27 : f32 to vector<8x8xf32>
    %72 = arith.select %2, %70, %71 : vector<8x8xi1>, vector<8x8xf32>
    %cst_28 = arith.constant dense<0xFF800000> : vector<8xf32>
    %73 = vector.multi_reduction <maximumf>, %72, %cst_28 [1] : vector<8x8xf32> to vector<8xf32>
    %74 = vector.shape_cast %73 : vector<8xf32> to vector<8x1xf32>
    %75 = vector.broadcast %74 : vector<8x1xf32> to vector<8x8xf32>
    %76 = arith.subf %72, %75 : vector<8x8xf32>
    %77 = math.exp %76 : vector<8x8xf32>
    %cst_29 = arith.constant dense<0.000000e+00> : vector<8xf32>
    %78 = vector.multi_reduction <add>, %77, %cst_29 [1] : vector<8x8xf32> to vector<8xf32>
    %79 = vector.shape_cast %78 : vector<8xf32> to vector<8x1xf32>
    %80 = tpu.reciprocal %79 {approx = true} : vector<8x1xf32> -> vector<8x1xf32>
    %81 = vector.broadcast %80 : vector<8x1xf32> to vector<8x8xf32>
    %82 = arith.mulf %77, %81 : vector<8x8xf32>
    %83 = arith.truncf %82 : vector<8x8xf32> to vector<8x8xbf16>
    %cst_30 = arith.constant dense<0.000000e+00> : vector<8x32xf32>
    %84 = tpu.matmul %83, %67, %cst_30 {dimension_numbers = #tpu.dot_dimension_numbers<[1], [0], [0], [1], [0, 0, 1, 1], [], []>} : vector<8x8xbf16>, vector<8x32xbf16>, vector<8x32xf32> -> vector<8x32xf32>
    %85 = vector.extract_strided_slice %38 {offsets = [0, 64], sizes = [8, 32], strides = [1, 1]} : vector<8x384xf32> to vector<8x32xf32>
    %86 = arith.truncf %85 : vector<8x32xf32> to vector<8x32xbf16>
    %87 = vector.extract_strided_slice %38 {offsets = [0, 192], sizes = [8, 32], strides = [1, 1]} : vector<8x384xf32> to vector<8x32xf32>
    %88 = arith.truncf %87 : vector<8x32xf32> to vector<8x32xbf16>
    %89 = vector.extract_strided_slice %38 {offsets = [0, 320], sizes = [8, 32], strides = [1, 1]} : vector<8x384xf32> to vector<8x32xf32>
    %90 = arith.truncf %89 : vector<8x32xf32> to vector<8x32xbf16>
    %cst_31 = arith.constant dense<0.000000e+00> : vector<8x8xf32>
    %91 = tpu.matmul %86, %88, %cst_31 {dimension_numbers = #tpu.dot_dimension_numbers<[1], [1], [0], [0], [0, 0, 1, 0], [], []>} : vector<8x32xbf16>, vector<8x32xbf16>, vector<8x8xf32> -> vector<8x8xf32>
    %cst_32 = arith.constant 0.176776692 : f32
    %92 = vector.broadcast %cst_32 : f32 to vector<8x8xf32>
    %93 = arith.mulf %91, %92 : vector<8x8xf32>
    %cst_33 = arith.constant -1.000000e+09 : f32
    %94 = vector.broadcast %cst_33 : f32 to vector<8x8xf32>
    %95 = arith.select %2, %93, %94 : vector<8x8xi1>, vector<8x8xf32>
    %cst_34 = arith.constant dense<0xFF800000> : vector<8xf32>
    %96 = vector.multi_reduction <maximumf>, %95, %cst_34 [1] : vector<8x8xf32> to vector<8xf32>
    %97 = vector.shape_cast %96 : vector<8xf32> to vector<8x1xf32>
    %98 = vector.broadcast %97 : vector<8x1xf32> to vector<8x8xf32>
    %99 = arith.subf %95, %98 : vector<8x8xf32>
    %100 = math.exp %99 : vector<8x8xf32>
    %cst_35 = arith.constant dense<0.000000e+00> : vector<8xf32>
    %101 = vector.multi_reduction <add>, %100, %cst_35 [1] : vector<8x8xf32> to vector<8xf32>
    %102 = vector.shape_cast %101 : vector<8xf32> to vector<8x1xf32>
    %103 = tpu.reciprocal %102 {approx = true} : vector<8x1xf32> -> vector<8x1xf32>
    %104 = vector.broadcast %103 : vector<8x1xf32> to vector<8x8xf32>
    %105 = arith.mulf %100, %104 : vector<8x8xf32>
    %106 = arith.truncf %105 : vector<8x8xf32> to vector<8x8xbf16>
    %cst_36 = arith.constant dense<0.000000e+00> : vector<8x32xf32>
    %107 = tpu.matmul %106, %90, %cst_36 {dimension_numbers = #tpu.dot_dimension_numbers<[1], [0], [0], [1], [0, 0, 1, 1], [], []>} : vector<8x8xbf16>, vector<8x32xbf16>, vector<8x32xf32> -> vector<8x32xf32>
    %108 = vector.extract_strided_slice %38 {offsets = [0, 96], sizes = [8, 32], strides = [1, 1]} : vector<8x384xf32> to vector<8x32xf32>
    %109 = arith.truncf %108 : vector<8x32xf32> to vector<8x32xbf16>
    %110 = vector.extract_strided_slice %38 {offsets = [0, 224], sizes = [8, 32], strides = [1, 1]} : vector<8x384xf32> to vector<8x32xf32>
    %111 = arith.truncf %110 : vector<8x32xf32> to vector<8x32xbf16>
    %112 = vector.extract_strided_slice %38 {offsets = [0, 352], sizes = [8, 32], strides = [1, 1]} : vector<8x384xf32> to vector<8x32xf32>
    %113 = arith.truncf %112 : vector<8x32xf32> to vector<8x32xbf16>
    %cst_37 = arith.constant dense<0.000000e+00> : vector<8x8xf32>
    %114 = tpu.matmul %109, %111, %cst_37 {dimension_numbers = #tpu.dot_dimension_numbers<[1], [1], [0], [0], [0, 0, 1, 0], [], []>} : vector<8x32xbf16>, vector<8x32xbf16>, vector<8x8xf32> -> vector<8x8xf32>
    %cst_38 = arith.constant 0.176776692 : f32
    %115 = vector.broadcast %cst_38 : f32 to vector<8x8xf32>
    %116 = arith.mulf %114, %115 : vector<8x8xf32>
    %cst_39 = arith.constant -1.000000e+09 : f32
    %117 = vector.broadcast %cst_39 : f32 to vector<8x8xf32>
    %118 = arith.select %2, %116, %117 : vector<8x8xi1>, vector<8x8xf32>
    %cst_40 = arith.constant dense<0xFF800000> : vector<8xf32>
    %119 = vector.multi_reduction <maximumf>, %118, %cst_40 [1] : vector<8x8xf32> to vector<8xf32>
    %120 = vector.shape_cast %119 : vector<8xf32> to vector<8x1xf32>
    %121 = vector.broadcast %120 : vector<8x1xf32> to vector<8x8xf32>
    %122 = arith.subf %118, %121 : vector<8x8xf32>
    %123 = math.exp %122 : vector<8x8xf32>
    %cst_41 = arith.constant dense<0.000000e+00> : vector<8xf32>
    %124 = vector.multi_reduction <add>, %123, %cst_41 [1] : vector<8x8xf32> to vector<8xf32>
    %125 = vector.shape_cast %124 : vector<8xf32> to vector<8x1xf32>
    %126 = tpu.reciprocal %125 {approx = true} : vector<8x1xf32> -> vector<8x1xf32>
    %127 = vector.broadcast %126 : vector<8x1xf32> to vector<8x8xf32>
    %128 = arith.mulf %123, %127 : vector<8x8xf32>
    %129 = arith.truncf %128 : vector<8x8xf32> to vector<8x8xbf16>
    %cst_42 = arith.constant dense<0.000000e+00> : vector<8x32xf32>
    %130 = tpu.matmul %129, %113, %cst_42 {dimension_numbers = #tpu.dot_dimension_numbers<[1], [0], [0], [1], [0, 0, 1, 1], [], []>} : vector<8x8xbf16>, vector<8x32xbf16>, vector<8x32xf32> -> vector<8x32xf32>
    %131 = tpu.concatenate %61, %84, %107, %130 in 1 : vector<8x32xf32>, vector<8x32xf32>, vector<8x32xf32>, vector<8x32xf32> -> vector<8x128xf32>
    %132 = arith.truncf %131 : vector<8x128xf32> to vector<8x128xbf16>
    %c0_43 = arith.constant 0 : index
    %c0_44 = arith.constant 0 : index
    %c0_45 = arith.constant 0 : index
    %133 = vector.load %arg7[%c0_43, %c0_44, %c0_45] : memref<2x128x128xbf16, #tpu.memory_space<vmem>>, vector<1x128x128xbf16>
    %134 = vector.shape_cast %133 : vector<1x128x128xbf16> to vector<128x128xbf16>
    %cst_46 = arith.constant dense<0.000000e+00> : vector<8x128xf32>
    %135 = tpu.matmul %132, %134, %cst_46 {dimension_numbers = #tpu.dot_dimension_numbers<[1], [0], [0], [1], [0, 0, 1, 1], [], []>} : vector<8x128xbf16>, vector<128x128xbf16>, vector<8x128xf32> -> vector<8x128xf32>
    %c0_47 = arith.constant 0 : index
    %c0_48 = arith.constant 0 : index
    %c0_49 = arith.constant 0 : index
    %136 = vector.load %arg8[%c0_47, %c0_48, %c0_49] : memref<2x1x128xf32, #tpu.memory_space<vmem>>, vector<1x1x128xf32>
    %137 = vector.shape_cast %136 : vector<1x1x128xf32> to vector<1x128xf32>
    %138 = vector.broadcast %137 : vector<1x128xf32> to vector<8x128xf32>
    %139 = arith.addf %135, %138 : vector<8x128xf32>
    %140 = arith.addf %139, %4 : vector<8x128xf32>
    %c0_50 = arith.constant 0 : index
    %c0_51 = arith.constant 0 : index
    %c0_52 = arith.constant 0 : index
    %141 = vector.load %arg9[%c0_50, %c0_51, %c0_52] : memref<2x1x128xf32, #tpu.memory_space<vmem>>, vector<1x1x128xf32>
    %142 = vector.shape_cast %141 : vector<1x1x128xf32> to vector<1x128xf32>
    %c0_53 = arith.constant 0 : index
    %c0_54 = arith.constant 0 : index
    %c0_55 = arith.constant 0 : index
    %143 = vector.load %arg10[%c0_53, %c0_54, %c0_55] : memref<2x1x128xf32, #tpu.memory_space<vmem>>, vector<1x1x128xf32>
    %144 = vector.shape_cast %143 : vector<1x1x128xf32> to vector<1x128xf32>
    %cst_56 = arith.constant dense<0.000000e+00> : vector<8xf32>
    %145 = vector.multi_reduction <add>, %140, %cst_56 [1] : vector<8x128xf32> to vector<8xf32>
    %146 = vector.shape_cast %145 : vector<8xf32> to vector<8x1xf32>
    %cst_57 = arith.constant 1.280000e+02 : f32
    %147 = vector.broadcast %cst_57 : f32 to vector<8x1xf32>
    %148 = arith.divf %146, %147 : vector<8x1xf32>
    %149 = vector.broadcast %148 : vector<8x1xf32> to vector<8x128xf32>
    %150 = arith.subf %140, %149 : vector<8x128xf32>
    %151 = arith.mulf %150, %150 : vector<8x128xf32>
    %cst_58 = arith.constant dense<0.000000e+00> : vector<8xf32>
    %152 = vector.multi_reduction <add>, %151, %cst_58 [1] : vector<8x128xf32> to vector<8xf32>
    %153 = vector.shape_cast %152 : vector<8xf32> to vector<8x1xf32>
    %cst_59 = arith.constant 1.280000e+02 : f32
    %154 = vector.broadcast %cst_59 : f32 to vector<8x1xf32>
    %155 = arith.divf %153, %154 : vector<8x1xf32>
    %156 = vector.broadcast %148 : vector<8x1xf32> to vector<8x128xf32>
    %157 = arith.subf %140, %156 : vector<8x128xf32>
    %cst_60 = arith.constant 9.99999974E-6 : f32
    %158 = vector.broadcast %cst_60 : f32 to vector<8x1xf32>
    %159 = arith.addf %155, %158 : vector<8x1xf32>
    %160 = math.rsqrt %159 : vector<8x1xf32>
    %161 = vector.broadcast %160 : vector<8x1xf32> to vector<8x128xf32>
    %162 = arith.mulf %157, %161 : vector<8x128xf32>
    %163 = vector.broadcast %142 : vector<1x128xf32> to vector<8x128xf32>
    %164 = arith.mulf %162, %163 : vector<8x128xf32>
    %165 = vector.broadcast %144 : vector<1x128xf32> to vector<8x128xf32>
    %166 = arith.addf %164, %165 : vector<8x128xf32>
    %167 = arith.truncf %166 : vector<8x128xf32> to vector<8x128xbf16>
    %c0_61 = arith.constant 0 : index
    %c0_62 = arith.constant 0 : index
    %c0_63 = arith.constant 0 : index
    %168 = vector.load %arg11[%c0_61, %c0_62, %c0_63] : memref<2x128x512xbf16, #tpu.memory_space<vmem>>, vector<1x128x512xbf16>
    %169 = vector.shape_cast %168 : vector<1x128x512xbf16> to vector<128x512xbf16>
    %cst_64 = arith.constant dense<0.000000e+00> : vector<8x512xf32>
    %170 = tpu.matmul %167, %169, %cst_64 {dimension_numbers = #tpu.dot_dimension_numbers<[1], [0], [0], [1], [0, 0, 1, 1], [], []>} : vector<8x128xbf16>, vector<128x512xbf16>, vector<8x512xf32> -> vector<8x512xf32>
    %c0_65 = arith.constant 0 : index
    %c0_66 = arith.constant 0 : index
    %c0_67 = arith.constant 0 : index
    %171 = vector.load %arg12[%c0_65, %c0_66, %c0_67] : memref<2x1x512xf32, #tpu.memory_space<vmem>>, vector<1x1x512xf32>
    %172 = vector.shape_cast %171 : vector<1x1x512xf32> to vector<1x512xf32>
    %173 = vector.broadcast %172 : vector<1x512xf32> to vector<8x512xf32>
    %174 = arith.addf %170, %173 : vector<8x512xf32>
    %cst_68 = arith.constant 1.702000e+00 : f32
    %175 = vector.broadcast %cst_68 : f32 to vector<8x512xf32>
    %176 = arith.mulf %175, %174 : vector<8x512xf32>
    %177 = arith.negf %176 : vector<8x512xf32>
    %178 = math.exp %177 : vector<8x512xf32>
    %cst_69 = arith.constant 1.000000e+00 : f32
    %179 = vector.broadcast %cst_69 : f32 to vector<8x512xf32>
    %180 = arith.addf %179, %178 : vector<8x512xf32>
    %181 = arith.divf %179, %180 : vector<8x512xf32>
    %182 = arith.mulf %174, %181 : vector<8x512xf32>
    %183 = arith.truncf %182 : vector<8x512xf32> to vector<8x512xbf16>
    %c0_70 = arith.constant 0 : index
    %c0_71 = arith.constant 0 : index
    %c0_72 = arith.constant 0 : index
    %184 = vector.load %arg13[%c0_70, %c0_71, %c0_72] : memref<2x512x128xbf16, #tpu.memory_space<vmem>>, vector<1x512x128xbf16>
    %185 = vector.shape_cast %184 : vector<1x512x128xbf16> to vector<512x128xbf16>
    %cst_73 = arith.constant dense<0.000000e+00> : vector<8x128xf32>
    %186 = tpu.matmul %183, %185, %cst_73 {dimension_numbers = #tpu.dot_dimension_numbers<[1], [0], [0], [1], [0, 0, 1, 1], [], []>} : vector<8x512xbf16>, vector<512x128xbf16>, vector<8x128xf32> -> vector<8x128xf32>
    %c0_74 = arith.constant 0 : index
    %c0_75 = arith.constant 0 : index
    %c0_76 = arith.constant 0 : index
    %187 = vector.load %arg14[%c0_74, %c0_75, %c0_76] : memref<2x1x128xf32, #tpu.memory_space<vmem>>, vector<1x1x128xf32>
    %188 = vector.shape_cast %187 : vector<1x1x128xf32> to vector<1x128xf32>
    %189 = vector.broadcast %188 : vector<1x128xf32> to vector<8x128xf32>
    %190 = arith.addf %186, %189 : vector<8x128xf32>
    %191 = arith.addf %190, %140 : vector<8x128xf32>
    %c1 = arith.constant 1 : index
    %c0_77 = arith.constant 0 : index
    %c0_78 = arith.constant 0 : index
    %192 = vector.load %arg3[%c1, %c0_77, %c0_78] : memref<2x1x128xf32, #tpu.memory_space<vmem>>, vector<1x1x128xf32>
    %193 = vector.shape_cast %192 : vector<1x1x128xf32> to vector<1x128xf32>
    %c1_79 = arith.constant 1 : index
    %c0_80 = arith.constant 0 : index
    %c0_81 = arith.constant 0 : index
    %194 = vector.load %arg4[%c1_79, %c0_80, %c0_81] : memref<2x1x128xf32, #tpu.memory_space<vmem>>, vector<1x1x128xf32>
    %195 = vector.shape_cast %194 : vector<1x1x128xf32> to vector<1x128xf32>
    %cst_82 = arith.constant dense<0.000000e+00> : vector<8xf32>
    %196 = vector.multi_reduction <add>, %191, %cst_82 [1] : vector<8x128xf32> to vector<8xf32>
    %197 = vector.shape_cast %196 : vector<8xf32> to vector<8x1xf32>
    %cst_83 = arith.constant 1.280000e+02 : f32
    %198 = vector.broadcast %cst_83 : f32 to vector<8x1xf32>
    %199 = arith.divf %197, %198 : vector<8x1xf32>
    %200 = vector.broadcast %199 : vector<8x1xf32> to vector<8x128xf32>
    %201 = arith.subf %191, %200 : vector<8x128xf32>
    %202 = arith.mulf %201, %201 : vector<8x128xf32>
    %cst_84 = arith.constant dense<0.000000e+00> : vector<8xf32>
    %203 = vector.multi_reduction <add>, %202, %cst_84 [1] : vector<8x128xf32> to vector<8xf32>
    %204 = vector.shape_cast %203 : vector<8xf32> to vector<8x1xf32>
    %cst_85 = arith.constant 1.280000e+02 : f32
    %205 = vector.broadcast %cst_85 : f32 to vector<8x1xf32>
    %206 = arith.divf %204, %205 : vector<8x1xf32>
    %207 = vector.broadcast %199 : vector<8x1xf32> to vector<8x128xf32>
    %208 = arith.subf %191, %207 : vector<8x128xf32>
    %cst_86 = arith.constant 9.99999974E-6 : f32
    %209 = vector.broadcast %cst_86 : f32 to vector<8x1xf32>
    %210 = arith.addf %206, %209 : vector<8x1xf32>
    %211 = math.rsqrt %210 : vector<8x1xf32>
    %212 = vector.broadcast %211 : vector<8x1xf32> to vector<8x128xf32>
    %213 = arith.mulf %208, %212 : vector<8x128xf32>
    %214 = vector.broadcast %193 : vector<1x128xf32> to vector<8x128xf32>
    %215 = arith.mulf %213, %214 : vector<8x128xf32>
    %216 = vector.broadcast %195 : vector<1x128xf32> to vector<8x128xf32>
    %217 = arith.addf %215, %216 : vector<8x128xf32>
    %218 = arith.truncf %217 : vector<8x128xf32> to vector<8x128xbf16>
    %c1_87 = arith.constant 1 : index
    %c0_88 = arith.constant 0 : index
    %c0_89 = arith.constant 0 : index
    %219 = vector.load %arg5[%c1_87, %c0_88, %c0_89] : memref<2x128x384xbf16, #tpu.memory_space<vmem>>, vector<1x128x384xbf16>
    %220 = vector.shape_cast %219 : vector<1x128x384xbf16> to vector<128x384xbf16>
    %cst_90 = arith.constant dense<0.000000e+00> : vector<8x384xf32>
    %221 = tpu.matmul %218, %220, %cst_90 {dimension_numbers = #tpu.dot_dimension_numbers<[1], [0], [0], [1], [0, 0, 1, 1], [], []>} : vector<8x128xbf16>, vector<128x384xbf16>, vector<8x384xf32> -> vector<8x384xf32>
    %c1_91 = arith.constant 1 : index
    %c0_92 = arith.constant 0 : index
    %c0_93 = arith.constant 0 : index
    %222 = vector.load %arg6[%c1_91, %c0_92, %c0_93] : memref<2x1x384xf32, #tpu.memory_space<vmem>>, vector<1x1x384xf32>
    %223 = vector.shape_cast %222 : vector<1x1x384xf32> to vector<1x384xf32>
    %224 = vector.broadcast %223 : vector<1x384xf32> to vector<8x384xf32>
    %225 = arith.addf %221, %224 : vector<8x384xf32>
    %226 = vector.extract_strided_slice %225 {offsets = [0, 0], sizes = [8, 32], strides = [1, 1]} : vector<8x384xf32> to vector<8x32xf32>
    %227 = arith.truncf %226 : vector<8x32xf32> to vector<8x32xbf16>
    %228 = vector.extract_strided_slice %225 {offsets = [0, 128], sizes = [8, 32], strides = [1, 1]} : vector<8x384xf32> to vector<8x32xf32>
    %229 = arith.truncf %228 : vector<8x32xf32> to vector<8x32xbf16>
    %230 = vector.extract_strided_slice %225 {offsets = [0, 256], sizes = [8, 32], strides = [1, 1]} : vector<8x384xf32> to vector<8x32xf32>
    %231 = arith.truncf %230 : vector<8x32xf32> to vector<8x32xbf16>
    %cst_94 = arith.constant dense<0.000000e+00> : vector<8x8xf32>
    %232 = tpu.matmul %227, %229, %cst_94 {dimension_numbers = #tpu.dot_dimension_numbers<[1], [1], [0], [0], [0, 0, 1, 0], [], []>} : vector<8x32xbf16>, vector<8x32xbf16>, vector<8x8xf32> -> vector<8x8xf32>
    %cst_95 = arith.constant 0.176776692 : f32
    %233 = vector.broadcast %cst_95 : f32 to vector<8x8xf32>
    %234 = arith.mulf %232, %233 : vector<8x8xf32>
    %cst_96 = arith.constant -1.000000e+09 : f32
    %235 = vector.broadcast %cst_96 : f32 to vector<8x8xf32>
    %236 = arith.select %2, %234, %235 : vector<8x8xi1>, vector<8x8xf32>
    %cst_97 = arith.constant dense<0xFF800000> : vector<8xf32>
    %237 = vector.multi_reduction <maximumf>, %236, %cst_97 [1] : vector<8x8xf32> to vector<8xf32>
    %238 = vector.shape_cast %237 : vector<8xf32> to vector<8x1xf32>
    %239 = vector.broadcast %238 : vector<8x1xf32> to vector<8x8xf32>
    %240 = arith.subf %236, %239 : vector<8x8xf32>
    %241 = math.exp %240 : vector<8x8xf32>
    %cst_98 = arith.constant dense<0.000000e+00> : vector<8xf32>
    %242 = vector.multi_reduction <add>, %241, %cst_98 [1] : vector<8x8xf32> to vector<8xf32>
    %243 = vector.shape_cast %242 : vector<8xf32> to vector<8x1xf32>
    %244 = tpu.reciprocal %243 {approx = true} : vector<8x1xf32> -> vector<8x1xf32>
    %245 = vector.broadcast %244 : vector<8x1xf32> to vector<8x8xf32>
    %246 = arith.mulf %241, %245 : vector<8x8xf32>
    %247 = arith.truncf %246 : vector<8x8xf32> to vector<8x8xbf16>
    %cst_99 = arith.constant dense<0.000000e+00> : vector<8x32xf32>
    %248 = tpu.matmul %247, %231, %cst_99 {dimension_numbers = #tpu.dot_dimension_numbers<[1], [0], [0], [1], [0, 0, 1, 1], [], []>} : vector<8x8xbf16>, vector<8x32xbf16>, vector<8x32xf32> -> vector<8x32xf32>
    %249 = vector.extract_strided_slice %225 {offsets = [0, 32], sizes = [8, 32], strides = [1, 1]} : vector<8x384xf32> to vector<8x32xf32>
    %250 = arith.truncf %249 : vector<8x32xf32> to vector<8x32xbf16>
    %251 = vector.extract_strided_slice %225 {offsets = [0, 160], sizes = [8, 32], strides = [1, 1]} : vector<8x384xf32> to vector<8x32xf32>
    %252 = arith.truncf %251 : vector<8x32xf32> to vector<8x32xbf16>
    %253 = vector.extract_strided_slice %225 {offsets = [0, 288], sizes = [8, 32], strides = [1, 1]} : vector<8x384xf32> to vector<8x32xf32>
    %254 = arith.truncf %253 : vector<8x32xf32> to vector<8x32xbf16>
    %cst_100 = arith.constant dense<0.000000e+00> : vector<8x8xf32>
    %255 = tpu.matmul %250, %252, %cst_100 {dimension_numbers = #tpu.dot_dimension_numbers<[1], [1], [0], [0], [0, 0, 1, 0], [], []>} : vector<8x32xbf16>, vector<8x32xbf16>, vector<8x8xf32> -> vector<8x8xf32>
    %cst_101 = arith.constant 0.176776692 : f32
    %256 = vector.broadcast %cst_101 : f32 to vector<8x8xf32>
    %257 = arith.mulf %255, %256 : vector<8x8xf32>
    %cst_102 = arith.constant -1.000000e+09 : f32
    %258 = vector.broadcast %cst_102 : f32 to vector<8x8xf32>
    %259 = arith.select %2, %257, %258 : vector<8x8xi1>, vector<8x8xf32>
    %cst_103 = arith.constant dense<0xFF800000> : vector<8xf32>
    %260 = vector.multi_reduction <maximumf>, %259, %cst_103 [1] : vector<8x8xf32> to vector<8xf32>
    %261 = vector.shape_cast %260 : vector<8xf32> to vector<8x1xf32>
    %262 = vector.broadcast %261 : vector<8x1xf32> to vector<8x8xf32>
    %263 = arith.subf %259, %262 : vector<8x8xf32>
    %264 = math.exp %263 : vector<8x8xf32>
    %cst_104 = arith.constant dense<0.000000e+00> : vector<8xf32>
    %265 = vector.multi_reduction <add>, %264, %cst_104 [1] : vector<8x8xf32> to vector<8xf32>
    %266 = vector.shape_cast %265 : vector<8xf32> to vector<8x1xf32>
    %267 = tpu.reciprocal %266 {approx = true} : vector<8x1xf32> -> vector<8x1xf32>
    %268 = vector.broadcast %267 : vector<8x1xf32> to vector<8x8xf32>
    %269 = arith.mulf %264, %268 : vector<8x8xf32>
    %270 = arith.truncf %269 : vector<8x8xf32> to vector<8x8xbf16>
    %cst_105 = arith.constant dense<0.000000e+00> : vector<8x32xf32>
    %271 = tpu.matmul %270, %254, %cst_105 {dimension_numbers = #tpu.dot_dimension_numbers<[1], [0], [0], [1], [0, 0, 1, 1], [], []>} : vector<8x8xbf16>, vector<8x32xbf16>, vector<8x32xf32> -> vector<8x32xf32>
    %272 = vector.extract_strided_slice %225 {offsets = [0, 64], sizes = [8, 32], strides = [1, 1]} : vector<8x384xf32> to vector<8x32xf32>
    %273 = arith.truncf %272 : vector<8x32xf32> to vector<8x32xbf16>
    %274 = vector.extract_strided_slice %225 {offsets = [0, 192], sizes = [8, 32], strides = [1, 1]} : vector<8x384xf32> to vector<8x32xf32>
    %275 = arith.truncf %274 : vector<8x32xf32> to vector<8x32xbf16>
    %276 = vector.extract_strided_slice %225 {offsets = [0, 320], sizes = [8, 32], strides = [1, 1]} : vector<8x384xf32> to vector<8x32xf32>
    %277 = arith.truncf %276 : vector<8x32xf32> to vector<8x32xbf16>
    %cst_106 = arith.constant dense<0.000000e+00> : vector<8x8xf32>
    %278 = tpu.matmul %273, %275, %cst_106 {dimension_numbers = #tpu.dot_dimension_numbers<[1], [1], [0], [0], [0, 0, 1, 0], [], []>} : vector<8x32xbf16>, vector<8x32xbf16>, vector<8x8xf32> -> vector<8x8xf32>
    %cst_107 = arith.constant 0.176776692 : f32
    %279 = vector.broadcast %cst_107 : f32 to vector<8x8xf32>
    %280 = arith.mulf %278, %279 : vector<8x8xf32>
    %cst_108 = arith.constant -1.000000e+09 : f32
    %281 = vector.broadcast %cst_108 : f32 to vector<8x8xf32>
    %282 = arith.select %2, %280, %281 : vector<8x8xi1>, vector<8x8xf32>
    %cst_109 = arith.constant dense<0xFF800000> : vector<8xf32>
    %283 = vector.multi_reduction <maximumf>, %282, %cst_109 [1] : vector<8x8xf32> to vector<8xf32>
    %284 = vector.shape_cast %283 : vector<8xf32> to vector<8x1xf32>
    %285 = vector.broadcast %284 : vector<8x1xf32> to vector<8x8xf32>
    %286 = arith.subf %282, %285 : vector<8x8xf32>
    %287 = math.exp %286 : vector<8x8xf32>
    %cst_110 = arith.constant dense<0.000000e+00> : vector<8xf32>
    %288 = vector.multi_reduction <add>, %287, %cst_110 [1] : vector<8x8xf32> to vector<8xf32>
    %289 = vector.shape_cast %288 : vector<8xf32> to vector<8x1xf32>
    %290 = tpu.reciprocal %289 {approx = true} : vector<8x1xf32> -> vector<8x1xf32>
    %291 = vector.broadcast %290 : vector<8x1xf32> to vector<8x8xf32>
    %292 = arith.mulf %287, %291 : vector<8x8xf32>
    %293 = arith.truncf %292 : vector<8x8xf32> to vector<8x8xbf16>
    %cst_111 = arith.constant dense<0.000000e+00> : vector<8x32xf32>
    %294 = tpu.matmul %293, %277, %cst_111 {dimension_numbers = #tpu.dot_dimension_numbers<[1], [0], [0], [1], [0, 0, 1, 1], [], []>} : vector<8x8xbf16>, vector<8x32xbf16>, vector<8x32xf32> -> vector<8x32xf32>
    %295 = vector.extract_strided_slice %225 {offsets = [0, 96], sizes = [8, 32], strides = [1, 1]} : vector<8x384xf32> to vector<8x32xf32>
    %296 = arith.truncf %295 : vector<8x32xf32> to vector<8x32xbf16>
    %297 = vector.extract_strided_slice %225 {offsets = [0, 224], sizes = [8, 32], strides = [1, 1]} : vector<8x384xf32> to vector<8x32xf32>
    %298 = arith.truncf %297 : vector<8x32xf32> to vector<8x32xbf16>
    %299 = vector.extract_strided_slice %225 {offsets = [0, 352], sizes = [8, 32], strides = [1, 1]} : vector<8x384xf32> to vector<8x32xf32>
    %300 = arith.truncf %299 : vector<8x32xf32> to vector<8x32xbf16>
    %cst_112 = arith.constant dense<0.000000e+00> : vector<8x8xf32>
    %301 = tpu.matmul %296, %298, %cst_112 {dimension_numbers = #tpu.dot_dimension_numbers<[1], [1], [0], [0], [0, 0, 1, 0], [], []>} : vector<8x32xbf16>, vector<8x32xbf16>, vector<8x8xf32> -> vector<8x8xf32>
    %cst_113 = arith.constant 0.176776692 : f32
    %302 = vector.broadcast %cst_113 : f32 to vector<8x8xf32>
    %303 = arith.mulf %301, %302 : vector<8x8xf32>
    %cst_114 = arith.constant -1.000000e+09 : f32
    %304 = vector.broadcast %cst_114 : f32 to vector<8x8xf32>
    %305 = arith.select %2, %303, %304 : vector<8x8xi1>, vector<8x8xf32>
    %cst_115 = arith.constant dense<0xFF800000> : vector<8xf32>
    %306 = vector.multi_reduction <maximumf>, %305, %cst_115 [1] : vector<8x8xf32> to vector<8xf32>
    %307 = vector.shape_cast %306 : vector<8xf32> to vector<8x1xf32>
    %308 = vector.broadcast %307 : vector<8x1xf32> to vector<8x8xf32>
    %309 = arith.subf %305, %308 : vector<8x8xf32>
    %310 = math.exp %309 : vector<8x8xf32>
    %cst_116 = arith.constant dense<0.000000e+00> : vector<8xf32>
    %311 = vector.multi_reduction <add>, %310, %cst_116 [1] : vector<8x8xf32> to vector<8xf32>
    %312 = vector.shape_cast %311 : vector<8xf32> to vector<8x1xf32>
    %313 = tpu.reciprocal %312 {approx = true} : vector<8x1xf32> -> vector<8x1xf32>
    %314 = vector.broadcast %313 : vector<8x1xf32> to vector<8x8xf32>
    %315 = arith.mulf %310, %314 : vector<8x8xf32>
    %316 = arith.truncf %315 : vector<8x8xf32> to vector<8x8xbf16>
    %cst_117 = arith.constant dense<0.000000e+00> : vector<8x32xf32>
    %317 = tpu.matmul %316, %300, %cst_117 {dimension_numbers = #tpu.dot_dimension_numbers<[1], [0], [0], [1], [0, 0, 1, 1], [], []>} : vector<8x8xbf16>, vector<8x32xbf16>, vector<8x32xf32> -> vector<8x32xf32>
    %318 = tpu.concatenate %248, %271, %294, %317 in 1 : vector<8x32xf32>, vector<8x32xf32>, vector<8x32xf32>, vector<8x32xf32> -> vector<8x128xf32>
    %319 = arith.truncf %318 : vector<8x128xf32> to vector<8x128xbf16>
    %c1_118 = arith.constant 1 : index
    %c0_119 = arith.constant 0 : index
    %c0_120 = arith.constant 0 : index
    %320 = vector.load %arg7[%c1_118, %c0_119, %c0_120] : memref<2x128x128xbf16, #tpu.memory_space<vmem>>, vector<1x128x128xbf16>
    %321 = vector.shape_cast %320 : vector<1x128x128xbf16> to vector<128x128xbf16>
    %cst_121 = arith.constant dense<0.000000e+00> : vector<8x128xf32>
    %322 = tpu.matmul %319, %321, %cst_121 {dimension_numbers = #tpu.dot_dimension_numbers<[1], [0], [0], [1], [0, 0, 1, 1], [], []>} : vector<8x128xbf16>, vector<128x128xbf16>, vector<8x128xf32> -> vector<8x128xf32>
    %c1_122 = arith.constant 1 : index
    %c0_123 = arith.constant 0 : index
    %c0_124 = arith.constant 0 : index
    %323 = vector.load %arg8[%c1_122, %c0_123, %c0_124] : memref<2x1x128xf32, #tpu.memory_space<vmem>>, vector<1x1x128xf32>
    %324 = vector.shape_cast %323 : vector<1x1x128xf32> to vector<1x128xf32>
    %325 = vector.broadcast %324 : vector<1x128xf32> to vector<8x128xf32>
    %326 = arith.addf %322, %325 : vector<8x128xf32>
    %327 = arith.addf %326, %191 : vector<8x128xf32>
    %c1_125 = arith.constant 1 : index
    %c0_126 = arith.constant 0 : index
    %c0_127 = arith.constant 0 : index
    %328 = vector.load %arg9[%c1_125, %c0_126, %c0_127] : memref<2x1x128xf32, #tpu.memory_space<vmem>>, vector<1x1x128xf32>
    %329 = vector.shape_cast %328 : vector<1x1x128xf32> to vector<1x128xf32>
    %c1_128 = arith.constant 1 : index
    %c0_129 = arith.constant 0 : index
    %c0_130 = arith.constant 0 : index
    %330 = vector.load %arg10[%c1_128, %c0_129, %c0_130] : memref<2x1x128xf32, #tpu.memory_space<vmem>>, vector<1x1x128xf32>
    %331 = vector.shape_cast %330 : vector<1x1x128xf32> to vector<1x128xf32>
    %cst_131 = arith.constant dense<0.000000e+00> : vector<8xf32>
    %332 = vector.multi_reduction <add>, %327, %cst_131 [1] : vector<8x128xf32> to vector<8xf32>
    %333 = vector.shape_cast %332 : vector<8xf32> to vector<8x1xf32>
    %cst_132 = arith.constant 1.280000e+02 : f32
    %334 = vector.broadcast %cst_132 : f32 to vector<8x1xf32>
    %335 = arith.divf %333, %334 : vector<8x1xf32>
    %336 = vector.broadcast %335 : vector<8x1xf32> to vector<8x128xf32>
    %337 = arith.subf %327, %336 : vector<8x128xf32>
    %338 = arith.mulf %337, %337 : vector<8x128xf32>
    %cst_133 = arith.constant dense<0.000000e+00> : vector<8xf32>
    %339 = vector.multi_reduction <add>, %338, %cst_133 [1] : vector<8x128xf32> to vector<8xf32>
    %340 = vector.shape_cast %339 : vector<8xf32> to vector<8x1xf32>
    %cst_134 = arith.constant 1.280000e+02 : f32
    %341 = vector.broadcast %cst_134 : f32 to vector<8x1xf32>
    %342 = arith.divf %340, %341 : vector<8x1xf32>
    %343 = vector.broadcast %335 : vector<8x1xf32> to vector<8x128xf32>
    %344 = arith.subf %327, %343 : vector<8x128xf32>
    %cst_135 = arith.constant 9.99999974E-6 : f32
    %345 = vector.broadcast %cst_135 : f32 to vector<8x1xf32>
    %346 = arith.addf %342, %345 : vector<8x1xf32>
    %347 = math.rsqrt %346 : vector<8x1xf32>
    %348 = vector.broadcast %347 : vector<8x1xf32> to vector<8x128xf32>
    %349 = arith.mulf %344, %348 : vector<8x128xf32>
    %350 = vector.broadcast %329 : vector<1x128xf32> to vector<8x128xf32>
    %351 = arith.mulf %349, %350 : vector<8x128xf32>
    %352 = vector.broadcast %331 : vector<1x128xf32> to vector<8x128xf32>
    %353 = arith.addf %351, %352 : vector<8x128xf32>
    %354 = arith.truncf %353 : vector<8x128xf32> to vector<8x128xbf16>
    %c1_136 = arith.constant 1 : index
    %c0_137 = arith.constant 0 : index
    %c0_138 = arith.constant 0 : index
    %355 = vector.load %arg11[%c1_136, %c0_137, %c0_138] : memref<2x128x512xbf16, #tpu.memory_space<vmem>>, vector<1x128x512xbf16>
    %356 = vector.shape_cast %355 : vector<1x128x512xbf16> to vector<128x512xbf16>
    %cst_139 = arith.constant dense<0.000000e+00> : vector<8x512xf32>
    %357 = tpu.matmul %354, %356, %cst_139 {dimension_numbers = #tpu.dot_dimension_numbers<[1], [0], [0], [1], [0, 0, 1, 1], [], []>} : vector<8x128xbf16>, vector<128x512xbf16>, vector<8x512xf32> -> vector<8x512xf32>
    %c1_140 = arith.constant 1 : index
    %c0_141 = arith.constant 0 : index
    %c0_142 = arith.constant 0 : index
    %358 = vector.load %arg12[%c1_140, %c0_141, %c0_142] : memref<2x1x512xf32, #tpu.memory_space<vmem>>, vector<1x1x512xf32>
    %359 = vector.shape_cast %358 : vector<1x1x512xf32> to vector<1x512xf32>
    %360 = vector.broadcast %359 : vector<1x512xf32> to vector<8x512xf32>
    %361 = arith.addf %357, %360 : vector<8x512xf32>
    %cst_143 = arith.constant 1.702000e+00 : f32
    %362 = vector.broadcast %cst_143 : f32 to vector<8x512xf32>
    %363 = arith.mulf %362, %361 : vector<8x512xf32>
    %364 = arith.negf %363 : vector<8x512xf32>
    %365 = math.exp %364 : vector<8x512xf32>
    %cst_144 = arith.constant 1.000000e+00 : f32
    %366 = vector.broadcast %cst_144 : f32 to vector<8x512xf32>
    %367 = arith.addf %366, %365 : vector<8x512xf32>
    %368 = arith.divf %366, %367 : vector<8x512xf32>
    %369 = arith.mulf %361, %368 : vector<8x512xf32>
    %370 = arith.truncf %369 : vector<8x512xf32> to vector<8x512xbf16>
    %c1_145 = arith.constant 1 : index
    %c0_146 = arith.constant 0 : index
    %c0_147 = arith.constant 0 : index
    %371 = vector.load %arg13[%c1_145, %c0_146, %c0_147] : memref<2x512x128xbf16, #tpu.memory_space<vmem>>, vector<1x512x128xbf16>
    %372 = vector.shape_cast %371 : vector<1x512x128xbf16> to vector<512x128xbf16>
    %cst_148 = arith.constant dense<0.000000e+00> : vector<8x128xf32>
    %373 = tpu.matmul %370, %372, %cst_148 {dimension_numbers = #tpu.dot_dimension_numbers<[1], [0], [0], [1], [0, 0, 1, 1], [], []>} : vector<8x512xbf16>, vector<512x128xbf16>, vector<8x128xf32> -> vector<8x128xf32>
    %c1_149 = arith.constant 1 : index
    %c0_150 = arith.constant 0 : index
    %c0_151 = arith.constant 0 : index
    %374 = vector.load %arg14[%c1_149, %c0_150, %c0_151] : memref<2x1x128xf32, #tpu.memory_space<vmem>>, vector<1x1x128xf32>
    %375 = vector.shape_cast %374 : vector<1x1x128xf32> to vector<1x128xf32>
    %376 = vector.broadcast %375 : vector<1x128xf32> to vector<8x128xf32>
    %377 = arith.addf %373, %376 : vector<8x128xf32>
    %378 = arith.addf %377, %327 : vector<8x128xf32>
    %c0_152 = arith.constant 0 : index
    %c0_153 = arith.constant 0 : index
    %c0_154 = arith.constant 0 : index
    %379 = vector.load %arg2[%c0_152, %c0_153, %c0_154] : memref<1x1x8xf32, #tpu.memory_space<vmem>>, vector<1x1x8xf32>
    %380 = vector.shape_cast %379 : vector<1x1x8xf32> to vector<1x8xf32>
    %cst_155 = arith.constant dense<0.000000e+00> : vector<1x128xf32>
    %381 = tpu.matmul %380, %378, %cst_155 {dimension_numbers = #tpu.dot_dimension_numbers<[1], [0], [0], [1], [0, 0, 1, 1], [], []>} : vector<1x8xf32>, vector<8x128xf32>, vector<1x128xf32> -> vector<1x128xf32>
    %c0_156 = arith.constant 0 : index
    %c0_157 = arith.constant 0 : index
    %382 = vector.load %arg15[%c0_156, %c0_157] : memref<1x128xf32, #tpu.memory_space<vmem>>, vector<1x128xf32>
    %c0_158 = arith.constant 0 : index
    %c0_159 = arith.constant 0 : index
    %383 = vector.load %arg16[%c0_158, %c0_159] : memref<1x128xf32, #tpu.memory_space<vmem>>, vector<1x128xf32>
    %cst_160 = arith.constant dense<0.000000e+00> : vector<1xf32>
    %384 = vector.multi_reduction <add>, %381, %cst_160 [1] : vector<1x128xf32> to vector<1xf32>
    %385 = vector.shape_cast %384 : vector<1xf32> to vector<1x1xf32>
    %cst_161 = arith.constant 1.280000e+02 : f32
    %386 = vector.broadcast %cst_161 : f32 to vector<1x1xf32>
    %387 = arith.divf %385, %386 : vector<1x1xf32>
    %388 = vector.broadcast %387 : vector<1x1xf32> to vector<1x128xf32>
    %389 = arith.subf %381, %388 : vector<1x128xf32>
    %390 = arith.mulf %389, %389 : vector<1x128xf32>
    %cst_162 = arith.constant dense<0.000000e+00> : vector<1xf32>
    %391 = vector.multi_reduction <add>, %390, %cst_162 [1] : vector<1x128xf32> to vector<1xf32>
    %392 = vector.shape_cast %391 : vector<1xf32> to vector<1x1xf32>
    %cst_163 = arith.constant 1.280000e+02 : f32
    %393 = vector.broadcast %cst_163 : f32 to vector<1x1xf32>
    %394 = arith.divf %392, %393 : vector<1x1xf32>
    %395 = vector.broadcast %387 : vector<1x1xf32> to vector<1x128xf32>
    %396 = arith.subf %381, %395 : vector<1x128xf32>
    %cst_164 = arith.constant 9.99999974E-6 : f32
    %397 = vector.broadcast %cst_164 : f32 to vector<1x1xf32>
    %398 = arith.addf %394, %397 : vector<1x1xf32>
    %399 = math.rsqrt %398 : vector<1x1xf32>
    %400 = vector.broadcast %399 : vector<1x1xf32> to vector<1x128xf32>
    %401 = arith.mulf %396, %400 : vector<1x128xf32>
    %402 = arith.mulf %401, %382 : vector<1x128xf32>
    %403 = arith.addf %402, %383 : vector<1x128xf32>
    %404 = arith.truncf %403 : vector<1x128xf32> to vector<1x128xbf16>
    %c0_165 = arith.constant 0 : index
    %c0_166 = arith.constant 0 : index
    %405 = vector.load %arg17[%c0_165, %c0_166] : memref<128x128xbf16, #tpu.memory_space<vmem>>, vector<128x128xbf16>
    %cst_167 = arith.constant dense<0.000000e+00> : vector<1x128xf32>
    %406 = tpu.matmul %404, %405, %cst_167 {dimension_numbers = #tpu.dot_dimension_numbers<[1], [0], [0], [1], [0, 0, 1, 1], [], []>} : vector<1x128xbf16>, vector<128x128xbf16>, vector<1x128xf32> -> vector<1x128xf32>
    %c0_168 = arith.constant 0 : index
    %c0_169 = arith.constant 0 : index
    %c0_170 = arith.constant 0 : index
    %407 = vector.load %arg18[%c0_168, %c0_169, %c0_170] : memref<1x1x128xf32, #tpu.memory_space<vmem>>, vector<1x1x128xf32>
    %408 = vector.shape_cast %407 : vector<1x1x128xf32> to vector<1x128xf32>
    %409 = vector.shape_cast %406 : vector<1x128xf32> to vector<1x1x128xf32>
    tpu.vector_store %arg18[%c0_168, %c0_169, %c0_170], %409 {strides = array<i32>} : memref<1x1x128xf32, #tpu.memory_space<vmem>>, vector<1x1x128xf32>,
    return
  }
  func.func @transform_0(%arg0: i32) -> (i32, i32, i32) {
    %c0_i32 = arith.constant 0 : i32
    %c0_i32_0 = arith.constant 0 : i32
    %c0_i32_1 = arith.constant 0 : i32
    return %arg0, %c0_i32, %c0_i32_0 : i32, i32, i32
  }
  func.func @transform_1(%arg0: i32) -> (i32, i32, i32) {
    %c0_i32 = arith.constant 0 : i32
    %c0_i32_0 = arith.constant 0 : i32
    %c0_i32_1 = arith.constant 0 : i32
    return %arg0, %c0_i32, %c0_i32_0 : i32, i32, i32
  }
  func.func @transform_2(%arg0: i32) -> (i32, i32, i32) {
    %c0_i32 = arith.constant 0 : i32
    %c0_i32_0 = arith.constant 0 : i32
    %c0_i32_1 = arith.constant 0 : i32
    %c0_i32_2 = arith.constant 0 : i32
    return %c0_i32, %c0_i32_0, %c0_i32_1 : i32, i32, i32
  }
  func.func @transform_3(%arg0: i32) -> (i32, i32, i32) {
    %c0_i32 = arith.constant 0 : i32
    %c0_i32_0 = arith.constant 0 : i32
    %c0_i32_1 = arith.constant 0 : i32
    %c0_i32_2 = arith.constant 0 : i32
    return %c0_i32, %c0_i32_0, %c0_i32_1 : i32, i32, i32
  }
  func.func @transform_4(%arg0: i32) -> (i32, i32, i32) {
    %c0_i32 = arith.constant 0 : i32
    %c0_i32_0 = arith.constant 0 : i32
    %c0_i32_1 = arith.constant 0 : i32
    %c0_i32_2 = arith.constant 0 : i32
    return %c0_i32, %c0_i32_0, %c0_i32_1 : i32, i32, i32
  }
  func.func @transform_5(%arg0: i32) -> (i32, i32, i32) {
    %c0_i32 = arith.constant 0 : i32
    %c0_i32_0 = arith.constant 0 : i32
    %c0_i32_1 = arith.constant 0 : i32
    %c0_i32_2 = arith.constant 0 : i32
    return %c0_i32, %c0_i32_0, %c0_i32_1 : i32, i32, i32
  }
  func.func @transform_6(%arg0: i32) -> (i32, i32, i32) {
    %c0_i32 = arith.constant 0 : i32
    %c0_i32_0 = arith.constant 0 : i32
    %c0_i32_1 = arith.constant 0 : i32
    %c0_i32_2 = arith.constant 0 : i32
    return %c0_i32, %c0_i32_0, %c0_i32_1 : i32, i32, i32
  }
  func.func @transform_7(%arg0: i32) -> (i32, i32, i32) {
    %c0_i32 = arith.constant 0 : i32
    %c0_i32_0 = arith.constant 0 : i32
    %c0_i32_1 = arith.constant 0 : i32
    %c0_i32_2 = arith.constant 0 : i32
    return %c0_i32, %c0_i32_0, %c0_i32_1 : i32, i32, i32
  }
  func.func @transform_8(%arg0: i32) -> (i32, i32, i32) {
    %c0_i32 = arith.constant 0 : i32
    %c0_i32_0 = arith.constant 0 : i32
    %c0_i32_1 = arith.constant 0 : i32
    %c0_i32_2 = arith.constant 0 : i32
    return %c0_i32, %c0_i32_0, %c0_i32_1 : i32, i32, i32
  }
  func.func @transform_9(%arg0: i32) -> (i32, i32, i32) {
    %c0_i32 = arith.constant 0 : i32
    %c0_i32_0 = arith.constant 0 : i32
    %c0_i32_1 = arith.constant 0 : i32
    %c0_i32_2 = arith.constant 0 : i32
    return %c0_i32, %c0_i32_0, %c0_i32_1 : i32, i32, i32
  }
  func.func @transform_10(%arg0: i32) -> (i32, i32, i32) {
    %c0_i32 = arith.constant 0 : i32
    %c0_i32_0 = arith.constant 0 : i32
    %c0_i32_1 = arith.constant 0 : i32
    %c0_i32_2 = arith.constant 0 : i32
    return %c0_i32, %c0_i32_0, %c0_i32_1 : i32, i32, i32
  }
  func.func @transform_11(%arg0: i32) -> (i32, i32, i32) {
    %c0_i32 = arith.constant 0 : i32
    %c0_i32_0 = arith.constant 0 : i32
    %c0_i32_1 = arith.constant 0 : i32
    %c0_i32_2 = arith.constant 0 : i32
    return %c0_i32, %c0_i32_0, %c0_i32_1 : i32, i32, i32
  }
  func.func @transform_12(%arg0: i32) -> (i32, i32, i32) {
    %c0_i32 = arith.constant 0 : i32
    %c0_i32_0 = arith.constant 0 : i32
    %c0_i32_1 = arith.constant 0 : i32
    %c0_i32_2 = arith.constant 0 : i32
    return %c0_i32, %c0_i32_0, %c0_i32_1 : i32, i32, i32
  }
  func.func @transform_13(%arg0: i32) -> (i32, i32, i32) {
    %c0_i32 = arith.constant 0 : i32
    %c0_i32_0 = arith.constant 0 : i32
    %c0_i32_1 = arith.constant 0 : i32
    %c0_i32_2 = arith.constant 0 : i32
    return %c0_i32, %c0_i32_0, %c0_i32_1 : i32, i32, i32
  }
  func.func @transform_14(%arg0: i32) -> (i32, i32) {
    %c0_i32 = arith.constant 0 : i32
    %c0_i32_0 = arith.constant 0 : i32
    %c0_i32_1 = arith.constant 0 : i32
    return %c0_i32, %c0_i32_0 : i32, i32
  }
  func.func @transform_15(%arg0: i32) -> (i32, i32) {
    %c0_i32 = arith.constant 0 : i32
    %c0_i32_0 = arith.constant 0 : i32
    %c0_i32_1 = arith.constant 0 : i32
    return %c0_i32, %c0_i32_0 : i32, i32
  }
  func.func @transform_16(%arg0: i32) -> (i32, i32) {
    %c0_i32 = arith.constant 0 : i32
    %c0_i32_0 = arith.constant 0 : i32
    %c0_i32_1 = arith.constant 0 : i32
    return %c0_i32, %c0_i32_0 : i32, i32
  }
  func.func @transform_17(%arg0: i32) -> (i32, i32, i32) {
    %c0_i32 = arith.constant 0 : i32
    %c0_i32_0 = arith.constant 0 : i32
    %c0_i32_1 = arith.constant 0 : i32
    return %arg0, %c0_i32, %c0_i32_0 : i32, i32, i32
  }
}

</mosaic_0001>

<llo_original>
// kernel: clip_text_encode.1
$region0: #{clip_text_encode.1}
  #allocation0 [shape = 'u32[]', space=smem, size = 0x4, offset = 0x4, fixed_abs, tag = 'smem constant byte address 0x4 - core index']
  #allocation1 [shape = 'u32[144,128]{1,0:T(1,128)}', space=vmem, size = 0x12000, scoped, tag = 'internal scratch']
  %s0 = inlined_call_operand.vmem [shape: f32[2,8,128], index: 0, kind: input, shape index: {}]
  %s1 = inlined_call_operand.vmem [shape: f32[2,1,8], index: 1, kind: input, shape index: {}]
  %s2 = inlined_call_operand.vmem [shape: f32[2,1,128], index: 2, kind: input, shape index: {}, may-alias: {2,8}]
  %s3 = inlined_call_operand.vmem [shape: f32[2,1,128], index: 3, kind: input, shape index: {}, may-alias: {3,7,9,13}]
  %s4 = inlined_call_operand.vmem [shape: bf16[2,128,384], index: 4, kind: input, shape index: {}]
  %s5 = inlined_call_operand.vmem [shape: f32[2,1,384], index: 5, kind: input, shape index: {}]
  %s6 = inlined_call_operand.vmem [shape: bf16[2,128,128], index: 6, kind: input, shape index: {}]
  %s7 = inlined_call_operand.vmem [shape: f32[2,1,128], index: 7, kind: input, shape index: {}, may-alias: {3,7,9,13}]
  %s8 = inlined_call_operand.vmem [shape: f32[2,1,128], index: 8, kind: input, shape index: {}, may-alias: {2,8}]
  %s9 = inlined_call_operand.vmem [shape: f32[2,1,128], index: 9, kind: input, shape index: {}, may-alias: {3,7,9,13}]
  %s10 = inlined_call_operand.vmem [shape: bf16[2,128,512], index: 10, kind: input, shape index: {}]
  %s11 = inlined_call_operand.vmem [shape: f32[2,1,512], index: 11, kind: input, shape index: {}]
  %s12 = inlined_call_operand.vmem [shape: bf16[2,512,128], index: 12, kind: input, shape index: {}]
  %s13 = inlined_call_operand.vmem [shape: f32[2,1,128], index: 13, kind: input, shape index: {}, may-alias: {3,7,9,13}]
  %s14 = inlined_call_operand.vmem [shape: f32[1,128], index: 14, kind: input, shape index: {}]
  %s15 = inlined_call_operand.vmem [shape: f32[1,128], index: 15, kind: input, shape index: {}]
  %s16 = inlined_call_operand.vmem [shape: bf16[128,128], index: 16, kind: input, shape index: {}]
  %s17 = inlined_call_operand.hbm [shape: f32[2,1,128], index: 17, kind: output, shape index: {}]
  %s18 = sld [smem:[#allocation0]]
  $region101: #{clip_text_encode.1} parent=0
    _
  %s20 = ssub.s32 1, %s18
  %s21 = scalar_select 0, %s20, %s18
  $region1: #{clip_text_encode.1} parent=0
    #allocation2 [shape = 'u8[1024]{0}', space=vmem, size = 0x400, scoped, tag = 'output window, operand 0']
    #allocation3 [shape = 's32[2]{0}', space=sflag, size = 0x8, scoped, tag = 'scoped memory for clip_text_encode.1']
    %22 = vsyncpa [#allocation3], 0
    %s23 = scalar_lea.sflag [#allocation3], 1
    %24 = vsyncpa %s23, 0
    loop: start=0, step=1, limit=4
    $region2: #{clip_text_encode.1} parent=1 // loop_pre_header
      _
    $region3: #{clip_text_encode.1} parent=1 // loop_header
      %s26 = sphi 0, %s30
      %p27 = scmp.ge.s32.totalorder %s26, 4
      %s36 = sphi 0, %s38
      %s39 = sphi 0, %s36
      %s40 = sphi 0, %s39
      %s56 = sphi 0, %s40
      %s62 = sphi 0, %s64
      %s65 = sphi 0, %s62
      %s66 = sphi 0, %s65
      %s82 = sphi 0, %s66
      %s86 = sphi 0, %s86
      %s88 = sphi 0, %s86
      %s89 = sphi 0, %s88
      %s103 = sphi 0, %s89
      %s107 = sphi 0, %s107
      %s109 = sphi 0, %s107
      %s110 = sphi 0, %s109
      %s124 = sphi 0, %s110
      %s128 = sphi 0, %s128
      %s130 = sphi 0, %s128
      %s131 = sphi 0, %s130
      %s145 = sphi 0, %s131
      %s149 = sphi 0, %s149
      %s151 = sphi 0, %s149
      %s152 = sphi 0, %s151
      %s166 = sphi 0, %s152
      %s170 = sphi 0, %s170
      %s172 = sphi 0, %s170
      %s173 = sphi 0, %s172
      %s187 = sphi 0, %s173
      %s191 = sphi 0, %s191
      %s193 = sphi 0, %s191
      %s194 = sphi 0, %s193
      %s208 = sphi 0, %s194
      %s212 = sphi 0, %s212
      %s214 = sphi 0, %s212
      %s215 = sphi 0, %s214
      %s229 = sphi 0, %s215
      %s233 = sphi 0, %s233
      %s235 = sphi 0, %s233
      %s236 = sphi 0, %s235
      %s250 = sphi 0, %s236
      %s254 = sphi 0, %s254
      %s256 = sphi 0, %s254
      %s257 = sphi 0, %s256
      %s271 = sphi 0, %s257
      %s275 = sphi 0, %s275
      %s277 = sphi 0, %s275
      %s278 = sphi 0, %s277
      %s292 = sphi 0, %s278
      %s296 = sphi 0, %s296
      %s298 = sphi 0, %s296
      %s299 = sphi 0, %s298
      %s313 = sphi 0, %s299
      %s317 = sphi 0, %s317
      %s319 = sphi 0, %s317
      %s320 = sphi 0, %s319
      %s334 = sphi 0, %s320
      %s338 = sphi 0, %s338
      %s340 = sphi 0, %s338
      %s341 = sphi 0, %s340
      %s355 = sphi 0, %s341
      %s359 = sphi 0, %s359
      %s361 = sphi 0, %s359
      %s362 = sphi 0, %s361
      %s376 = sphi 0, %s362
      %s380 = sphi 0, %s380
      %s382 = sphi 0, %s380
      %s383 = sphi 0, %s382
      %s397 = sphi 0, %s383
      %s403 = sphi 0, %s405
      %s406 = sphi 0, %s403
      %s407 = sphi 0, %s406
      %s423 = sphi 0, %s407
    $region4: #{clip_text_encode.1} parent=1 // loop_header_branch
      %29 = sbr.rel (%p27) target = $region8
    $region5: #{clip_text_encode.1} parent=1 // loop_body
      %s31 = ssub.s32 %s26, 1
      %s32 = ssub.s32 %s26, 2
      %s33 = sadd.s32 %s26, 1
      %s34 = ssub.s32 %s26, %s33
      %p35 = scmp.eq.s32.totalorder %s34, 0
      %s37 = sadd.s32 %s36, 1
      %s38 = scalar_select %p35, %s36, %s37
      %p41 = pneg %p35
      %p42 = scmp.eq.s32.totalorder %s26, 1
      %p43 = por %p41, %p42
      %p44 = scmp.ne.s32.totalorder %s36, %s39
      %p45 = scmp.eq.s32.totalorder %s26, 0
      %p46 = por %p44, %p45
      %p47 = scmp.ne.s32.totalorder %s36, %s39
      %p48 = scmp.eq.s32.totalorder %s31, 1
      %p49 = por %p47, %p48
      %p50 = scmp.ne.s32.totalorder %s39, %s40
      %p51 = scmp.eq.s32.totalorder %s31, 0
      %p52 = por %p50, %p51
      %p53 = scmp.ne.s32.totalorder %s39, %s40
      %p54 = scmp.eq.s32.totalorder %s32, 1
      %p55 = por %p53, %p54
      %p57 = scmp.ne.s32.totalorder %s40, %s56
      %p58 = scmp.eq.s32.totalorder %s32, 0
      %p59 = por %p57, %p58
      %s60 = ssub.s32 %s26, %s33
      %p61 = scmp.eq.s32.totalorder %s60, 0
      %s63 = sadd.s32 %s62, 1
      %s64 = scalar_select %p61, %s62, %s63
      %p67 = pneg %p61
      %p68 = scmp.eq.s32.totalorder %s26, 1
      %p69 = por %p67, %p68
      %p70 = scmp.ne.s32.totalorder %s62, %s65
      %p71 = scmp.eq.s32.totalorder %s26, 0
      %p72 = por %p70, %p71
      %p73 = scmp.ne.s32.totalorder %s62, %s65
      %p74 = scmp.eq.s32.totalorder %s31, 1
      %p75 = por %p73, %p74
      %p76 = scmp.ne.s32.totalorder %s65, %s66
      %p77 = scmp.eq.s32.totalorder %s31, 0
      %p78 = por %p76, %p77
      %p79 = scmp.ne.s32.totalorder %s65, %s66
      %p80 = scmp.eq.s32.totalorder %s32, 1
      %p81 = por %p79, %p80
      %p83 = scmp.ne.s32.totalorder %s66, %s82
      %p84 = scmp.eq.s32.totalorder %s32, 0
      %p85 = por %p83, %p84
      %s87 = sadd.s32 %s86, 1
      %p90 = scmp.eq.s32.totalorder %s26, 1
      %p91 = scmp.ne.s32.totalorder %s86, %s88
      %p92 = scmp.eq.s32.totalorder %s26, 0
      %p93 = por %p91, %p92
      %p94 = scmp.ne.s32.totalorder %s86, %s88
      %p95 = scmp.eq.s32.totalorder %s31, 1
      %p96 = por %p94, %p95
      %p97 = scmp.ne.s32.totalorder %s88, %s89
      %p98 = scmp.eq.s32.totalorder %s31, 0
      %p99 = por %p97, %p98
      %p100 = scmp.ne.s32.totalorder %s88, %s89
      %p101 = scmp.eq.s32.totalorder %s32, 1
      %p102 = por %p100, %p101
      %p104 = scmp.ne.s32.totalorder %s89, %s103
      %p105 = scmp.eq.s32.totalorder %s32, 0
      %p106 = por %p104, %p105
      %s108 = sadd.s32 %s107, 1
      %p111 = scmp.eq.s32.totalorder %s26, 1
      %p112 = scmp.ne.s32.totalorder %s107, %s109
      %p113 = scmp.eq.s32.totalorder %s26, 0
      %p114 = por %p112, %p113
      %p115 = scmp.ne.s32.totalorder %s107, %s109
      %p116 = scmp.eq.s32.totalorder %s31, 1
      %p117 = por %p115, %p116
      %p118 = scmp.ne.s32.totalorder %s109, %s110
      %p119 = scmp.eq.s32.totalorder %s31, 0
      %p120 = por %p118, %p119
      %p121 = scmp.ne.s32.totalorder %s109, %s110
      %p122 = scmp.eq.s32.totalorder %s32, 1
      %p123 = por %p121, %p122
      %p125 = scmp.ne.s32.totalorder %s110, %s124
      %p126 = scmp.eq.s32.totalorder %s32, 0
      %p127 = por %p125, %p126
      %s129 = sadd.s32 %s128, 1
      %p132 = scmp.eq.s32.totalorder %s26, 1
      %p133 = scmp.ne.s32.totalorder %s128, %s130
      %p134 = scmp.eq.s32.totalorder %s26, 0
      %p135 = por %p133, %p134
      %p136 = scmp.ne.s32.totalorder %s128, %s130
      %p137 = scmp.eq.s32.totalorder %s31, 1
      %p138 = por %p136, %p137
      %p139 = scmp.ne.s32.totalorder %s130, %s131
      %p140 = scmp.eq.s32.totalorder %s31, 0
      %p141 = por %p139, %p140
      %p142 = scmp.ne.s32.totalorder %s130, %s131
      %p143 = scmp.eq.s32.totalorder %s32, 1
      %p144 = por %p142, %p143
      %p146 = scmp.ne.s32.totalorder %s131, %s145
      %p147 = scmp.eq.s32.totalorder %s32, 0
      %p148 = por %p146, %p147
      %s150 = sadd.s32 %s149, 1
      %p153 = scmp.eq.s32.totalorder %s26, 1
      %p154 = scmp.ne.s32.totalorder %s149, %s151
      %p155 = scmp.eq.s32.totalorder %s26, 0
      %p156 = por %p154, %p155
      %p157 = scmp.ne.s32.totalorder %s149, %s151
      %p158 = scmp.eq.s32.totalorder %s31, 1
      %p159 = por %p157, %p158
      %p160 = scmp.ne.s32.totalorder %s151, %s152
      %p161 = scmp.eq.s32.totalorder %s31, 0
      %p162 = por %p160, %p161
      %p163 = scmp.ne.s32.totalorder %s151, %s152
      %p164 = scmp.eq.s32.totalorder %s32, 1
      %p165 = por %p163, %p164
      %p167 = scmp.ne.s32.totalorder %s152, %s166
      %p168 = scmp.eq.s32.totalorder %s32, 0
      %p169 = por %p167, %p168
      %s171 = sadd.s32 %s170, 1
      %p174 = scmp.eq.s32.totalorder %s26, 1
      %p175 = scmp.ne.s32.totalorder %s170, %s172
      %p176 = scmp.eq.s32.totalorder %s26, 0
      %p177 = por %p175, %p176
      %p178 = scmp.ne.s32.totalorder %s170, %s172
      %p179 = scmp.eq.s32.totalorder %s31, 1
      %p180 = por %p178, %p179
      %p181 = scmp.ne.s32.totalorder %s172, %s173
      %p182 = scmp.eq.s32.totalorder %s31, 0
      %p183 = por %p181, %p182
      %p184 = scmp.ne.s32.totalorder %s172, %s173
      %p185 = scmp.eq.s32.totalorder %s32, 1
      %p186 = por %p184, %p185
      %p188 = scmp.ne.s32.totalorder %s173, %s187
      %p189 = scmp.eq.s32.totalorder %s32, 0
      %p190 = por %p188, %p189
      %s192 = sadd.s32 %s191, 1
      %p195 = scmp.eq.s32.totalorder %s26, 1
      %p196 = scmp.ne.s32.totalorder %s191, %s193
      %p197 = scmp.eq.s32.totalorder %s26, 0
      %p198 = por %p196, %p197
      %p199 = scmp.ne.s32.totalorder %s191, %s193
      %p200 = scmp.eq.s32.totalorder %s31, 1
      %p201 = por %p199, %p200
      %p202 = scmp.ne.s32.totalorder %s193, %s194
      %p203 = scmp.eq.s32.totalorder %s31, 0
      %p204 = por %p202, %p203
      %p205 = scmp.ne.s32.totalorder %s193, %s194
      %p206 = scmp.eq.s32.totalorder %s32, 1
      %p207 = por %p205, %p206
      %p209 = scmp.ne.s32.totalorder %s194, %s208
      %p210 = scmp.eq.s32.totalorder %s32, 0
      %p211 = por %p209, %p210
      %s213 = sadd.s32 %s212, 1
      %p216 = scmp.eq.s32.totalorder %s26, 1
      %p217 = scmp.ne.s32.totalorder %s212, %s214
      %p218 = scmp.eq.s32.totalorder %s26, 0
      %p219 = por %p217, %p218
      %p220 = scmp.ne.s32.totalorder %s212, %s214
      %p221 = scmp.eq.s32.totalorder %s31, 1
      %p222 = por %p220, %p221
      %p223 = scmp.ne.s32.totalorder %s214, %s215
      %p224 = scmp.eq.s32.totalorder %s31, 0
      %p225 = por %p223, %p224
      %p226 = scmp.ne.s32.totalorder %s214, %s215
      %p227 = scmp.eq.s32.totalorder %s32, 1
      %p228 = por %p226, %p227
      %p230 = scmp.ne.s32.totalorder %s215, %s229
      %p231 = scmp.eq.s32.totalorder %s32, 0
      %p232 = por %p230, %p231
      %s234 = sadd.s32 %s233, 1
      %p237 = scmp.eq.s32.totalorder %s26, 1
      %p238 = scmp.ne.s32.totalorder %s233, %s235
      %p239 = scmp.eq.s32.totalorder %s26, 0
      %p240 = por %p238, %p239
      %p241 = scmp.ne.s32.totalorder %s233, %s235
      %p242 = scmp.eq.s32.totalorder %s31, 1
      %p243 = por %p241, %p242
      %p244 = scmp.ne.s32.totalorder %s235, %s236
      %p245 = scmp.eq.s32.totalorder %s31, 0
      %p246 = por %p244, %p245
      %p247 = scmp.ne.s32.totalorder %s235, %s236
      %p248 = scmp.eq.s32.totalorder %s32, 1
      %p249 = por %p247, %p248
      %p251 = scmp.ne.s32.totalorder %s236, %s250
      %p252 = scmp.eq.s32.totalorder %s32, 0
      %p253 = por %p251, %p252
      %s255 = sadd.s32 %s254, 1
      %p258 = scmp.eq.s32.totalorder %s26, 1
      %p259 = scmp.ne.s32.totalorder %s254, %s256
      %p260 = scmp.eq.s32.totalorder %s26, 0
      %p261 = por %p259, %p260
      %p262 = scmp.ne.s32.totalorder %s254, %s256
      %p263 = scmp.eq.s32.totalorder %s31, 1
      %p264 = por %p262, %p263
      %p265 = scmp.ne.s32.totalorder %s256, %s257
      %p266 = scmp.eq.s32.totalorder %s31, 0
      %p267 = por %p265, %p266
      %p268 = scmp.ne.s32.totalorder %s256, %s257
      %p269 = scmp.eq.s32.totalorder %s32, 1
      %p270 = por %p268, %p269
      %p272 = scmp.ne.s32.totalorder %s257, %s271
      %p273 = scmp.eq.s32.totalorder %s32, 0
      %p274 = por %p272, %p273
      %s276 = sadd.s32 %s275, 1
      %p279 = scmp.eq.s32.totalorder %s26, 1
      %p280 = scmp.ne.s32.totalorder %s275, %s277
      %p281 = scmp.eq.s32.totalorder %s26, 0
      %p282 = por %p280, %p281
      %p283 = scmp.ne.s32.totalorder %s275, %s277
      %p284 = scmp.eq.s32.totalorder %s31, 1
      %p285 = por %p283, %p284
      %p286 = scmp.ne.s32.totalorder %s277, %s278
      %p287 = scmp.eq.s32.totalorder %s31, 0
      %p288 = por %p286, %p287
      %p289 = scmp.ne.s32.totalorder %s277, %s278
      %p290 = scmp.eq.s32.totalorder %s32, 1
      %p291 = por %p289, %p290
      %p293 = scmp.ne.s32.totalorder %s278, %s292
      %p294 = scmp.eq.s32.totalorder %s32, 0
      %p295 = por %p293, %p294
      %s297 = sadd.s32 %s296, 1
      %p300 = scmp.eq.s32.totalorder %s26, 1
      %p301 = scmp.ne.s32.totalorder %s296, %s298
      %p302 = scmp.eq.s32.totalorder %s26, 0
      %p303 = por %p301, %p302
      %p304 = scmp.ne.s32.totalorder %s296, %s298
      %p305 = scmp.eq.s32.totalorder %s31, 1
      %p306 = por %p304, %p305
      %p307 = scmp.ne.s32.totalorder %s298, %s299
      %p308 = scmp.eq.s32.totalorder %s31, 0
      %p309 = por %p307, %p308
      %p310 = scmp.ne.s32.totalorder %s298, %s299
      %p311 = scmp.eq.s32.totalorder %s32, 1
      %p312 = por %p310, %p311
      %p314 = scmp.ne.s32.totalorder %s299, %s313
      %p315 = scmp.eq.s32.totalorder %s32, 0
      %p316 = por %p314, %p315
      %s318 = sadd.s32 %s317, 1
      %p321 = scmp.eq.s32.totalorder %s26, 1
      %p322 = scmp.ne.s32.totalorder %s317, %s319
      %p323 = scmp.eq.s32.totalorder %s26, 0
      %p324 = por %p322, %p323
      %p325 = scmp.ne.s32.totalorder %s317, %s319
      %p326 = scmp.eq.s32.totalorder %s31, 1
      %p327 = por %p325, %p326
      %p328 = scmp.ne.s32.totalorder %s319, %s320
      %p329 = scmp.eq.s32.totalorder %s31, 0
      %p330 = por %p328, %p329
      %p331 = scmp.ne.s32.totalorder %s319, %s320
      %p332 = scmp.eq.s32.totalorder %s32, 1
      %p333 = por %p331, %p332
      %p335 = scmp.ne.s32.totalorder %s320, %s334
      %p336 = scmp.eq.s32.totalorder %s32, 0
      %p337 = por %p335, %p336
      %s339 = sadd.s32 %s338, 1
      %p342 = scmp.eq.s32.totalorder %s26, 1
      %p343 = scmp.ne.s32.totalorder %s338, %s340
      %p344 = scmp.eq.s32.totalorder %s26, 0
      %p345 = por %p343, %p344
      %p346 = scmp.ne.s32.totalorder %s338, %s340
      %p347 = scmp.eq.s32.totalorder %s31, 1
      %p348 = por %p346, %p347
      %p349 = scmp.ne.s32.totalorder %s340, %s341
      %p350 = scmp.eq.s32.totalorder %s31, 0
      %p351 = por %p349, %p350
      %p352 = scmp.ne.s32.totalorder %s340, %s341
      %p353 = scmp.eq.s32.totalorder %s32, 1
      %p354 = por %p352, %p353
      %p356 = scmp.ne.s32.totalorder %s341, %s355
      %p357 = scmp.eq.s32.totalorder %s32, 0
      %p358 = por %p356, %p357
      %s360 = sadd.s32 %s359, 1
      %p363 = scmp.eq.s32.totalorder %s26, 1
      %p364 = scmp.ne.s32.totalorder %s359, %s361
      %p365 = scmp.eq.s32.totalorder %s26, 0
      %p366 = por %p364, %p365
      %p367 = scmp.ne.s32.totalorder %s359, %s361
      %p368 = scmp.eq.s32.totalorder %s31, 1
      %p369 = por %p367, %p368
      %p370 = scmp.ne.s32.totalorder %s361, %s362
      %p371 = scmp.eq.s32.totalorder %s31, 0
      %p372 = por %p370, %p371
      %p373 = scmp.ne.s32.totalorder %s361, %s362
      %p374 = scmp.eq.s32.totalorder %s32, 1
      %p375 = por %p373, %p374
      %p377 = scmp.ne.s32.totalorder %s362, %s376
      %p378 = scmp.eq.s32.totalorder %s32, 0
      %p379 = por %p377, %p378
      %s381 = sadd.s32 %s380, 1
      %p384 = scmp.eq.s32.totalorder %s26, 1
      %p385 = scmp.ne.s32.totalorder %s380, %s382
      %p386 = scmp.eq.s32.totalorder %s26, 0
      %p387 = por %p385, %p386
      %p388 = scmp.ne.s32.totalorder %s380, %s382
      %p389 = scmp.eq.s32.totalorder %s31, 1
      %p390 = por %p388, %p389
      %p391 = scmp.ne.s32.totalorder %s382, %s383
      %p392 = scmp.eq.s32.totalorder %s31, 0
      %p393 = por %p391, %p392
      %p394 = scmp.ne.s32.totalorder %s382, %s383
      %p395 = scmp.eq.s32.totalorder %s32, 1
      %p396 = por %p394, %p395
      %p398 = scmp.ne.s32.totalorder %s383, %s397
      %p399 = scmp.eq.s32.totalorder %s32, 0
      %p400 = por %p398, %p399
      %s401 = ssub.s32 %s26, %s33
      %p402 = scmp.eq.s32.totalorder %s401, 0
      %s404 = sadd.s32 %s403, 1
      %s405 = scalar_select %p402, %s403, %s404
      %p408 = pneg %p402
      %p409 = scmp.eq.s32.totalorder %s26, 1
      %p410 = por %p408, %p409
      %p411 = scmp.ne.s32.totalorder %s403, %s406
      %p412 = scmp.eq.s32.totalorder %s26, 0
      %p413 = por %p411, %p412
      %p414 = scmp.ne.s32.totalorder %s403, %s406
      %p415 = scmp.eq.s32.totalorder %s31, 1
      %p416 = por %p414, %p415
      %p417 = scmp.ne.s32.totalorder %s406, %s407
      %p418 = scmp.eq.s32.totalorder %s31, 0
      %p419 = por %p417, %p418
      %p420 = scmp.ne.s32.totalorder %s406, %s407
      %p421 = scmp.eq.s32.totalorder %s32, 1
      %p422 = por %p420, %p421
      %p424 = scmp.ne.s32.totalorder %s407, %s423
      %p425 = scmp.eq.s32.totalorder %s32, 0
      %p426 = por %p424, %p425
      %p427 = scmp.le.s32.totalorder 1, %s26
      %p428 = scmp.lt.s32.totalorder %s26, 3
      %p429 = pnand %p427, %p428
      %p430 = pneg %p429
      // Predicated region
      $region9: #{clip_text_encode.1} parent=5 // pred_check
        _
      $region10: #{clip_text_encode.1} parent=5 // pred_check_branch
        %432 = sbr.rel (%p429) target = $region12
      $region11: #{clip_text_encode.1} parent=5 // pred_region
        %s433 = ssub.s32 %s26, 1
        // Predicated region
        $region13: #{clip_text_encode.1} parent=11 // pred_check
          %p434 = pneg %p99
        $region14: #{clip_text_encode.1} parent=11 // pred_check_branch
          %436 = sbr.rel (%p434) target = $region16
        $region15: #{clip_text_encode.1} parent=11 // pred_region
          _
        $region16: #{clip_text_encode.1} parent=11 // pred_fallthru
          _
        // Predicated region
        $region17: #{clip_text_encode.1} parent=11 // pred_check
          %p437 = pneg %p120
        $region18: #{clip_text_encode.1} parent=11 // pred_check_branch
          %439 = sbr.rel (%p437) target = $region20
        $region19: #{clip_text_encode.1} parent=11 // pred_region
          _
        $region20: #{clip_text_encode.1} parent=11 // pred_fallthru
          _
        // Predicated region
        $region21: #{clip_text_encode.1} parent=11 // pred_check
          %p440 = pneg %p141
        $region22: #{clip_text_encode.1} parent=11 // pred_check_branch
          %442 = sbr.rel (%p440) target = $region24
        $region23: #{clip_text_encode.1} parent=11 // pred_region
          _
        $region24: #{clip_text_encode.1} parent=11 // pred_fallthru
          _
        // Predicated region
        $region25: #{clip_text_encode.1} parent=11 // pred_check
          %p443 = pneg %p162
        $region26: #{clip_text_encode.1} parent=11 // pred_check_branch
          %445 = sbr.rel (%p443) target = $region28
        $region27: #{clip_text_encode.1} parent=11 // pred_region
          _
        $region28: #{clip_text_encode.1} parent=11 // pred_fallthru
          _
        // Predicated region
        $region29: #{clip_text_encode.1} parent=11 // pred_check
          %p446 = pneg %p183
        $region30: #{clip_text_encode.1} parent=11 // pred_check_branch
          %448 = sbr.rel (%p446) target = $region32
        $region31: #{clip_text_encode.1} parent=11 // pred_region
          _
        $region32: #{clip_text_encode.1} parent=11 // pred_fallthru
          _
        // Predicated region
        $region33: #{clip_text_encode.1} parent=11 // pred_check
          %p449 = pneg %p204
        $region34: #{clip_text_encode.1} parent=11 // pred_check_branch
          %451 = sbr.rel (%p449) target = $region36
        $region35: #{clip_text_encode.1} parent=11 // pred_region
          _
        $region36: #{clip_text_encode.1} parent=11 // pred_fallthru
          _
        // Predicated region
        $region37: #{clip_text_encode.1} parent=11 // pred_check
          %p452 = pneg %p225
        $region38: #{clip_text_encode.1} parent=11 // pred_check_branch
          %454 = sbr.rel (%p452) target = $region40
        $region39: #{clip_text_encode.1} parent=11 // pred_region
          _
        $region40: #{clip_text_encode.1} parent=11 // pred_fallthru
          _
        // Predicated region
        $region41: #{clip_text_encode.1} parent=11 // pred_check
          %p455 = pneg %p246
        $region42: #{clip_text_encode.1} parent=11 // pred_check_branch
          %457 = sbr.rel (%p455) target = $region44
        $region43: #{clip_text_encode.1} parent=11 // pred_region
          _
        $region44: #{clip_text_encode.1} parent=11 // pred_fallthru
          _
        // Predicated region
        $region45: #{clip_text_encode.1} parent=11 // pred_check
          %p458 = pneg %p267
        $region46: #{clip_text_encode.1} parent=11 // pred_check_branch
          %460 = sbr.rel (%p458) target = $region48
        $region47: #{clip_text_encode.1} parent=11 // pred_region
          _
        $region48: #{clip_text_encode.1} parent=11 // pred_fallthru
          _
        // Predicated region
        $region49: #{clip_text_encode.1} parent=11 // pred_check
          %p461 = pneg %p288
        $region50: #{clip_text_encode.1} parent=11 // pred_check_branch
          %463 = sbr.rel (%p461) target = $region52
        $region51: #{clip_text_encode.1} parent=11 // pred_region
          _
        $region52: #{clip_text_encode.1} parent=11 // pred_fallthru
          _
        // Predicated region
        $region53: #{clip_text_encode.1} parent=11 // pred_check
          %p464 = pneg %p309
        $region54: #{clip_text_encode.1} parent=11 // pred_check_branch
          %466 = sbr.rel (%p464) target = $region56
        $region55: #{clip_text_encode.1} parent=11 // pred_region
          _
        $region56: #{clip_text_encode.1} parent=11 // pred_fallthru
          _
        // Predicated region
        $region57: #{clip_text_encode.1} parent=11 // pred_check
          %p467 = pneg %p330
        $region58: #{clip_text_encode.1} parent=11 // pred_check_branch
          %469 = sbr.rel (%p467) target = $region60
        $region59: #{clip_text_encode.1} parent=11 // pred_region
          _
        $region60: #{clip_text_encode.1} parent=11 // pred_fallthru
          _
        // Predicated region
        $region61: #{clip_text_encode.1} parent=11 // pred_check
          %p470 = pneg %p351
        $region62: #{clip_text_encode.1} parent=11 // pred_check_branch
          %472 = sbr.rel (%p470) target = $region64
        $region63: #{clip_text_encode.1} parent=11 // pred_region
          _
        $region64: #{clip_text_encode.1} parent=11 // pred_fallthru
          _
        // Predicated region
        $region65: #{clip_text_encode.1} parent=11 // pred_check
          %p473 = pneg %p372
        $region66: #{clip_text_encode.1} parent=11 // pred_check_branch
          %475 = sbr.rel (%p473) target = $region68
        $region67: #{clip_text_encode.1} parent=11 // pred_region
          _
        $region68: #{clip_text_encode.1} parent=11 // pred_fallthru
          _
        // Predicated region
        $region69: #{clip_text_encode.1} parent=11 // pred_check
          %p476 = pneg %p393
        $region70: #{clip_text_encode.1} parent=11 // pred_check_branch
          %478 = sbr.rel (%p476) target = $region72
        $region71: #{clip_text_encode.1} parent=11 // pred_region
          _
        $region72: #{clip_text_encode.1} parent=11 // pred_fallthru
          _
      $region12: #{clip_text_encode.1} parent=5 // pred_fallthru
        _
      %p479 = scmp.lt.s32.totalorder %s26, 2
      // Predicated region
      $region73: #{clip_text_encode.1} parent=5 // pred_check
        %p480 = pneg %p479
      $region74: #{clip_text_encode.1} parent=5 // pred_check_branch
        %482 = sbr.rel (%p480) target = $region76
      $region75: #{clip_text_encode.1} parent=5 // pred_region
        // Predicated region
        $region77: #{clip_text_encode.1} parent=75 // pred_check
          %p483 = pneg %p46
        $region78: #{clip_text_encode.1} parent=75 // pred_check_branch
          %485 = sbr.rel (%p483) target = $region80
        $region79: #{clip_text_encode.1} parent=75 // pred_region
          %p486 = scmp.lt.s32.totalorder %s26, 1
          %s487 = scalar_select %p486, %s26, 1
          %s488 = smul.addr %s487, 8
          %s489 = scalar_lea.vmem %s0, %s488
        $region80: #{clip_text_encode.1} parent=75 // pred_fallthru
          _
        // Predicated region
        $region81: #{clip_text_encode.1} parent=75 // pred_check
          %p490 = pneg %p72
        $region82: #{clip_text_encode.1} parent=75 // pred_check_branch
          %492 = sbr.rel (%p490) target = $region84
        $region83: #{clip_text_encode.1} parent=75 // pred_region
          %p493 = scmp.lt.s32.totalorder %s26, 1
          %s494 = scalar_select %p493, %s26, 1
          %s495 = scalar_lea.vmem %s1, %s494
        $region84: #{clip_text_encode.1} parent=75 // pred_fallthru
          _
      $region76: #{clip_text_encode.1} parent=5 // pred_fallthru
        _
      %p496 = scmp.le.s32.totalorder 1, %s26
      %p497 = scmp.lt.s32.totalorder %s26, 3
      %p498 = pnand %p496, %p497
      %p499 = pneg %p498
      // Predicated region
      $region85: #{clip_text_encode.1} parent=5 // pred_check
        _
      $region86: #{clip_text_encode.1} parent=5 // pred_check_branch
        %501 = sbr.rel (%p498) target = $region88
      $region87: #{clip_text_encode.1} parent=5 // pred_region
        %s502 = ssub.s32 %s26, 1
        %p503 = scmp.lt.s32.totalorder %s31, 1
        %s504 = scalar_select %p503, %s31, 1
        %s505 = smul.addr %s504, 8
        %s506 = scalar_lea.vmem %s0, %s505
        %p507 = pneg %p52
        %p508 = pneg %p49
        %p509 = scmp.lt.s32.totalorder %s31, 1
        %s510 = scalar_select %p509, %s31, 1
        %s511 = scalar_lea.vmem %s1, %s510
        %p512 = pneg %p78
        %p513 = pneg %p75
        %p514 = pneg %p99
        %p515 = pneg %p96
        %p516 = pneg %p120
        %p517 = pneg %p117
        %p518 = pneg %p141
        %p519 = pneg %p138
        %p520 = pneg %p162
        %p521 = pneg %p159
        %p522 = pneg %p183
        %p523 = pneg %p180
        %p524 = pneg %p204
        %p525 = pneg %p201
        %p526 = pneg %p225
        %p527 = pneg %p222
        %p528 = pneg %p246
        %p529 = pneg %p243
        %p530 = pneg %p267
        %p531 = pneg %p264
        %p532 = pneg %p288
        %p533 = pneg %p285
        %p534 = pneg %p309
        %p535 = pneg %p306
        %p536 = pneg %p330
        %p537 = pneg %p327
        %p538 = pneg %p351
        %p539 = pneg %p348
        %p540 = pneg %p372
        %p541 = pneg %p369
        %p542 = pneg %p393
        %p543 = pneg %p390
        %p544 = pneg %p419
        %p545 = pneg %p416
        %s546 = sand.u32 %s406, 1
        %s547 = scalar_lea.sflag [#allocation3], %s546
        %s548 = sand.u32 %s406, 1
        %s549 = scalar_lea.vmem [#allocation2], %s548
        %p550 = scmp.lt.s32.totalorder %s31, 1
        %s551 = scalar_select %p550, %s31, 1
        %s552 = smul.addr %s551, 8
        %s553 = scalar_lea.vmem %s0, %s552
        %p554 = scmp.lt.s32.totalorder %s31, 1
        %s555 = scalar_select %p554, %s31, 1
        %s556 = scalar_lea.vmem %s1, %s555
        %v558 = vlaneseq
        %v559 = vshrl.u32 %v558, 7
        %v560 = vlaneseq
        %v561 = vand.u32 %v560, 127
        %vm562 = vcmp.le.s32.totalorder %v561, %v559
        %v563 = vld [vmem:[%s553] sm:$0xff]
        %v564 = vld [vmem:[%s2] sm:$0x1]
        %v565 = vld [vmem:[%s3] sm:$0x1]
        %566 = vadd.xlane.f32.xlu0 %v563
        %v567 = vpop.xlane.xlu0 %566
        %v568 = vrcp.pop 128.0
        %v569 = vmul.f32 %v567, %v568
        %v570 = vsub.f32 %v563, %v569
        %v571 = vmul.f32 %v570, %v570
        %572 = vadd.xlane.f32.xlu0 %v571
        %v573 = vpop.xlane.xlu0 %572
        %v574 = vmul.f32 %v573, %v568
        %v575 = vadd.f32 %v574, 1e-05
        %v576 = vrsqrt.pop %v575
        %v577 = vmul.f32 %v570, %v576
        %v579 = vlaneseq
        %v580 = vshrl.u32 %v579, 7
        %v581 = vsub.s32 0, %v580
        %v582 = vrot.slane %v564, %v581
        %v584 = vmul.f32 %v577, %v582
        %v586 = vlaneseq
        %v587 = vshrl.u32 %v586, 7
        %v588 = vsub.s32 0, %v587
        %v589 = vrot.slane %v565, %v588
        %v591 = vadd.f32 %v584, %v589
        %v592 = vpack.c.bf16 %v591, %v591
        %v593 = vld [vmem:[%s4] sm:$0xff]
        %v594 = vld [vmem:[%s4 + $0x8] sm:$0xf]
        %v595 = vld [vmem:[%s4 + $0xc] sm:$0xff]
        %v596 = vld [vmem:[%s4 + $0x14] sm:$0xf]
        %v597 = vld [vmem:[%s4 + $0x18] sm:$0xff]
        %v598 = vld [vmem:[%s4 + $0x20] sm:$0xf]
        %v599 = vld [vmem:[%s4 + $0x24] sm:$0xff]
        %v600 = vld [vmem:[%s4 + $0x2c] sm:$0xf]
        %v601 = vld [vmem:[%s4 + $0x30] sm:$0xff]
        %v602 = vld [vmem:[%s4 + $0x38] sm:$0xf]
        %v603 = vld [vmem:[%s4 + $0x3c] sm:$0xff]
        %v604 = vld [vmem:[%s4 + $0x44] sm:$0xf]
        %v605 = vld [vmem:[%s4 + $0x48] sm:$0xff]
        %v606 = vld [vmem:[%s4 + $0x50] sm:$0xf]
        %v607 = vld [vmem:[%s4 + $0x54] sm:$0xff]
        %v608 = vld [vmem:[%s4 + $0x5c] sm:$0xf]
        %v609 = vld [vmem:[%s4 + $0x60] sm:$0xff]
        %v610 = vld [vmem:[%s4 + $0x68] sm:$0xf]
        %v611 = vld [vmem:[%s4 + $0x6c] sm:$0xff]
        %v612 = vld [vmem:[%s4 + $0x74] sm:$0xf]
        %v613 = vld [vmem:[%s4 + $0x78] sm:$0xff]
        %v614 = vld [vmem:[%s4 + $0x80] sm:$0xf]
        %v615 = vld [vmem:[%s4 + $0x84] sm:$0xff]
        %v616 = vld [vmem:[%s4 + $0x8c] sm:$0xf]
        %v617 = vld [vmem:[%s4 + $0x90] sm:$0xff]
        %v618 = vld [vmem:[%s4 + $0x98] sm:$0xf]
        %v619 = vld [vmem:[%s4 + $0x9c] sm:$0xff]
        %v620 = vld [vmem:[%s4 + $0xa4] sm:$0xf]
        %v621 = vld [vmem:[%s4 + $0xa8] sm:$0xff]
        %v622 = vld [vmem:[%s4 + $0xb0] sm:$0xf]
        %v623 = vld [vmem:[%s4 + $0xb4] sm:$0xff]
        %v624 = vld [vmem:[%s4 + $0xbc] sm:$0xf]
        %v625 = vld [vmem:[%s5] sm:$0x7]
        %v627 = vlaneseq
        %v628 = vshrl.u32 %v627, 7
        %v629 = vsub.s32 0, %v628
        %v630 = vrot.slane %v625, %v629
        %v631 = vlaneseq
        %v632 = vshrl.u32 %v631, 7
        %v633 = vsub.s32 1, %v632
        %v634 = vrot.slane %v625, %v633
        %v635 = vlaneseq
        %v636 = vshrl.u32 %v635, 7
        %v637 = vsub.s32 2, %v636
        %v638 = vrot.slane %v625, %v637
        %v674 = vunpack.c.l.b16 %v593
        %v675 = vunpack.c.h.b16 %v593
        %v676 = vunpack.c.l.b16 %v594
        %v677 = vunpack.c.l.b16 %v595
        %v678 = vunpack.c.h.b16 %v595
        %v679 = vunpack.c.l.b16 %v596
        %v680 = vunpack.c.l.b16 %v597
        %v681 = vunpack.c.h.b16 %v597
        %v682 = vunpack.c.l.b16 %v598
        %v683 = vunpack.c.l.b16 %v599
        %v684 = vunpack.c.h.b16 %v599
        %v685 = vunpack.c.l.b16 %v600
        %v686 = vunpack.c.l.b16 %v601
        %v687 = vunpack.c.h.b16 %v601
        %v688 = vunpack.c.l.b16 %v602
        %v689 = vunpack.c.l.b16 %v603
        %v690 = vunpack.c.h.b16 %v603
        %v691 = vunpack.c.l.b16 %v604
        %v692 = vunpack.c.l.b16 %v605
        %v693 = vunpack.c.h.b16 %v605
        %v694 = vunpack.c.l.b16 %v606
        %v695 = vunpack.c.l.b16 %v607
        %v696 = vunpack.c.h.b16 %v607
        %v697 = vunpack.c.l.b16 %v608
        %v698 = vunpack.c.l.b16 %v609
        %v699 = vunpack.c.h.b16 %v609
        %v700 = vunpack.c.l.b16 %v610
        %v701 = vunpack.c.l.b16 %v611
        %v702 = vunpack.c.h.b16 %v611
        %v703 = vunpack.c.l.b16 %v612
        %v704 = vunpack.c.l.b16 %v613
        %v705 = vunpack.c.h.b16 %v613
        %v706 = vunpack.c.l.b16 %v614
        %v707 = vunpack.c.l.b16 %v615
        %v708 = vunpack.c.h.b16 %v615
        %v709 = vunpack.c.l.b16 %v616
        %v710 = vunpack.c.l.b16 %v617
        %v711 = vunpack.c.h.b16 %v617
        %v712 = vunpack.c.l.b16 %v618
        %v713 = vunpack.c.l.b16 %v619
        %v714 = vunpack.c.h.b16 %v619
        %v715 = vunpack.c.l.b16 %v620
        %v716 = vunpack.c.l.b16 %v621
        %v717 = vunpack.c.h.b16 %v621
        %v718 = vunpack.c.l.b16 %v622
        %v719 = vunpack.c.l.b16 %v623
        %v720 = vunpack.c.h.b16 %v623
        %v721 = vunpack.c.l.b16 %v624
        %v722 = vpack.c.b16 %v677, %v674
        %v723 = vpack.c.b16 %v678, %v675
        %v724 = vpack.c.b16 %v679, %v676
        %v725 = vpack.c.b16 %v683, %v680
        %v726 = vpack.c.b16 %v684, %v681
        %v727 = vpack.c.b16 %v685, %v682
        %v728 = vpack.c.b16 %v689, %v686
        %v729 = vpack.c.b16 %v690, %v687
        %v730 = vpack.c.b16 %v691, %v688
        %v731 = vpack.c.b16 %v695, %v692
        %v732 = vpack.c.b16 %v696, %v693
        %v733 = vpack.c.b16 %v697, %v694
        %v734 = vpack.c.b16 %v701, %v698
        %v735 = vpack.c.b16 %v702, %v699
        %v736 = vpack.c.b16 %v703, %v700
        %v737 = vpack.c.b16 %v707, %v704
        %v738 = vpack.c.b16 %v708, %v705
        %v739 = vpack.c.b16 %v709, %v706
        %v740 = vpack.c.b16 %v713, %v710
        %v741 = vpack.c.b16 %v714, %v711
        %v742 = vpack.c.b16 %v715, %v712
        %v743 = vpack.c.b16 %v719, %v716
        %v744 = vpack.c.b16 %v720, %v717
        %v745 = vpack.c.b16 %v721, %v718
        %770 = vmatprep.subr.bf16.mxu0 %v723
        %771 = vmatpush1.bf16.msra.mxu0 %v722
        %772 = vmatprep.subr.bf16.mxu0 %v726
        %773 = vmatpush1.bf16.msra.mxu0 %v725
        %774 = vmatprep.subr.bf16.mxu0 %v729
        %775 = vmatpush1.bf16.msra.mxu0 %v728
        %776 = vmatprep.subr.bf16.mxu0 %v732
        %777 = vmatpush1.bf16.msra.mxu0 %v731
        %778 = vmatprep.subr.bf16.mxu0 %v735
        %779 = vmatpush1.bf16.msra.mxu0 %v734
        %780 = vmatprep.subr.bf16.mxu0 %v738
        %781 = vmatpush1.bf16.msra.mxu0 %v737
        %782 = vmatprep.subr.bf16.mxu0 %v741
        %783 = vmatpush1.bf16.msra.mxu0 %v740
        %784 = vmatprep.subr.bf16.mxu0 %v744
        %785 = vmatpush1.bf16.msra.mxu0 %v743
        %786 = vmatprep.subr.bf16.mxu0 0
        %787 = vmatpush1.bf16.msra.mxu0 0
        %788 = vmatprep.subr.bf16.mxu0 0
        %789 = vmatpush1.bf16.msra.mxu0 0
        %790 = vmatprep.subr.bf16.mxu0 0
        %791 = vmatpush1.bf16.msra.mxu0 0
        %792 = vmatprep.subr.bf16.mxu0 0
        %793 = vmatpush1.bf16.msra.mxu0 0
        %794 = vmatprep.subr.bf16.mxu0 0
        %795 = vmatpush1.bf16.msra.mxu0 0
        %796 = vmatprep.subr.bf16.mxu0 0
        %797 = vmatpush1.bf16.msra.mxu0 0
        %798 = vmatprep.subr.bf16.mxu0 0
        %799 = vmatpush1.bf16.msra.mxu0 0
        %800 = vmatprep.subr.bf16.mxu0 0
        %801 = vmatpush1.bf16.msra.mxu0 0
        %802 = vmatprep.mubr.bf16.mxu0 0
        %803 = vmatmul.mubr.bf16.gmra.mrb[0].mxu0 %v592
        %v804 = vpop.f32.mrb[0].mxu0
        %v805 = vadd.f32 %v630, %v804
        %v806 = vpop.f32.mrb[0].mxu0
        %v807 = vadd.f32 %v634, %v806
        %v808 = vpop.f32.mrb[0].mxu0
        %v809 = vpop.f32.mrb[0].mxu0
        %810 = vdwg.mxu0
        %811 = vmatprep.subr.bf16.mxu0 0
        %812 = vmatpush1.bf16.msra.mxu0 %v724
        %813 = vmatprep.subr.bf16.mxu0 0
        %814 = vmatpush1.bf16.msra.mxu0 %v727
        %815 = vmatprep.subr.bf16.mxu0 0
        %816 = vmatpush1.bf16.msra.mxu0 %v730
        %817 = vmatprep.subr.bf16.mxu0 0
        %818 = vmatpush1.bf16.msra.mxu0 %v733
        %819 = vmatprep.subr.bf16.mxu0 0
        %820 = vmatpush1.bf16.msra.mxu0 %v736
        %821 = vmatprep.subr.bf16.mxu0 0
        %822 = vmatpush1.bf16.msra.mxu0 %v739
        %823 = vmatprep.subr.bf16.mxu0 0
        %824 = vmatpush1.bf16.msra.mxu0 %v742
        %825 = vmatprep.subr.bf16.mxu0 0
        %826 = vmatpush1.bf16.msra.mxu0 %v745
        %827 = vmatprep.subr.bf16.mxu0 0
        %828 = vmatpush1.bf16.msra.mxu0 0
        %829 = vmatprep.subr.bf16.mxu0 0
        %830 = vmatpush1.bf16.msra.mxu0 0
        %831 = vmatprep.subr.bf16.mxu0 0
        %832 = vmatpush1.bf16.msra.mxu0 0
        %833 = vmatprep.subr.bf16.mxu0 0
        %834 = vmatpush1.bf16.msra.mxu0 0
        %835 = vmatprep.subr.bf16.mxu0 0
        %836 = vmatpush1.bf16.msra.mxu0 0
        %837 = vmatprep.subr.bf16.mxu0 0
        %838 = vmatpush1.bf16.msra.mxu0 0
        %839 = vmatprep.subr.bf16.mxu0 0
        %840 = vmatpush1.bf16.msra.mxu0 0
        %841 = vmatprep.subr.bf16.mxu0 0
        %842 = vmatpush1.bf16.msra.mxu0 0
        %843 = vmatprep.mubr.bf16.mxu0 0
        %844 = vmatmul.mubr.bf16.gmra.mrb[0].mxu0 %v592
        %v845 = vpop.f32.mrb[0].mxu0
        %v846 = vadd.f32 %v638, %v845
        %v847 = vpop.f32.mrb[0].mxu0
        %v848 = vpop.f32.mrb[0].mxu0
        %v849 = vpop.f32.mrb[0].mxu0
        %850 = vdwg.mxu0
        %v851 = vpack.c.bf16 %v805, %v805
        %v852 = vpack.c.bf16 %v807, %v807
        %v853 = vpack.c.bf16 %v846, %v846
        %vm854 = vcmask 261120
        %v856 = vsel %vm854, %v851, 0
        %v859 = vsel %vm854, %v852, 0
        %861 = vmatprep.subr.bf16.mxu0 0
        %862 = vmatpush1.bf16.xpose.msra.mxu0 %v859
        %863 = vmatprep.subr.bf16.mxu0 0
        %864 = vmatpush1.bf16.xpose.msra.mxu0 0
        %865 = vmatprep.subr.bf16.mxu0 0
        %866 = vmatpush1.bf16.xpose.msra.mxu0 0
        %867 = vmatprep.subr.bf16.mxu0 0
        %868 = vmatpush1.bf16.xpose.msra.mxu0 0
        %869 = vmatprep.subr.bf16.mxu0 0
        %870 = vmatpush1.bf16.xpose.msra.mxu0 0
        %871 = vmatprep.subr.bf16.mxu0 0
        %872 = vmatpush1.bf16.xpose.msra.mxu0 0
        %873 = vmatprep.subr.bf16.mxu0 0
        %874 = vmatpush1.bf16.xpose.msra.mxu0 0
        %875 = vmatprep.subr.bf16.mxu0 0
        %876 = vmatpush1.bf16.xpose.msra.mxu0 0
        %877 = vmatprep.subr.bf16.mxu0 0
        %878 = vmatpush1.bf16.xpose.msra.mxu0 0
        %879 = vmatprep.subr.bf16.mxu0 0
        %880 = vmatpush1.bf16.xpose.msra.mxu0 0
        %881 = vmatprep.subr.bf16.mxu0 0
        %882 = vmatpush1.bf16.xpose.msra.mxu0 0
        %883 = vmatprep.subr.bf16.mxu0 0
        %884 = vmatpush1.bf16.xpose.msra.mxu0 0
        %885 = vmatprep.subr.bf16.mxu0 0
        %886 = vmatpush1.bf16.xpose.msra.mxu0 0
        %887 = vmatprep.subr.bf16.mxu0 0
        %888 = vmatpush1.bf16.xpose.msra.mxu0 0
        %889 = vmatprep.subr.bf16.mxu0 0
        %890 = vmatpush1.bf16.xpose.msra.mxu0 0
        %891 = vmatprep.subr.bf16.mxu0 0
        %892 = vmatpush1.bf16.xpose.msra.mxu0 0
        %893 = vmatprep.mubr.bf16.mxu0 0
        %894 = vmatmul.mubr.bf16.gmra.mrb[0].mxu0 %v856
        %v895 = vpop.f32.mrb[0].mxu0
        %v896 = vadd.f32 0.0, %v895
        %v897 = vpop.f32.mrb[0].mxu0
        %v898 = vpop.f32.mrb[0].mxu0
        %v899 = vpop.f32.mrb[0].mxu0
        %900 = vdwg.mxu0
        %v901 = vmul.f32 %v896, 0.17677669
        %v902 = vsel %vm562, %v901, -1e+09
        %vm903 = vcmask 64512
        %v904 = vsel %vm903, %v902, -inf
        %905 = vmax.xlane.f32.xlu0 %v904
        %v906 = vpop.xlane.xlu0 %905
        %v907 = vsub.f32 %v902, %v906
        %v908 = vmul.f32 %v907, 1.442695
        %v909 = vpow.pop %v908
        %v910 = vsel %vm903, %v909, 0.0
        %911 = vadd.xlane.f32.xlu0 %v910
        %v912 = vpop.xlane.xlu0 %911
        %v913 = vrcp.pop %v912
        %v914 = vmul.f32 %v909, %v913
        %v915 = vpack.c.bf16 %v914, %v914
        %v917 = vsel %vm903, %v915, 0
        %vm919 = vcmask 1043456
        %v921 = vsel %vm919, %v853, 0
        %923 = vmatprep.subr.bf16.mxu0 0
        %924 = vmatpush1.bf16.msra.mxu0 %v921
        %925 = vmatprep.subr.bf16.mxu0 0
        %926 = vmatpush1.bf16.msra.mxu0 0
        %927 = vmatprep.subr.bf16.mxu0 0
        %928 = vmatpush1.bf16.msra.mxu0 0
        %929 = vmatprep.subr.bf16.mxu0 0
        %930 = vmatpush1.bf16.msra.mxu0 0
        %931 = vmatprep.subr.bf16.mxu0 0
        %932 = vmatpush1.bf16.msra.mxu0 0
        %933 = vmatprep.subr.bf16.mxu0 0
        %934 = vmatpush1.bf16.msra.mxu0 0
        %935 = vmatprep.subr.bf16.mxu0 0
        %936 = vmatpush1.bf16.msra.mxu0 0
        %937 = vmatprep.subr.bf16.mxu0 0
        %938 = vmatpush1.bf16.msra.mxu0 0
        %939 = vmatprep.subr.bf16.mxu0 0
        %940 = vmatpush1.bf16.msra.mxu0 0
        %941 = vmatprep.subr.bf16.mxu0 0
        %942 = vmatpush1.bf16.msra.mxu0 0
        %943 = vmatprep.subr.bf16.mxu0 0
        %944 = vmatpush1.bf16.msra.mxu0 0
        %945 = vmatprep.subr.bf16.mxu0 0
        %946 = vmatpush1.bf16.msra.mxu0 0
        %947 = vmatprep.subr.bf16.mxu0 0
        %948 = vmatpush1.bf16.msra.mxu0 0
        %949 = vmatprep.subr.bf16.mxu0 0
        %950 = vmatpush1.bf16.msra.mxu0 0
        %951 = vmatprep.subr.bf16.mxu0 0
        %952 = vmatpush1.bf16.msra.mxu0 0
        %953 = vmatprep.subr.bf16.mxu0 0
        %954 = vmatpush1.bf16.msra.mxu0 0
        %955 = vmatprep.mubr.bf16.mxu0 0
        %956 = vmatmul.mubr.bf16.gmra.mrb[0].mxu0 %v917
        %v957 = vpop.f32.mrb[0].mxu0
        %v958 = vadd.f32 0.0, %v957
        %v959 = vpop.f32.mrb[0].mxu0
        %v960 = vpop.f32.mrb[0].mxu0
        %v961 = vpop.f32.mrb[0].mxu0
        %962 = vdwg.mxu0
        %964 = vrot.lane.b32.xlu0 %v851, 96
        %v965 = vpop.permute.xlu0 %964
        %967 = vrot.lane.b32.xlu0 %v852, 96
        %v968 = vpop.permute.xlu0 %967
        %v970 = vsel %vm854, %v965, 0
        %v973 = vsel %vm854, %v968, 0
        %975 = vmatprep.subr.bf16.mxu0 0
        %976 = vmatpush1.bf16.xpose.msra.mxu0 %v973
        %977 = vmatprep.subr.bf16.mxu0 0
        %978 = vmatpush1.bf16.xpose.msra.mxu0 0
        %979 = vmatprep.subr.bf16.mxu0 0
        %980 = vmatpush1.bf16.xpose.msra.mxu0 0
        %981 = vmatprep.subr.bf16.mxu0 0
        %982 = vmatpush1.bf16.xpose.msra.mxu0 0
        %983 = vmatprep.subr.bf16.mxu0 0
        %984 = vmatpush1.bf16.xpose.msra.mxu0 0
        %985 = vmatprep.subr.bf16.mxu0 0
        %986 = vmatpush1.bf16.xpose.msra.mxu0 0
        %987 = vmatprep.subr.bf16.mxu0 0
        %988 = vmatpush1.bf16.xpose.msra.mxu0 0
        %989 = vmatprep.subr.bf16.mxu0 0
        %990 = vmatpush1.bf16.xpose.msra.mxu0 0
        %991 = vmatprep.subr.bf16.mxu0 0
        %992 = vmatpush1.bf16.xpose.msra.mxu0 0
        %993 = vmatprep.subr.bf16.mxu0 0
        %994 = vmatpush1.bf16.xpose.msra.mxu0 0
        %995 = vmatprep.subr.bf16.mxu0 0
        %996 = vmatpush1.bf16.xpose.msra.mxu0 0
        %997 = vmatprep.subr.bf16.mxu0 0
        %998 = vmatpush1.bf16.xpose.msra.mxu0 0
        %999 = vmatprep.subr.bf16.mxu0 0
        %1000 = vmatpush1.bf16.xpose.msra.mxu0 0
        %1001 = vmatprep.subr.bf16.mxu0 0
        %1002 = vmatpush1.bf16.xpose.msra.mxu0 0
        %1003 = vmatprep.subr.bf16.mxu0 0
        %1004 = vmatpush1.bf16.xpose.msra.mxu0 0
        %1005 = vmatprep.subr.bf16.mxu0 0
        %1006 = vmatpush1.bf16.xpose.msra.mxu0 0
        %1007 = vmatprep.mubr.bf16.mxu0 0
        %1008 = vmatmul.mubr.bf16.gmra.mrb[0].mxu0 %v970
        %v1009 = vpop.f32.mrb[0].mxu0
        %v1010 = vadd.f32 0.0, %v1009
        %v1011 = vpop.f32.mrb[0].mxu0
        %v1012 = vpop.f32.mrb[0].mxu0
        %v1013 = vpop.f32.mrb[0].mxu0
        %1014 = vdwg.mxu0
        %v1015 = vmul.f32 %v1010, 0.17677669
        %v1016 = vsel %vm562, %v1015, -1e+09
        %v1017 = vsel %vm903, %v1016, -inf
        %1018 = vmax.xlane.f32.xlu0 %v1017
        %v1019 = vpop.xlane.xlu0 %1018
        %v1020 = vsub.f32 %v1016, %v1019
        %v1021 = vmul.f32 %v1020, 1.442695
        %v1022 = vpow.pop %v1021
        %v1023 = vsel %vm903, %v1022, 0.0
        %1024 = vadd.xlane.f32.xlu0 %v1023
        %v1025 = vpop.xlane.xlu0 %1024
        %v1026 = vrcp.pop %v1025
        %v1027 = vmul.f32 %v1022, %v1026
        %v1028 = vpack.c.bf16 %v1027, %v1027
        %1030 = vrot.lane.b32.xlu0 %v853, 96
        %v1031 = vpop.permute.xlu0 %1030
        %v1033 = vsel %vm903, %v1028, 0
        %v1036 = vsel %vm919, %v1031, 0
        %1038 = vmatprep.subr.bf16.mxu0 0
        %1039 = vmatpush1.bf16.msra.mxu0 %v1036
        %1040 = vmatprep.subr.bf16.mxu0 0
        %1041 = vmatpush1.bf16.msra.mxu0 0
        %1042 = vmatprep.subr.bf16.mxu0 0
        %1043 = vmatpush1.bf16.msra.mxu0 0
        %1044 = vmatprep.subr.bf16.mxu0 0
        %1045 = vmatpush1.bf16.msra.mxu0 0
        %1046 = vmatprep.subr.bf16.mxu0 0
        %1047 = vmatpush1.bf16.msra.mxu0 0
        %1048 = vmatprep.subr.bf16.mxu0 0
        %1049 = vmatpush1.bf16.msra.mxu0 0
        %1050 = vmatprep.subr.bf16.mxu0 0
        %1051 = vmatpush1.bf16.msra.mxu0 0
        %1052 = vmatprep.subr.bf16.mxu0 0
        %1053 = vmatpush1.bf16.msra.mxu0 0
        %1054 = vmatprep.subr.bf16.mxu0 0
        %1055 = vmatpush1.bf16.msra.mxu0 0
        %1056 = vmatprep.subr.bf16.mxu0 0
        %1057 = vmatpush1.bf16.msra.mxu0 0
        %1058 = vmatprep.subr.bf16.mxu0 0
        %1059 = vmatpush1.bf16.msra.mxu0 0
        %1060 = vmatprep.subr.bf16.mxu0 0
        %1061 = vmatpush1.bf16.msra.mxu0 0
        %1062 = vmatprep.subr.bf16.mxu0 0
        %1063 = vmatpush1.bf16.msra.mxu0 0
        %1064 = vmatprep.subr.bf16.mxu0 0
        %1065 = vmatpush1.bf16.msra.mxu0 0
        %1066 = vmatprep.subr.bf16.mxu0 0
        %1067 = vmatpush1.bf16.msra.mxu0 0
        %1068 = vmatprep.subr.bf16.mxu0 0
        %1069 = vmatpush1.bf16.msra.mxu0 0
        %1070 = vmatprep.mubr.bf16.mxu0 0
        %1071 = vmatmul.mubr.bf16.gmra.mrb[0].mxu0 %v1033
        %v1072 = vpop.f32.mrb[0].mxu0
        %v1073 = vadd.f32 0.0, %v1072
        %v1074 = vpop.f32.mrb[0].mxu0
        %v1075 = vpop.f32.mrb[0].mxu0
        %v1076 = vpop.f32.mrb[0].mxu0
        %1077 = vdwg.mxu0
        %1078 = vrot.lane.b32.xlu0 %v851, 64
        %v1079 = vpop.permute.xlu0 %1078
        %1080 = vrot.lane.b32.xlu0 %v852, 64
        %v1081 = vpop.permute.xlu0 %1080
        %v1083 = vsel %vm854, %v1079, 0
        %v1086 = vsel %vm854, %v1081, 0
        %1088 = vmatprep.subr.bf16.mxu0 0
        %1089 = vmatpush1.bf16.xpose.msra.mxu0 %v1086
        %1090 = vmatprep.subr.bf16.mxu0 0
        %1091 = vmatpush1.bf16.xpose.msra.mxu0 0
        %1092 = vmatprep.subr.bf16.mxu0 0
        %1093 = vmatpush1.bf16.xpose.msra.mxu0 0
        %1094 = vmatprep.subr.bf16.mxu0 0
        %1095 = vmatpush1.bf16.xpose.msra.mxu0 0
        %1096 = vmatprep.subr.bf16.mxu0 0
        %1097 = vmatpush1.bf16.xpose.msra.mxu0 0
        %1098 = vmatprep.subr.bf16.mxu0 0
        %1099 = vmatpush1.bf16.xpose.msra.mxu0 0
        %1100 = vmatprep.subr.bf16.mxu0 0
        %1101 = vmatpush1.bf16.xpose.msra.mxu0 0
        %1102 = vmatprep.subr.bf16.mxu0 0
        %1103 = vmatpush1.bf16.xpose.msra.mxu0 0
        %1104 = vmatprep.subr.bf16.mxu0 0
        %1105 = vmatpush1.bf16.xpose.msra.mxu0 0
        %1106 = vmatprep.subr.bf16.mxu0 0
        %1107 = vmatpush1.bf16.xpose.msra.mxu0 0
        %1108 = vmatprep.subr.bf16.mxu0 0
        %1109 = vmatpush1.bf16.xpose.msra.mxu0 0
        %1110 = vmatprep.subr.bf16.mxu0 0
        %1111 = vmatpush1.bf16.xpose.msra.mxu0 0
        %1112 = vmatprep.subr.bf16.mxu0 0
        %1113 = vmatpush1.bf16.xpose.msra.mxu0 0
        %1114 = vmatprep.subr.bf16.mxu0 0
        %1115 = vmatpush1.bf16.xpose.msra.mxu0 0
        %1116 = vmatprep.subr.bf16.mxu0 0
        %1117 = vmatpush1.bf16.xpose.msra.mxu0 0
        %1118 = vmatprep.subr.bf16.mxu0 0
        %1119 = vmatpush1.bf16.xpose.msra.mxu0 0
        %1120 = vmatprep.mubr.bf16.mxu0 0
        %1121 = vmatmul.mubr.bf16.gmra.mrb[0].mxu0 %v1083
        %v1122 = vpop.f32.mrb[0].mxu0
        %v1123 = vadd.f32 0.0, %v1122
        %v1124 = vpop.f32.mrb[0].mxu0
        %v1125 = vpop.f32.mrb[0].mxu0
        %v1126 = vpop.f32.mrb[0].mxu0
        %1127 = vdwg.mxu0
        %v1128 = vmul.f32 %v1123, 0.17677669
        %v1129 = vsel %vm562, %v1128, -1e+09
        %v1130 = vsel %vm903, %v1129, -inf
        %1131 = vmax.xlane.f32.xlu0 %v1130
        %v1132 = vpop.xlane.xlu0 %1131
        %v1133 = vsub.f32 %v1129, %v1132
        %v1134 = vmul.f32 %v1133, 1.442695
        %v1135 = vpow.pop %v1134
        %v1136 = vsel %vm903, %v1135, 0.0
        %1137 = vadd.xlane.f32.xlu0 %v1136
        %v1138 = vpop.xlane.xlu0 %1137
        %v1139 = vrcp.pop %v1138
        %v1140 = vmul.f32 %v1135, %v1139
        %v1141 = vpack.c.bf16 %v1140, %v1140
        %1142 = vrot.lane.b32.xlu0 %v853, 64
        %v1143 = vpop.permute.xlu0 %1142
        %v1145 = vsel %vm903, %v1141, 0
        %v1148 = vsel %vm919, %v1143, 0
        %1150 = vmatprep.subr.bf16.mxu0 0
        %1151 = vmatpush1.bf16.msra.mxu0 %v1148
        %1152 = vmatprep.subr.bf16.mxu0 0
        %1153 = vmatpush1.bf16.msra.mxu0 0
        %1154 = vmatprep.subr.bf16.mxu0 0
        %1155 = vmatpush1.bf16.msra.mxu0 0
        %1156 = vmatprep.subr.bf16.mxu0 0
        %1157 = vmatpush1.bf16.msra.mxu0 0
        %1158 = vmatprep.subr.bf16.mxu0 0
        %1159 = vmatpush1.bf16.msra.mxu0 0
        %1160 = vmatprep.subr.bf16.mxu0 0
        %1161 = vmatpush1.bf16.msra.mxu0 0
        %1162 = vmatprep.subr.bf16.mxu0 0
        %1163 = vmatpush1.bf16.msra.mxu0 0
        %1164 = vmatprep.subr.bf16.mxu0 0
        %1165 = vmatpush1.bf16.msra.mxu0 0
        %1166 = vmatprep.subr.bf16.mxu0 0
        %1167 = vmatpush1.bf16.msra.mxu0 0
        %1168 = vmatprep.subr.bf16.mxu0 0
        %1169 = vmatpush1.bf16.msra.mxu0 0
        %1170 = vmatprep.subr.bf16.mxu0 0
        %1171 = vmatpush1.bf16.msra.mxu0 0
        %1172 = vmatprep.subr.bf16.mxu0 0
        %1173 = vmatpush1.bf16.msra.mxu0 0
        %1174 = vmatprep.subr.bf16.mxu0 0
        %1175 = vmatpush1.bf16.msra.mxu0 0
        %1176 = vmatprep.subr.bf16.mxu0 0
        %1177 = vmatpush1.bf16.msra.mxu0 0
        %1178 = vmatprep.subr.bf16.mxu0 0
        %1179 = vmatpush1.bf16.msra.mxu0 0
        %1180 = vmatprep.subr.bf16.mxu0 0
        %1181 = vmatpush1.bf16.msra.mxu0 0
        %1182 = vmatprep.mubr.bf16.mxu0 0
        %1183 = vmatmul.mubr.bf16.gmra.mrb[0].mxu0 %v1145
        %v1184 = vpop.f32.mrb[0].mxu0
        %v1185 = vadd.f32 0.0, %v1184
        %v1186 = vpop.f32.mrb[0].mxu0
        %v1187 = vpop.f32.mrb[0].mxu0
        %v1188 = vpop.f32.mrb[0].mxu0
        %1189 = vdwg.mxu0
        %1190 = vrot.lane.b32.xlu0 %v851, 32
        %v1191 = vpop.permute.xlu0 %1190
        %1192 = vrot.lane.b32.xlu0 %v852, 32
        %v1193 = vpop.permute.xlu0 %1192
        %v1195 = vsel %vm854, %v1191, 0
        %v1198 = vsel %vm854, %v1193, 0
        %1200 = vmatprep.subr.bf16.mxu0 0
        %1201 = vmatpush1.bf16.xpose.msra.mxu0 %v1198
        %1202 = vmatprep.subr.bf16.mxu0 0
        %1203 = vmatpush1.bf16.xpose.msra.mxu0 0
        %1204 = vmatprep.subr.bf16.mxu0 0
        %1205 = vmatpush1.bf16.xpose.msra.mxu0 0
        %1206 = vmatprep.subr.bf16.mxu0 0
        %1207 = vmatpush1.bf16.xpose.msra.mxu0 0
        %1208 = vmatprep.subr.bf16.mxu0 0
        %1209 = vmatpush1.bf16.xpose.msra.mxu0 0
        %1210 = vmatprep.subr.bf16.mxu0 0
        %1211 = vmatpush1.bf16.xpose.msra.mxu0 0
        %1212 = vmatprep.subr.bf16.mxu0 0
        %1213 = vmatpush1.bf16.xpose.msra.mxu0 0
        %1214 = vmatprep.subr.bf16.mxu0 0
        %1215 = vmatpush1.bf16.xpose.msra.mxu0 0
        %1216 = vmatprep.subr.bf16.mxu0 0
        %1217 = vmatpush1.bf16.xpose.msra.mxu0 0
        %1218 = vmatprep.subr.bf16.mxu0 0
        %1219 = vmatpush1.bf16.xpose.msra.mxu0 0
        %1220 = vmatprep.subr.bf16.mxu0 0
        %1221 = vmatpush1.bf16.xpose.msra.mxu0 0
        %1222 = vmatprep.subr.bf16.mxu0 0
        %1223 = vmatpush1.bf16.xpose.msra.mxu0 0
        %1224 = vmatprep.subr.bf16.mxu0 0
        %1225 = vmatpush1.bf16.xpose.msra.mxu0 0
        %1226 = vmatprep.subr.bf16.mxu0 0
        %1227 = vmatpush1.bf16.xpose.msra.mxu0 0
        %1228 = vmatprep.subr.bf16.mxu0 0
        %1229 = vmatpush1.bf16.xpose.msra.mxu0 0
        %1230 = vmatprep.subr.bf16.mxu0 0
        %1231 = vmatpush1.bf16.xpose.msra.mxu0 0
        %1232 = vmatprep.mubr.bf16.mxu0 0
        %1233 = vmatmul.mubr.bf16.gmra.mrb[0].mxu0 %v1195
        %v1234 = vpop.f32.mrb[0].mxu0
        %v1235 = vadd.f32 0.0, %v1234
        %v1236 = vpop.f32.mrb[0].mxu0
        %v1237 = vpop.f32.mrb[0].mxu0
        %v1238 = vpop.f32.mrb[0].mxu0
        %1239 = vdwg.mxu0
        %v1240 = vmul.f32 %v1235, 0.17677669
        %v1241 = vsel %vm562, %v1240, -1e+09
        %v1242 = vsel %vm903, %v1241, -inf
        %1243 = vmax.xlane.f32.xlu0 %v1242
        %v1244 = vpop.xlane.xlu0 %1243
        %v1245 = vsub.f32 %v1241, %v1244
        %v1246 = vmul.f32 %v1245, 1.442695
        %v1247 = vpow.pop %v1246
        %v1248 = vsel %vm903, %v1247, 0.0
        %1249 = vadd.xlane.f32.xlu0 %v1248
        %v1250 = vpop.xlane.xlu0 %1249
        %v1251 = vrcp.pop %v1250
        %v1252 = vmul.f32 %v1247, %v1251
        %v1253 = vpack.c.bf16 %v1252, %v1252
        %1254 = vrot.lane.b32.xlu0 %v853, 32
        %v1255 = vpop.permute.xlu0 %1254
        %v1257 = vsel %vm903, %v1253, 0
        %v1260 = vsel %vm919, %v1255, 0
        %1262 = vmatprep.subr.bf16.mxu0 0
        %1263 = vmatpush1.bf16.msra.mxu0 %v1260
        %1264 = vmatprep.subr.bf16.mxu0 0
        %1265 = vmatpush1.bf16.msra.mxu0 0
        %1266 = vmatprep.subr.bf16.mxu0 0
        %1267 = vmatpush1.bf16.msra.mxu0 0
        %1268 = vmatprep.subr.bf16.mxu0 0
        %1269 = vmatpush1.bf16.msra.mxu0 0
        %1270 = vmatprep.subr.bf16.mxu0 0
        %1271 = vmatpush1.bf16.msra.mxu0 0
        %1272 = vmatprep.subr.bf16.mxu0 0
        %1273 = vmatpush1.bf16.msra.mxu0 0
        %1274 = vmatprep.subr.bf16.mxu0 0
        %1275 = vmatpush1.bf16.msra.mxu0 0
        %1276 = vmatprep.subr.bf16.mxu0 0
        %1277 = vmatpush1.bf16.msra.mxu0 0
        %1278 = vmatprep.subr.bf16.mxu0 0
        %1279 = vmatpush1.bf16.msra.mxu0 0
        %1280 = vmatprep.subr.bf16.mxu0 0
        %1281 = vmatpush1.bf16.msra.mxu0 0
        %1282 = vmatprep.subr.bf16.mxu0 0
        %1283 = vmatpush1.bf16.msra.mxu0 0
        %1284 = vmatprep.subr.bf16.mxu0 0
        %1285 = vmatpush1.bf16.msra.mxu0 0
        %1286 = vmatprep.subr.bf16.mxu0 0
        %1287 = vmatpush1.bf16.msra.mxu0 0
        %1288 = vmatprep.subr.bf16.mxu0 0
        %1289 = vmatpush1.bf16.msra.mxu0 0
        %1290 = vmatprep.subr.bf16.mxu0 0
        %1291 = vmatpush1.bf16.msra.mxu0 0
        %1292 = vmatprep.subr.bf16.mxu0 0
        %1293 = vmatpush1.bf16.msra.mxu0 0
        %1294 = vmatprep.mubr.bf16.mxu0 0
        %1295 = vmatmul.mubr.bf16.gmra.mrb[0].mxu0 %v1257
        %v1296 = vpop.f32.mrb[0].mxu0
        %v1297 = vadd.f32 0.0, %v1296
        %v1298 = vpop.f32.mrb[0].mxu0
        %v1299 = vpop.f32.mrb[0].mxu0
        %v1300 = vpop.f32.mrb[0].mxu0
        %1301 = vdwg.mxu0
        %1303 = vrot.lane.b32.xlu0 %v1073, 32
        %v1304 = vpop.permute.xlu0 %1303
        %1307 = vrot.lane.b32.xlu0 %v1185, 64
        %v1308 = vpop.permute.xlu0 %1307
        %1311 = vrot.lane.b32.xlu0 %v1297, 96
        %v1312 = vpop.permute.xlu0 %1311
        %v1314 = vsel %vm854, %v958, %v1304
        %vm1315 = vcmask 523264
        %v1316 = vsel %vm1315, %v1314, %v1308
        %vm1317 = vcmask 785408
        %v1318 = vsel %vm1317, %v1316, %v1312
        %v1319 = vpack.c.bf16 %v1318, %v1318
        %v1320 = vld [vmem:[%s6] sm:$0xf]
        %v1321 = vld [vmem:[%s6 + $0x4] sm:$0xf]
        %v1322 = vld [vmem:[%s6 + $0x8] sm:$0xf]
        %v1323 = vld [vmem:[%s6 + $0xc] sm:$0xf]
        %v1324 = vld [vmem:[%s6 + $0x10] sm:$0xf]
        %v1325 = vld [vmem:[%s6 + $0x14] sm:$0xf]
        %v1326 = vld [vmem:[%s6 + $0x18] sm:$0xf]
        %v1327 = vld [vmem:[%s6 + $0x1c] sm:$0xf]
        %v1328 = vld [vmem:[%s6 + $0x20] sm:$0xf]
        %v1329 = vld [vmem:[%s6 + $0x24] sm:$0xf]
        %v1330 = vld [vmem:[%s6 + $0x28] sm:$0xf]
        %v1331 = vld [vmem:[%s6 + $0x2c] sm:$0xf]
        %v1332 = vld [vmem:[%s6 + $0x30] sm:$0xf]
        %v1333 = vld [vmem:[%s6 + $0x34] sm:$0xf]
        %v1334 = vld [vmem:[%s6 + $0x38] sm:$0xf]
        %v1335 = vld [vmem:[%s6 + $0x3c] sm:$0xf]
        %v1336 = vld [vmem:[%s7] sm:$0x1]
        %v1338 = vlaneseq
        %v1339 = vshrl.u32 %v1338, 7
        %v1340 = vsub.s32 0, %v1339
        %v1341 = vrot.slane %v1336, %v1340
        %v1359 = vunpack.c.l.b16 %v1320
        %v1360 = vunpack.c.l.b16 %v1321
        %v1361 = vunpack.c.l.b16 %v1322
        %v1362 = vunpack.c.l.b16 %v1323
        %v1363 = vunpack.c.l.b16 %v1324
        %v1364 = vunpack.c.l.b16 %v1325
        %v1365 = vunpack.c.l.b16 %v1326
        %v1366 = vunpack.c.l.b16 %v1327
        %v1367 = vunpack.c.l.b16 %v1328
        %v1368 = vunpack.c.l.b16 %v1329
        %v1369 = vunpack.c.l.b16 %v1330
        %v1370 = vunpack.c.l.b16 %v1331
        %v1371 = vunpack.c.l.b16 %v1332
        %v1372 = vunpack.c.l.b16 %v1333
        %v1373 = vunpack.c.l.b16 %v1334
        %v1374 = vunpack.c.l.b16 %v1335
        %v1375 = vpack.c.b16 %v1360, %v1359
        %v1376 = vpack.c.b16 %v1362, %v1361
        %v1377 = vpack.c.b16 %v1364, %v1363
        %v1378 = vpack.c.b16 %v1366, %v1365
        %v1379 = vpack.c.b16 %v1368, %v1367
        %v1380 = vpack.c.b16 %v1370, %v1369
        %v1381 = vpack.c.b16 %v1372, %v1371
        %v1382 = vpack.c.b16 %v1374, %v1373
        %1391 = vmatprep.subr.bf16.mxu0 0
        %1392 = vmatpush1.bf16.msra.mxu0 %v1375
        %1393 = vmatprep.subr.bf16.mxu0 0
        %1394 = vmatpush1.bf16.msra.mxu0 %v1376
        %1395 = vmatprep.subr.bf16.mxu0 0
        %1396 = vmatpush1.bf16.msra.mxu0 %v1377
        %1397 = vmatprep.subr.bf16.mxu0 0
        %1398 = vmatpush1.bf16.msra.mxu0 %v1378
        %1399 = vmatprep.subr.bf16.mxu0 0
        %1400 = vmatpush1.bf16.msra.mxu0 %v1379
        %1401 = vmatprep.subr.bf16.mxu0 0
        %1402 = vmatpush1.bf16.msra.mxu0 %v1380
        %1403 = vmatprep.subr.bf16.mxu0 0
        %1404 = vmatpush1.bf16.msra.mxu0 %v1381
        %1405 = vmatprep.subr.bf16.mxu0 0
        %1406 = vmatpush1.bf16.msra.mxu0 %v1382
        %1407 = vmatprep.subr.bf16.mxu0 0
        %1408 = vmatpush1.bf16.msra.mxu0 0
        %1409 = vmatprep.subr.bf16.mxu0 0
        %1410 = vmatpush1.bf16.msra.mxu0 0
        %1411 = vmatprep.subr.bf16.mxu0 0
        %1412 = vmatpush1.bf16.msra.mxu0 0
        %1413 = vmatprep.subr.bf16.mxu0 0
        %1414 = vmatpush1.bf16.msra.mxu0 0
        %1415 = vmatprep.subr.bf16.mxu0 0
        %1416 = vmatpush1.bf16.msra.mxu0 0
        %1417 = vmatprep.subr.bf16.mxu0 0
        %1418 = vmatpush1.bf16.msra.mxu0 0
        %1419 = vmatprep.subr.bf16.mxu0 0
        %1420 = vmatpush1.bf16.msra.mxu0 0
        %1421 = vmatprep.subr.bf16.mxu0 0
        %1422 = vmatpush1.bf16.msra.mxu0 0
        %1423 = vmatprep.mubr.bf16.mxu0 0
        %1424 = vmatmul.mubr.bf16.gmra.mrb[0].mxu0 %v1319
        %v1425 = vpop.f32.mrb[0].mxu0
        %v1426 = vadd.f32 %v1341, %v1425
        %v1427 = vpop.f32.mrb[0].mxu0
        %v1428 = vpop.f32.mrb[0].mxu0
        %v1429 = vpop.f32.mrb[0].mxu0
        %1430 = vdwg.mxu0
        %v1431 = vadd.f32 %v1426, %v563
        %v1432 = vld [vmem:[%s8] sm:$0x1]
        %v1433 = vld [vmem:[%s9] sm:$0x1]
        %1434 = vadd.xlane.f32.xlu0 %v1431
        %v1435 = vpop.xlane.xlu0 %1434
        %v1436 = vmul.f32 %v1435, %v568
        %v1437 = vsub.f32 %v1431, %v1436
        %v1438 = vmul.f32 %v1437, %v1437
        %1439 = vadd.xlane.f32.xlu0 %v1438
        %v1440 = vpop.xlane.xlu0 %1439
        %v1441 = vmul.f32 %v1440, %v568
        %v1442 = vadd.f32 %v1441, 1e-05
        %v1443 = vrsqrt.pop %v1442
        %v1444 = vmul.f32 %v1437, %v1443
        %v1446 = vlaneseq
        %v1447 = vshrl.u32 %v1446, 7
        %v1448 = vsub.s32 0, %v1447
        %v1449 = vrot.slane %v1432, %v1448
        %v1451 = vmul.f32 %v1444, %v1449
        %v1453 = vlaneseq
        %v1454 = vshrl.u32 %v1453, 7
        %v1455 = vsub.s32 0, %v1454
        %v1456 = vrot.slane %v1433, %v1455
        %v1458 = vadd.f32 %v1451, %v1456
        %v1459 = vpack.c.bf16 %v1458, %v1458
        %v1460 = vld [vmem:[%s10] sm:$0xff]
        %v1461 = vld [vmem:[%s10 + $0x8] sm:$0xff]
        %v1462 = vld [vmem:[%s10 + $0x10] sm:$0xff]
        %v1463 = vld [vmem:[%s10 + $0x18] sm:$0xff]
        %v1464 = vld [vmem:[%s10 + $0x20] sm:$0xff]
        %v1465 = vld [vmem:[%s10 + $0x28] sm:$0xff]
        %v1466 = vld [vmem:[%s10 + $0x30] sm:$0xff]
        %v1467 = vld [vmem:[%s10 + $0x38] sm:$0xff]
        %v1468 = vld [vmem:[%s10 + $0x40] sm:$0xff]
        %v1469 = vld [vmem:[%s10 + $0x48] sm:$0xff]
        %v1470 = vld [vmem:[%s10 + $0x50] sm:$0xff]
        %v1471 = vld [vmem:[%s10 + $0x58] sm:$0xff]
        %v1472 = vld [vmem:[%s10 + $0x60] sm:$0xff]
        %v1473 = vld [vmem:[%s10 + $0x68] sm:$0xff]
        %v1474 = vld [vmem:[%s10 + $0x70] sm:$0xff]
        %v1475 = vld [vmem:[%s10 + $0x78] sm:$0xff]
        %v1476 = vld [vmem:[%s10 + $0x80] sm:$0xff]
        %v1477 = vld [vmem:[%s10 + $0x88] sm:$0xff]
        %v1478 = vld [vmem:[%s10 + $0x90] sm:$0xff]
        %v1479 = vld [vmem:[%s10 + $0x98] sm:$0xff]
        %v1480 = vld [vmem:[%s10 + $0xa0] sm:$0xff]
        %v1481 = vld [vmem:[%s10 + $0xa8] sm:$0xff]
        %v1482 = vld [vmem:[%s10 + $0xb0] sm:$0xff]
        %v1483 = vld [vmem:[%s10 + $0xb8] sm:$0xff]
        %v1484 = vld [vmem:[%s10 + $0xc0] sm:$0xff]
        %v1485 = vld [vmem:[%s10 + $0xc8] sm:$0xff]
        %v1486 = vld [vmem:[%s10 + $0xd0] sm:$0xff]
        %v1487 = vld [vmem:[%s10 + $0xd8] sm:$0xff]
        %v1488 = vld [vmem:[%s10 + $0xe0] sm:$0xff]
        %v1489 = vld [vmem:[%s10 + $0xe8] sm:$0xff]
        %v1490 = vld [vmem:[%s10 + $0xf0] sm:$0xff]
        %v1491 = vld [vmem:[%s10 + $0xf8] sm:$0xff]
        %v1492 = vld [vmem:[%s11] sm:$0xf]
        %v1494 = vlaneseq
        %v1495 = vshrl.u32 %v1494, 7
        %v1496 = vsub.s32 0, %v1495
        %v1497 = vrot.slane %v1492, %v1496
        %v1498 = vlaneseq
        %v1499 = vshrl.u32 %v1498, 7
        %v1500 = vsub.s32 1, %v1499
        %v1501 = vrot.slane %v1492, %v1500
        %v1502 = vlaneseq
        %v1503 = vshrl.u32 %v1502, 7
        %v1504 = vsub.s32 2, %v1503
        %v1505 = vrot.slane %v1492, %v1504
        %v1506 = vlaneseq
        %v1507 = vshrl.u32 %v1506, 7
        %v1508 = vsub.s32 3, %v1507
        %v1509 = vrot.slane %v1492, %v1508
        %v1546 = vunpack.c.l.b16 %v1460
        %v1547 = vunpack.c.h.b16 %v1460
        %v1548 = vunpack.c.l.b16 %v1461
        %v1549 = vunpack.c.h.b16 %v1461
        %v1550 = vunpack.c.l.b16 %v1462
        %v1551 = vunpack.c.h.b16 %v1462
        %v1552 = vunpack.c.l.b16 %v1463
        %v1553 = vunpack.c.h.b16 %v1463
        %v1554 = vunpack.c.l.b16 %v1464
        %v1555 = vunpack.c.h.b16 %v1464
        %v1556 = vunpack.c.l.b16 %v1465
        %v1557 = vunpack.c.h.b16 %v1465
        %v1558 = vunpack.c.l.b16 %v1466
        %v1559 = vunpack.c.h.b16 %v1466
        %v1560 = vunpack.c.l.b16 %v1467
        %v1561 = vunpack.c.h.b16 %v1467
        %v1562 = vunpack.c.l.b16 %v1468
        %v1563 = vunpack.c.h.b16 %v1468
        %v1564 = vunpack.c.l.b16 %v1469
        %v1565 = vunpack.c.h.b16 %v1469
        %v1566 = vunpack.c.l.b16 %v1470
        %v1567 = vunpack.c.h.b16 %v1470
        %v1568 = vunpack.c.l.b16 %v1471
        %v1569 = vunpack.c.h.b16 %v1471
        %v1570 = vunpack.c.l.b16 %v1472
        %v1571 = vunpack.c.h.b16 %v1472
        %v1572 = vunpack.c.l.b16 %v1473
        %v1573 = vunpack.c.h.b16 %v1473
        %v1574 = vunpack.c.l.b16 %v1474
        %v1575 = vunpack.c.h.b16 %v1474
        %v1576 = vunpack.c.l.b16 %v1475
        %v1577 = vunpack.c.h.b16 %v1475
        %v1578 = vunpack.c.l.b16 %v1476
        %v1579 = vunpack.c.h.b16 %v1476
        %v1580 = vunpack.c.l.b16 %v1477
        %v1581 = vunpack.c.h.b16 %v1477
        %v1582 = vunpack.c.l.b16 %v1478
        %v1583 = vunpack.c.h.b16 %v1478
        %v1584 = vunpack.c.l.b16 %v1479
        %v1585 = vunpack.c.h.b16 %v1479
        %v1586 = vunpack.c.l.b16 %v1480
        %v1587 = vunpack.c.h.b16 %v1480
        %v1588 = vunpack.c.l.b16 %v1481
        %v1589 = vunpack.c.h.b16 %v1481
        %v1590 = vunpack.c.l.b16 %v1482
        %v1591 = vunpack.c.h.b16 %v1482
        %v1592 = vunpack.c.l.b16 %v1483
        %v1593 = vunpack.c.h.b16 %v1483
        %v1594 = vunpack.c.l.b16 %v1484
        %v1595 = vunpack.c.h.b16 %v1484
        %v1596 = vunpack.c.l.b16 %v1485
        %v1597 = vunpack.c.h.b16 %v1485
        %v1598 = vunpack.c.l.b16 %v1486
        %v1599 = vunpack.c.h.b16 %v1486
        %v1600 = vunpack.c.l.b16 %v1487
        %v1601 = vunpack.c.h.b16 %v1487
        %v1602 = vunpack.c.l.b16 %v1488
        %v1603 = vunpack.c.h.b16 %v1488
        %v1604 = vunpack.c.l.b16 %v1489
        %v1605 = vunpack.c.h.b16 %v1489
        %v1606 = vunpack.c.l.b16 %v1490
        %v1607 = vunpack.c.h.b16 %v1490
        %v1608 = vunpack.c.l.b16 %v1491
        %v1609 = vunpack.c.h.b16 %v1491
        %v1610 = vpack.c.b16 %v1550, %v1546
        %v1611 = vpack.c.b16 %v1551, %v1547
        %v1612 = vpack.c.b16 %v1552, %v1548
        %v1613 = vpack.c.b16 %v1553, %v1549
        %v1614 = vpack.c.b16 %v1558, %v1554
        %v1615 = vpack.c.b16 %v1559, %v1555
        %v1616 = vpack.c.b16 %v1560, %v1556
        %v1617 = vpack.c.b16 %v1561, %v1557
        %v1618 = vpack.c.b16 %v1566, %v1562
        %v1619 = vpack.c.b16 %v1567, %v1563
        %v1620 = vpack.c.b16 %v1568, %v1564
        %v1621 = vpack.c.b16 %v1569, %v1565
        %v1622 = vpack.c.b16 %v1574, %v1570
        %v1623 = vpack.c.b16 %v1575, %v1571
        %v1624 = vpack.c.b16 %v1576, %v1572
        %v1625 = vpack.c.b16 %v1577, %v1573
        %v1626 = vpack.c.b16 %v1582, %v1578
        %v1627 = vpack.c.b16 %v1583, %v1579
        %v1628 = vpack.c.b16 %v1584, %v1580
        %v1629 = vpack.c.b16 %v1585, %v1581
        %v1630 = vpack.c.b16 %v1590, %v1586
        %v1631 = vpack.c.b16 %v1591, %v1587
        %v1632 = vpack.c.b16 %v1592, %v1588
        %v1633 = vpack.c.b16 %v1593, %v1589
        %v1634 = vpack.c.b16 %v1598, %v1594
        %v1635 = vpack.c.b16 %v1599, %v1595
        %v1636 = vpack.c.b16 %v1600, %v1596
        %v1637 = vpack.c.b16 %v1601, %v1597
        %v1638 = vpack.c.b16 %v1606, %v1602
        %v1639 = vpack.c.b16 %v1607, %v1603
        %v1640 = vpack.c.b16 %v1608, %v1604
        %v1641 = vpack.c.b16 %v1609, %v1605
        %1674 = vmatprep.subr.bf16.mxu0 %v1611
        %1675 = vmatpush1.bf16.msra.mxu0 %v1610
        %1676 = vmatprep.subr.bf16.mxu0 %v1615
        %1677 = vmatpush1.bf16.msra.mxu0 %v1614
        %1678 = vmatprep.subr.bf16.mxu0 %v1619
        %1679 = vmatpush1.bf16.msra.mxu0 %v1618
        %1680 = vmatprep.subr.bf16.mxu0 %v1623
        %1681 = vmatpush1.bf16.msra.mxu0 %v1622
        %1682 = vmatprep.subr.bf16.mxu0 %v1627
        %1683 = vmatpush1.bf16.msra.mxu0 %v1626
        %1684 = vmatprep.subr.bf16.mxu0 %v1631
        %1685 = vmatpush1.bf16.msra.mxu0 %v1630
        %1686 = vmatprep.subr.bf16.mxu0 %v1635
        %1687 = vmatpush1.bf16.msra.mxu0 %v1634
        %1688 = vmatprep.subr.bf16.mxu0 %v1639
        %1689 = vmatpush1.bf16.msra.mxu0 %v1638
        %1690 = vmatprep.subr.bf16.mxu0 0
        %1691 = vmatpush1.bf16.msra.mxu0 0
        %1692 = vmatprep.subr.bf16.mxu0 0
        %1693 = vmatpush1.bf16.msra.mxu0 0
        %1694 = vmatprep.subr.bf16.mxu0 0
        %1695 = vmatpush1.bf16.msra.mxu0 0
        %1696 = vmatprep.subr.bf16.mxu0 0
        %1697 = vmatpush1.bf16.msra.mxu0 0
        %1698 = vmatprep.subr.bf16.mxu0 0
        %1699 = vmatpush1.bf16.msra.mxu0 0
        %1700 = vmatprep.subr.bf16.mxu0 0
        %1701 = vmatpush1.bf16.msra.mxu0 0
        %1702 = vmatprep.subr.bf16.mxu0 0
        %1703 = vmatpush1.bf16.msra.mxu0 0
        %1704 = vmatprep.subr.bf16.mxu0 0
        %1705 = vmatpush1.bf16.msra.mxu0 0
        %1706 = vmatprep.mubr.bf16.mxu0 0
        %1707 = vmatmul.mubr.bf16.gmra.mrb[0].mxu0 %v1459
        %v1708 = vpop.f32.mrb[0].mxu0
        %v1709 = vadd.f32 %v1497, %v1708
        %v1710 = vpop.f32.mrb[0].mxu0
        %v1711 = vadd.f32 %v1501, %v1710
        %v1712 = vpop.f32.mrb[0].mxu0
        %v1713 = vpop.f32.mrb[0].mxu0
        %1714 = vdwg.mxu0
        %1715 = vmatprep.subr.bf16.mxu0 %v1613
        %1716 = vmatpush1.bf16.msra.mxu0 %v1612
        %1717 = vmatprep.subr.bf16.mxu0 %v1617
        %1718 = vmatpush1.bf16.msra.mxu0 %v1616
        %1719 = vmatprep.subr.bf16.mxu0 %v1621
        %1720 = vmatpush1.bf16.msra.mxu0 %v1620
        %1721 = vmatprep.subr.bf16.mxu0 %v1625
        %1722 = vmatpush1.bf16.msra.mxu0 %v1624
        %1723 = vmatprep.subr.bf16.mxu0 %v1629
        %1724 = vmatpush1.bf16.msra.mxu0 %v1628
        %1725 = vmatprep.subr.bf16.mxu0 %v1633
        %1726 = vmatpush1.bf16.msra.mxu0 %v1632
        %1727 = vmatprep.subr.bf16.mxu0 %v1637
        %1728 = vmatpush1.bf16.msra.mxu0 %v1636
        %1729 = vmatprep.subr.bf16.mxu0 %v1641
        %1730 = vmatpush1.bf16.msra.mxu0 %v1640
        %1731 = vmatprep.subr.bf16.mxu0 0
        %1732 = vmatpush1.bf16.msra.mxu0 0
        %1733 = vmatprep.subr.bf16.mxu0 0
        %1734 = vmatpush1.bf16.msra.mxu0 0
        %1735 = vmatprep.subr.bf16.mxu0 0
        %1736 = vmatpush1.bf16.msra.mxu0 0
        %1737 = vmatprep.subr.bf16.mxu0 0
        %1738 = vmatpush1.bf16.msra.mxu0 0
        %1739 = vmatprep.subr.bf16.mxu0 0
        %1740 = vmatpush1.bf16.msra.mxu0 0
        %1741 = vmatprep.subr.bf16.mxu0 0
        %1742 = vmatpush1.bf16.msra.mxu0 0
        %1743 = vmatprep.subr.bf16.mxu0 0
        %1744 = vmatpush1.bf16.msra.mxu0 0
        %1745 = vmatprep.subr.bf16.mxu0 0
        %1746 = vmatpush1.bf16.msra.mxu0 0
        %1747 = vmatprep.mubr.bf16.mxu0 0
        %1748 = vmatmul.mubr.bf16.gmra.mrb[0].mxu0 %v1459
        %v1749 = vpop.f32.mrb[0].mxu0
        %v1750 = vadd.f32 %v1505, %v1749
        %v1751 = vpop.f32.mrb[0].mxu0
        %v1752 = vadd.f32 %v1509, %v1751
        %v1753 = vpop.f32.mrb[0].mxu0
        %v1754 = vpop.f32.mrb[0].mxu0
        %1755 = vdwg.mxu0
        %v1756 = vmul.f32 %v1709, 1.702
        %v1757 = vmul.f32 %v1711, 1.702
        %v1758 = vmul.f32 %v1750, 1.702
        %v1759 = vmul.f32 %v1752, 1.702
        %v1760 = vxor.u32 %v1756, 2147483648
        %v1761 = vxor.u32 %v1757, 2147483648
        %v1762 = vxor.u32 %v1758, 2147483648
        %v1763 = vxor.u32 %v1759, 2147483648
        %v1764 = vmul.f32 %v1760, 1.442695
        %v1765 = vpow.pop %v1764
        %v1766 = vmul.f32 %v1761, 1.442695
        %v1767 = vpow.pop %v1766
        %v1768 = vmul.f32 %v1762, 1.442695
        %v1769 = vpow.pop %v1768
        %v1770 = vmul.f32 %v1763, 1.442695
        %v1771 = vpow.pop %v1770
        %v1772 = vadd.f32 %v1765, 1.0
        %v1773 = vadd.f32 %v1767, 1.0
        %v1774 = vadd.f32 %v1769, 1.0
        %v1775 = vadd.f32 %v1771, 1.0
        %v1776 = vrcp.pop %v1772
        %v1777 = vmul.f32 1.0, %v1776
        %v1778 = vrcp.pop %v1773
        %v1779 = vmul.f32 1.0, %v1778
        %v1780 = vrcp.pop %v1774
        %v1781 = vmul.f32 1.0, %v1780
        %v1782 = vrcp.pop %v1775
        %v1783 = vmul.f32 1.0, %v1782
        %v1784 = vmul.f32 %v1709, %v1777
        %v1785 = vmul.f32 %v1711, %v1779
        %v1786 = vmul.f32 %v1750, %v1781
        %v1787 = vmul.f32 %v1752, %v1783
        %v1788 = vpack.c.bf16 %v1784, %v1784
        %v1789 = vpack.c.bf16 %v1785, %v1785
        %v1790 = vpack.c.bf16 %v1786, %v1786
        %v1791 = vpack.c.bf16 %v1787, %v1787
        %v1792 = vld [vmem:[%s12] sm:$0xf]
        %v1793 = vld [vmem:[%s12 + $0x4] sm:$0xf]
        %v1794 = vld [vmem:[%s12 + $0x8] sm:$0xf]
        %v1795 = vld [vmem:[%s12 + $0xc] sm:$0xf]
        %v1796 = vld [vmem:[%s12 + $0x10] sm:$0xf]
        %v1797 = vld [vmem:[%s12 + $0x14] sm:$0xf]
        %v1798 = vld [vmem:[%s12 + $0x18] sm:$0xf]
        %v1799 = vld [vmem:[%s12 + $0x1c] sm:$0xf]
        %v1800 = vld [vmem:[%s12 + $0x20] sm:$0xf]
        %v1801 = vld [vmem:[%s12 + $0x24] sm:$0xf]
        %v1802 = vld [vmem:[%s12 + $0x28] sm:$0xf]
        %v1803 = vld [vmem:[%s12 + $0x2c] sm:$0xf]
        %v1804 = vld [vmem:[%s12 + $0x30] sm:$0xf]
        %v1805 = vld [vmem:[%s12 + $0x34] sm:$0xf]
        %v1806 = vld [vmem:[%s12 + $0x38] sm:$0xf]
        %v1807 = vld [vmem:[%s12 + $0x3c] sm:$0xf]
        %v1808 = vld [vmem:[%s12 + $0x40] sm:$0xf]
        %v1809 = vld [vmem:[%s12 + $0x44] sm:$0xf]
        %v1810 = vld [vmem:[%s12 + $0x48] sm:$0xf]
        %v1811 = vld [vmem:[%s12 + $0x4c] sm:$0xf]
        %v1812 = vld [vmem:[%s12 + $0x50] sm:$0xf]
        %v1813 = vld [vmem:[%s12 + $0x54] sm:$0xf]
        %v1814 = vld [vmem:[%s12 + $0x58] sm:$0xf]
        %v1815 = vld [vmem:[%s12 + $0x5c] sm:$0xf]
        %v1816 = vld [vmem:[%s12 + $0x60] sm:$0xf]
        %v1817 = vld [vmem:[%s12 + $0x64] sm:$0xf]
        %v1818 = vld [vmem:[%s12 + $0x68] sm:$0xf]
        %v1819 = vld [vmem:[%s12 + $0x6c] sm:$0xf]
        %v1820 = vld [vmem:[%s12 + $0x70] sm:$0xf]
        %v1821 = vld [vmem:[%s12 + $0x74] sm:$0xf]
        %v1822 = vld [vmem:[%s12 + $0x78] sm:$0xf]
        %v1823 = vld [vmem:[%s12 + $0x7c] sm:$0xf]
        %v1824 = vld [vmem:[%s12 + $0x80] sm:$0xf]
        %v1825 = vld [vmem:[%s12 + $0x84] sm:$0xf]
        %v1826 = vld [vmem:[%s12 + $0x88] sm:$0xf]
        %v1827 = vld [vmem:[%s12 + $0x8c] sm:$0xf]
        %v1828 = vld [vmem:[%s12 + $0x90] sm:$0xf]
        %v1829 = vld [vmem:[%s12 + $0x94] sm:$0xf]
        %v1830 = vld [vmem:[%s12 + $0x98] sm:$0xf]
        %v1831 = vld [vmem:[%s12 + $0x9c] sm:$0xf]
        %v1832 = vld [vmem:[%s12 + $0xa0] sm:$0xf]
        %v1833 = vld [vmem:[%s12 + $0xa4] sm:$0xf]
        %v1834 = vld [vmem:[%s12 + $0xa8] sm:$0xf]
        %v1835 = vld [vmem:[%s12 + $0xac] sm:$0xf]
        %v1836 = vld [vmem:[%s12 + $0xb0] sm:$0xf]
        %v1837 = vld [vmem:[%s12 + $0xb4] sm:$0xf]
        %v1838 = vld [vmem:[%s12 + $0xb8] sm:$0xf]
        %v1839 = vld [vmem:[%s12 + $0xbc] sm:$0xf]
        %v1840 = vld [vmem:[%s12 + $0xc0] sm:$0xf]
        %v1841 = vld [vmem:[%s12 + $0xc4] sm:$0xf]
        %v1842 = vld [vmem:[%s12 + $0xc8] sm:$0xf]
        %v1843 = vld [vmem:[%s12 + $0xcc] sm:$0xf]
        %v1844 = vld [vmem:[%s12 + $0xd0] sm:$0xf]
        %v1845 = vld [vmem:[%s12 + $0xd4] sm:$0xf]
        %v1846 = vld [vmem:[%s12 + $0xd8] sm:$0xf]
        %v1847 = vld [vmem:[%s12 + $0xdc] sm:$0xf]
        %v1848 = vld [vmem:[%s12 + $0xe0] sm:$0xf]
        %v1849 = vld [vmem:[%s12 + $0xe4] sm:$0xf]
        %v1850 = vld [vmem:[%s12 + $0xe8] sm:$0xf]
        %v1851 = vld [vmem:[%s12 + $0xec] sm:$0xf]
        %v1852 = vld [vmem:[%s12 + $0xf0] sm:$0xf]
        %v1853 = vld [vmem:[%s12 + $0xf4] sm:$0xf]
        %v1854 = vld [vmem:[%s12 + $0xf8] sm:$0xf]
        %v1855 = vld [vmem:[%s12 + $0xfc] sm:$0xf]
        %v1856 = vld [vmem:[%s13] sm:$0x1]
        %v1858 = vlaneseq
        %v1859 = vshrl.u32 %v1858, 7
        %v1860 = vsub.s32 0, %v1859
        %v1861 = vrot.slane %v1856, %v1860
        %v1927 = vunpack.c.l.b16 %v1792
        %v1928 = vunpack.c.l.b16 %v1793
        %v1929 = vunpack.c.l.b16 %v1794
        %v1930 = vunpack.c.l.b16 %v1795
        %v1931 = vunpack.c.l.b16 %v1796
        %v1932 = vunpack.c.l.b16 %v1797
        %v1933 = vunpack.c.l.b16 %v1798
        %v1934 = vunpack.c.l.b16 %v1799
        %v1935 = vunpack.c.l.b16 %v1800
        %v1936 = vunpack.c.l.b16 %v1801
        %v1937 = vunpack.c.l.b16 %v1802
        %v1938 = vunpack.c.l.b16 %v1803
        %v1939 = vunpack.c.l.b16 %v1804
        %v1940 = vunpack.c.l.b16 %v1805
        %v1941 = vunpack.c.l.b16 %v1806
        %v1942 = vunpack.c.l.b16 %v1807
        %v1943 = vunpack.c.l.b16 %v1808
        %v1944 = vunpack.c.l.b16 %v1809
        %v1945 = vunpack.c.l.b16 %v1810
        %v1946 = vunpack.c.l.b16 %v1811
        %v1947 = vunpack.c.l.b16 %v1812
        %v1948 = vunpack.c.l.b16 %v1813
        %v1949 = vunpack.c.l.b16 %v1814
        %v1950 = vunpack.c.l.b16 %v1815
        %v1951 = vunpack.c.l.b16 %v1816
        %v1952 = vunpack.c.l.b16 %v1817
        %v1953 = vunpack.c.l.b16 %v1818
        %v1954 = vunpack.c.l.b16 %v1819
        %v1955 = vunpack.c.l.b16 %v1820
        %v1956 = vunpack.c.l.b16 %v1821
        %v1957 = vunpack.c.l.b16 %v1822
        %v1958 = vunpack.c.l.b16 %v1823
        %v1959 = vunpack.c.l.b16 %v1824
        %v1960 = vunpack.c.l.b16 %v1825
        %v1961 = vunpack.c.l.b16 %v1826
        %v1962 = vunpack.c.l.b16 %v1827
        %v1963 = vunpack.c.l.b16 %v1828
        %v1964 = vunpack.c.l.b16 %v1829
        %v1965 = vunpack.c.l.b16 %v1830
        %v1966 = vunpack.c.l.b16 %v1831
        %v1967 = vunpack.c.l.b16 %v1832
        %v1968 = vunpack.c.l.b16 %v1833
        %v1969 = vunpack.c.l.b16 %v1834
        %v1970 = vunpack.c.l.b16 %v1835
        %v1971 = vunpack.c.l.b16 %v1836
        %v1972 = vunpack.c.l.b16 %v1837
        %v1973 = vunpack.c.l.b16 %v1838
        %v1974 = vunpack.c.l.b16 %v1839
        %v1975 = vunpack.c.l.b16 %v1840
        %v1976 = vunpack.c.l.b16 %v1841
        %v1977 = vunpack.c.l.b16 %v1842
        %v1978 = vunpack.c.l.b16 %v1843
        %v1979 = vunpack.c.l.b16 %v1844
        %v1980 = vunpack.c.l.b16 %v1845
        %v1981 = vunpack.c.l.b16 %v1846
        %v1982 = vunpack.c.l.b16 %v1847
        %v1983 = vunpack.c.l.b16 %v1848
        %v1984 = vunpack.c.l.b16 %v1849
        %v1985 = vunpack.c.l.b16 %v1850
        %v1986 = vunpack.c.l.b16 %v1851
        %v1987 = vunpack.c.l.b16 %v1852
        %v1988 = vunpack.c.l.b16 %v1853
        %v1989 = vunpack.c.l.b16 %v1854
        %v1990 = vunpack.c.l.b16 %v1855
        %v1991 = vpack.c.b16 %v1928, %v1927
        %v1992 = vpack.c.b16 %v1930, %v1929
        %v1993 = vpack.c.b16 %v1932, %v1931
        %v1994 = vpack.c.b16 %v1934, %v1933
        %v1995 = vpack.c.b16 %v1936, %v1935
        %v1996 = vpack.c.b16 %v1938, %v1937
        %v1997 = vpack.c.b16 %v1940, %v1939
        %v1998 = vpack.c.b16 %v1942, %v1941
        %v1999 = vpack.c.b16 %v1944, %v1943
        %v2000 = vpack.c.b16 %v1946, %v1945
        %v2001 = vpack.c.b16 %v1948, %v1947
        %v2002 = vpack.c.b16 %v1950, %v1949
        %v2003 = vpack.c.b16 %v1952, %v1951
        %v2004 = vpack.c.b16 %v1954, %v1953
        %v2005 = vpack.c.b16 %v1956, %v1955
        %v2006 = vpack.c.b16 %v1958, %v1957
        %v2007 = vpack.c.b16 %v1960, %v1959
        %v2008 = vpack.c.b16 %v1962, %v1961
        %v2009 = vpack.c.b16 %v1964, %v1963
        %v2010 = vpack.c.b16 %v1966, %v1965
        %v2011 = vpack.c.b16 %v1968, %v1967
        %v2012 = vpack.c.b16 %v1970, %v1969
        %v2013 = vpack.c.b16 %v1972, %v1971
        %v2014 = vpack.c.b16 %v1974, %v1973
        %v2015 = vpack.c.b16 %v1976, %v1975
        %v2016 = vpack.c.b16 %v1978, %v1977
        %v2017 = vpack.c.b16 %v1980, %v1979
        %v2018 = vpack.c.b16 %v1982, %v1981
        %v2019 = vpack.c.b16 %v1984, %v1983
        %v2020 = vpack.c.b16 %v1986, %v1985
        %v2021 = vpack.c.b16 %v1988, %v1987
        %v2022 = vpack.c.b16 %v1990, %v1989
        %2055 = vmatprep.subr.bf16.mxu0 0
        %2056 = vmatpush1.bf16.msra.mxu0 %v1991
        %2057 = vmatprep.subr.bf16.mxu0 0
        %2058 = vmatpush1.bf16.msra.mxu0 %v1992
        %2059 = vmatprep.subr.bf16.mxu0 0
        %2060 = vmatpush1.bf16.msra.mxu0 %v1993
        %2061 = vmatprep.subr.bf16.mxu0 0
        %2062 = vmatpush1.bf16.msra.mxu0 %v1994
        %2063 = vmatprep.subr.bf16.mxu0 0
        %2064 = vmatpush1.bf16.msra.mxu0 %v1995
        %2065 = vmatprep.subr.bf16.mxu0 0
        %2066 = vmatpush1.bf16.msra.mxu0 %v1996
        %2067 = vmatprep.subr.bf16.mxu0 0
        %2068 = vmatpush1.bf16.msra.mxu0 %v1997
        %2069 = vmatprep.subr.bf16.mxu0 0
        %2070 = vmatpush1.bf16.msra.mxu0 %v1998
        %2071 = vmatprep.subr.bf16.mxu0 0
        %2072 = vmatpush1.bf16.msra.mxu0 %v1999
        %2073 = vmatprep.subr.bf16.mxu0 0
        %2074 = vmatpush1.bf16.msra.mxu0 %v2000
        %2075 = vmatprep.subr.bf16.mxu0 0
        %2076 = vmatpush1.bf16.msra.mxu0 %v2001
        %2077 = vmatprep.subr.bf16.mxu0 0
        %2078 = vmatpush1.bf16.msra.mxu0 %v2002
        %2079 = vmatprep.subr.bf16.mxu0 0
        %2080 = vmatpush1.bf16.msra.mxu0 %v2003
        %2081 = vmatprep.subr.bf16.mxu0 0
        %2082 = vmatpush1.bf16.msra.mxu0 %v2004
        %2083 = vmatprep.subr.bf16.mxu0 0
        %2084 = vmatpush1.bf16.msra.mxu0 %v2005
        %2085 = vmatprep.subr.bf16.mxu0 0
        %2086 = vmatpush1.bf16.msra.mxu0 %v2006
        %2087 = vmatprep.mubr.bf16.mxu0 %v1789
        %2088 = vmatmul.mubr.bf16.gmra.mrb[0].mxu0 %v1788
        %v2089 = vpop.f32.mrb[0].mxu0
        %v2090 = vadd.f32 %v1861, %v2089
        %v2091 = vpop.f32.mrb[0].mxu0
        %v2092 = vpop.f32.mrb[0].mxu0
        %v2093 = vpop.f32.mrb[0].mxu0
        %2094 = vdwg.mxu0
        %2095 = vmatprep.subr.bf16.mxu0 0
        %2096 = vmatpush1.bf16.msra.mxu0 %v2007
        %2097 = vmatprep.subr.bf16.mxu0 0
        %2098 = vmatpush1.bf16.msra.mxu0 %v2008
        %2099 = vmatprep.subr.bf16.mxu0 0
        %2100 = vmatpush1.bf16.msra.mxu0 %v2009
        %2101 = vmatprep.subr.bf16.mxu0 0
        %2102 = vmatpush1.bf16.msra.mxu0 %v2010
        %2103 = vmatprep.subr.bf16.mxu0 0
        %2104 = vmatpush1.bf16.msra.mxu0 %v2011
        %2105 = vmatprep.subr.bf16.mxu0 0
        %2106 = vmatpush1.bf16.msra.mxu0 %v2012
        %2107 = vmatprep.subr.bf16.mxu0 0
        %2108 = vmatpush1.bf16.msra.mxu0 %v2013
        %2109 = vmatprep.subr.bf16.mxu0 0
        %2110 = vmatpush1.bf16.msra.mxu0 %v2014
        %2111 = vmatprep.subr.bf16.mxu0 0
        %2112 = vmatpush1.bf16.msra.mxu0 %v2015
        %2113 = vmatprep.subr.bf16.mxu0 0
        %2114 = vmatpush1.bf16.msra.mxu0 %v2016
        %2115 = vmatprep.subr.bf16.mxu0 0
        %2116 = vmatpush1.bf16.msra.mxu0 %v2017
        %2117 = vmatprep.subr.bf16.mxu0 0
        %2118 = vmatpush1.bf16.msra.mxu0 %v2018
        %2119 = vmatprep.subr.bf16.mxu0 0
        %2120 = vmatpush1.bf16.msra.mxu0 %v2019
        %2121 = vmatprep.subr.bf16.mxu0 0
        %2122 = vmatpush1.bf16.msra.mxu0 %v2020
        %2123 = vmatprep.subr.bf16.mxu0 0
        %2124 = vmatpush1.bf16.msra.mxu0 %v2021
        %2125 = vmatprep.subr.bf16.mxu0 0
        %2126 = vmatpush1.bf16.msra.mxu0 %v2022
        %2127 = vmatprep.mubr.bf16.mxu0 %v1791
        %2128 = vmatmul.mubr.bf16.gmra.mrb[0].mxu0 %v1790
        %v2129 = vpop.f32.mrb[0].mxu0
        %v2130 = vadd.f32 %v2090, %v2129
        %v2131 = vpop.f32.mrb[0].mxu0
        %v2132 = vpop.f32.mrb[0].mxu0
        %v2133 = vpop.f32.mrb[0].mxu0
        %2134 = vdwg.mxu0
        %v2135 = vadd.f32 %v2130, %v1431
        %s2136 = scalar_lea.vmem %s2, 1
        %v2137 = vld [vmem:[%s2136] sm:$0x1]
        %s2138 = scalar_lea.vmem %s3, 1
        %v2139 = vld [vmem:[%s2138] sm:$0x1]
        %2140 = vadd.xlane.f32.xlu0 %v2135
        %v2141 = vpop.xlane.xlu0 %2140
        %v2142 = vmul.f32 %v2141, %v568
        %v2143 = vsub.f32 %v2135, %v2142
        %v2144 = vmul.f32 %v2143, %v2143
        %2145 = vadd.xlane.f32.xlu0 %v2144
        %v2146 = vpop.xlane.xlu0 %2145
        %v2147 = vmul.f32 %v2146, %v568
        %v2148 = vadd.f32 %v2147, 1e-05
        %v2149 = vrsqrt.pop %v2148
        %v2150 = vmul.f32 %v2143, %v2149
        %v2152 = vlaneseq
        %v2153 = vshrl.u32 %v2152, 7
        %v2154 = vsub.s32 0, %v2153
        %v2155 = vrot.slane %v2137, %v2154
        %v2157 = vmul.f32 %v2150, %v2155
        %v2159 = vlaneseq
        %v2160 = vshrl.u32 %v2159, 7
        %v2161 = vsub.s32 0, %v2160
        %v2162 = vrot.slane %v2139, %v2161
        %v2164 = vadd.f32 %v2157, %v2162
        %v2165 = vpack.c.bf16 %v2164, %v2164
        %s2166 = scalar_lea.vmem %s4, 192
        %v2167 = vld [vmem:[%s2166] sm:$0xff]
        %v2168 = vld [vmem:[%s2166 + $0x8] sm:$0xf]
        %v2169 = vld [vmem:[%s2166 + $0xc] sm:$0xff]
        %v2170 = vld [vmem:[%s2166 + $0x14] sm:$0xf]
        %v2171 = vld [vmem:[%s2166 + $0x18] sm:$0xff]
        %v2172 = vld [vmem:[%s2166 + $0x20] sm:$0xf]
        %v2173 = vld [vmem:[%s2166 + $0x24] sm:$0xff]
        %v2174 = vld [vmem:[%s2166 + $0x2c] sm:$0xf]
        %v2175 = vld [vmem:[%s2166 + $0x30] sm:$0xff]
        %v2176 = vld [vmem:[%s2166 + $0x38] sm:$0xf]
        %v2177 = vld [vmem:[%s2166 + $0x3c] sm:$0xff]
        %v2178 = vld [vmem:[%s2166 + $0x44] sm:$0xf]
        %v2179 = vld [vmem:[%s2166 + $0x48] sm:$0xff]
        %v2180 = vld [vmem:[%s2166 + $0x50] sm:$0xf]
        %v2181 = vld [vmem:[%s2166 + $0x54] sm:$0xff]
        %v2182 = vld [vmem:[%s2166 + $0x5c] sm:$0xf]
        %v2183 = vld [vmem:[%s2166 + $0x60] sm:$0xff]
        %v2184 = vld [vmem:[%s2166 + $0x68] sm:$0xf]
        %v2185 = vld [vmem:[%s2166 + $0x6c] sm:$0xff]
        %v2186 = vld [vmem:[%s2166 + $0x74] sm:$0xf]
        %v2187 = vld [vmem:[%s2166 + $0x78] sm:$0xff]
        %v2188 = vld [vmem:[%s2166 + $0x80] sm:$0xf]
        %v2189 = vld [vmem:[%s2166 + $0x84] sm:$0xff]
        %v2190 = vld [vmem:[%s2166 + $0x8c] sm:$0xf]
        %v2191 = vld [vmem:[%s2166 + $0x90] sm:$0xff]
        %v2192 = vld [vmem:[%s2166 + $0x98] sm:$0xf]
        %v2193 = vld [vmem:[%s2166 + $0x9c] sm:$0xff]
        %v2194 = vld [vmem:[%s2166 + $0xa4] sm:$0xf]
        %v2195 = vld [vmem:[%s2166 + $0xa8] sm:$0xff]
        %v2196 = vld [vmem:[%s2166 + $0xb0] sm:$0xf]
        %v2197 = vld [vmem:[%s2166 + $0xb4] sm:$0xff]
        %v2198 = vld [vmem:[%s2166 + $0xbc] sm:$0xf]
        %s2199 = scalar_lea.vmem %s5, 3
        %v2200 = vld [vmem:[%s2199] sm:$0x7]
        %v2202 = vlaneseq
        %v2203 = vshrl.u32 %v2202, 7
        %v2204 = vsub.s32 0, %v2203
        %v2205 = vrot.slane %v2200, %v2204
        %v2206 = vlaneseq
        %v2207 = vshrl.u32 %v2206, 7
        %v2208 = vsub.s32 1, %v2207
        %v2209 = vrot.slane %v2200, %v2208
        %v2210 = vlaneseq
        %v2211 = vshrl.u32 %v2210, 7
        %v2212 = vsub.s32 2, %v2211
        %v2213 = vrot.slane %v2200, %v2212
        %v2249 = vunpack.c.l.b16 %v2167
        %v2250 = vunpack.c.h.b16 %v2167
        %v2251 = vunpack.c.l.b16 %v2168
        %v2252 = vunpack.c.l.b16 %v2169
        %v2253 = vunpack.c.h.b16 %v2169
        %v2254 = vunpack.c.l.b16 %v2170
        %v2255 = vunpack.c.l.b16 %v2171
        %v2256 = vunpack.c.h.b16 %v2171
        %v2257 = vunpack.c.l.b16 %v2172
        %v2258 = vunpack.c.l.b16 %v2173
        %v2259 = vunpack.c.h.b16 %v2173
        %v2260 = vunpack.c.l.b16 %v2174
        %v2261 = vunpack.c.l.b16 %v2175
        %v2262 = vunpack.c.h.b16 %v2175
        %v2263 = vunpack.c.l.b16 %v2176
        %v2264 = vunpack.c.l.b16 %v2177
        %v2265 = vunpack.c.h.b16 %v2177
        %v2266 = vunpack.c.l.b16 %v2178
        %v2267 = vunpack.c.l.b16 %v2179
        %v2268 = vunpack.c.h.b16 %v2179
        %v2269 = vunpack.c.l.b16 %v2180
        %v2270 = vunpack.c.l.b16 %v2181
        %v2271 = vunpack.c.h.b16 %v2181
        %v2272 = vunpack.c.l.b16 %v2182
        %v2273 = vunpack.c.l.b16 %v2183
        %v2274 = vunpack.c.h.b16 %v2183
        %v2275 = vunpack.c.l.b16 %v2184
        %v2276 = vunpack.c.l.b16 %v2185
        %v2277 = vunpack.c.h.b16 %v2185
        %v2278 = vunpack.c.l.b16 %v2186
        %v2279 = vunpack.c.l.b16 %v2187
        %v2280 = vunpack.c.h.b16 %v2187
        %v2281 = vunpack.c.l.b16 %v2188
        %v2282 = vunpack.c.l.b16 %v2189
        %v2283 = vunpack.c.h.b16 %v2189
        %v2284 = vunpack.c.l.b16 %v2190
        %v2285 = vunpack.c.l.b16 %v2191
        %v2286 = vunpack.c.h.b16 %v2191
        %v2287 = vunpack.c.l.b16 %v2192
        %v2288 = vunpack.c.l.b16 %v2193
        %v2289 = vunpack.c.h.b16 %v2193
        %v2290 = vunpack.c.l.b16 %v2194
        %v2291 = vunpack.c.l.b16 %v2195
        %v2292 = vunpack.c.h.b16 %v2195
        %v2293 = vunpack.c.l.b16 %v2196
        %v2294 = vunpack.c.l.b16 %v2197
        %v2295 = vunpack.c.h.b16 %v2197
        %v2296 = vunpack.c.l.b16 %v2198
        %v2297 = vpack.c.b16 %v2252, %v2249
        %v2298 = vpack.c.b16 %v2253, %v2250
        %v2299 = vpack.c.b16 %v2254, %v2251
        %v2300 = vpack.c.b16 %v2258, %v2255
        %v2301 = vpack.c.b16 %v2259, %v2256
        %v2302 = vpack.c.b16 %v2260, %v2257
        %v2303 = vpack.c.b16 %v2264, %v2261
        %v2304 = vpack.c.b16 %v2265, %v2262
        %v2305 = vpack.c.b16 %v2266, %v2263
        %v2306 = vpack.c.b16 %v2270, %v2267
        %v2307 = vpack.c.b16 %v2271, %v2268
        %v2308 = vpack.c.b16 %v2272, %v2269
        %v2309 = vpack.c.b16 %v2276, %v2273
        %v2310 = vpack.c.b16 %v2277, %v2274
        %v2311 = vpack.c.b16 %v2278, %v2275
        %v2312 = vpack.c.b16 %v2282, %v2279
        %v2313 = vpack.c.b16 %v2283, %v2280
        %v2314 = vpack.c.b16 %v2284, %v2281
        %v2315 = vpack.c.b16 %v2288, %v2285
        %v2316 = vpack.c.b16 %v2289, %v2286
        %v2317 = vpack.c.b16 %v2290, %v2287
        %v2318 = vpack.c.b16 %v2294, %v2291
        %v2319 = vpack.c.b16 %v2295, %v2292
        %v2320 = vpack.c.b16 %v2296, %v2293
        %2345 = vmatprep.subr.bf16.mxu0 %v2298
        %2346 = vmatpush1.bf16.msra.mxu0 %v2297
        %2347 = vmatprep.subr.bf16.mxu0 %v2301
        %2348 = vmatpush1.bf16.msra.mxu0 %v2300
        %2349 = vmatprep.subr.bf16.mxu0 %v2304
        %2350 = vmatpush1.bf16.msra.mxu0 %v2303
        %2351 = vmatprep.subr.bf16.mxu0 %v2307
        %2352 = vmatpush1.bf16.msra.mxu0 %v2306
        %2353 = vmatprep.subr.bf16.mxu0 %v2310
        %2354 = vmatpush1.bf16.msra.mxu0 %v2309
        %2355 = vmatprep.subr.bf16.mxu0 %v2313
        %2356 = vmatpush1.bf16.msra.mxu0 %v2312
        %2357 = vmatprep.subr.bf16.mxu0 %v2316
        %2358 = vmatpush1.bf16.msra.mxu0 %v2315
        %2359 = vmatprep.subr.bf16.mxu0 %v2319
        %2360 = vmatpush1.bf16.msra.mxu0 %v2318
        %2361 = vmatprep.subr.bf16.mxu0 0
        %2362 = vmatpush1.bf16.msra.mxu0 0
        %2363 = vmatprep.subr.bf16.mxu0 0
        %2364 = vmatpush1.bf16.msra.mxu0 0
        %2365 = vmatprep.subr.bf16.mxu0 0
        %2366 = vmatpush1.bf16.msra.mxu0 0
        %2367 = vmatprep.subr.bf16.mxu0 0
        %2368 = vmatpush1.bf16.msra.mxu0 0
        %2369 = vmatprep.subr.bf16.mxu0 0
        %2370 = vmatpush1.bf16.msra.mxu0 0
        %2371 = vmatprep.subr.bf16.mxu0 0
        %2372 = vmatpush1.bf16.msra.mxu0 0
        %2373 = vmatprep.subr.bf16.mxu0 0
        %2374 = vmatpush1.bf16.msra.mxu0 0
        %2375 = vmatprep.subr.bf16.mxu0 0
        %2376 = vmatpush1.bf16.msra.mxu0 0
        %2377 = vmatprep.mubr.bf16.mxu0 0
        %2378 = vmatmul.mubr.bf16.gmra.mrb[0].mxu0 %v2165
        %v2379 = vpop.f32.mrb[0].mxu0
        %v2380 = vadd.f32 %v2205, %v2379
        %v2381 = vpop.f32.mrb[0].mxu0
        %v2382 = vadd.f32 %v2209, %v2381
        %v2383 = vpop.f32.mrb[0].mxu0
        %v2384 = vpop.f32.mrb[0].mxu0
        %2385 = vdwg.mxu0
        %2386 = vmatprep.subr.bf16.mxu0 0
        %2387 = vmatpush1.bf16.msra.mxu0 %v2299
        %2388 = vmatprep.subr.bf16.mxu0 0
        %2389 = vmatpush1.bf16.msra.mxu0 %v2302
        %2390 = vmatprep.subr.bf16.mxu0 0
        %2391 = vmatpush1.bf16.msra.mxu0 %v2305
        %2392 = vmatprep.subr.bf16.mxu0 0
        %2393 = vmatpush1.bf16.msra.mxu0 %v2308
        %2394 = vmatprep.subr.bf16.mxu0 0
        %2395 = vmatpush1.bf16.msra.mxu0 %v2311
        %2396 = vmatprep.subr.bf16.mxu0 0
        %2397 = vmatpush1.bf16.msra.mxu0 %v2314
        %2398 = vmatprep.subr.bf16.mxu0 0
        %2399 = vmatpush1.bf16.msra.mxu0 %v2317
        %2400 = vmatprep.subr.bf16.mxu0 0
        %2401 = vmatpush1.bf16.msra.mxu0 %v2320
        %2402 = vmatprep.subr.bf16.mxu0 0
        %2403 = vmatpush1.bf16.msra.mxu0 0
        %2404 = vmatprep.subr.bf16.mxu0 0
        %2405 = vmatpush1.bf16.msra.mxu0 0
        %2406 = vmatprep.subr.bf16.mxu0 0
        %2407 = vmatpush1.bf16.msra.mxu0 0
        %2408 = vmatprep.subr.bf16.mxu0 0
        %2409 = vmatpush1.bf16.msra.mxu0 0
        %2410 = vmatprep.subr.bf16.mxu0 0
        %2411 = vmatpush1.bf16.msra.mxu0 0
        %2412 = vmatprep.subr.bf16.mxu0 0
        %2413 = vmatpush1.bf16.msra.mxu0 0
        %2414 = vmatprep.subr.bf16.mxu0 0
        %2415 = vmatpush1.bf16.msra.mxu0 0
        %2416 = vmatprep.subr.bf16.mxu0 0
        %2417 = vmatpush1.bf16.msra.mxu0 0
        %2418 = vmatprep.mubr.bf16.mxu0 0
        %2419 = vmatmul.mubr.bf16.gmra.mrb[0].mxu0 %v2165
        %v2420 = vpop.f32.mrb[0].mxu0
        %v2421 = vadd.f32 %v2213, %v2420
        %v2422 = vpop.f32.mrb[0].mxu0
        %v2423 = vpop.f32.mrb[0].mxu0
        %v2424 = vpop.f32.mrb[0].mxu0
        %2425 = vdwg.mxu0
        %v2426 = vpack.c.bf16 %v2380, %v2380
        %v2427 = vpack.c.bf16 %v2382, %v2382
        %v2428 = vpack.c.bf16 %v2421, %v2421
        %v2430 = vsel %vm854, %v2426, 0
        %v2433 = vsel %vm854, %v2427, 0
        %2435 = vmatprep.subr.bf16.mxu0 0
        %2436 = vmatpush1.bf16.xpose.msra.mxu0 %v2433
        %2437 = vmatprep.subr.bf16.mxu0 0
        %2438 = vmatpush1.bf16.xpose.msra.mxu0 0
        %2439 = vmatprep.subr.bf16.mxu0 0
        %2440 = vmatpush1.bf16.xpose.msra.mxu0 0
        %2441 = vmatprep.subr.bf16.mxu0 0
        %2442 = vmatpush1.bf16.xpose.msra.mxu0 0
        %2443 = vmatprep.subr.bf16.mxu0 0
        %2444 = vmatpush1.bf16.xpose.msra.mxu0 0
        %2445 = vmatprep.subr.bf16.mxu0 0
        %2446 = vmatpush1.bf16.xpose.msra.mxu0 0
        %2447 = vmatprep.subr.bf16.mxu0 0
        %2448 = vmatpush1.bf16.xpose.msra.mxu0 0
        %2449 = vmatprep.subr.bf16.mxu0 0
        %2450 = vmatpush1.bf16.xpose.msra.mxu0 0
        %2451 = vmatprep.subr.bf16.mxu0 0
        %2452 = vmatpush1.bf16.xpose.msra.mxu0 0
        %2453 = vmatprep.subr.bf16.mxu0 0
        %2454 = vmatpush1.bf16.xpose.msra.mxu0 0
        %2455 = vmatprep.subr.bf16.mxu0 0
        %2456 = vmatpush1.bf16.xpose.msra.mxu0 0
        %2457 = vmatprep.subr.bf16.mxu0 0
        %2458 = vmatpush1.bf16.xpose.msra.mxu0 0
        %2459 = vmatprep.subr.bf16.mxu0 0
        %2460 = vmatpush1.bf16.xpose.msra.mxu0 0
        %2461 = vmatprep.subr.bf16.mxu0 0
        %2462 = vmatpush1.bf16.xpose.msra.mxu0 0
        %2463 = vmatprep.subr.bf16.mxu0 0
        %2464 = vmatpush1.bf16.xpose.msra.mxu0 0
        %2465 = vmatprep.subr.bf16.mxu0 0
        %2466 = vmatpush1.bf16.xpose.msra.mxu0 0
        %2467 = vmatprep.mubr.bf16.mxu0 0
        %2468 = vmatmul.mubr.bf16.gmra.mrb[0].mxu0 %v2430
        %v2469 = vpop.f32.mrb[0].mxu0
        %v2470 = vadd.f32 0.0, %v2469
        %v2471 = vpop.f32.mrb[0].mxu0
        %v2472 = vpop.f32.mrb[0].mxu0
        %v2473 = vpop.f32.mrb[0].mxu0
        %2474 = vdwg.mxu0
        %v2475 = vmul.f32 %v2470, 0.17677669
        %v2476 = vsel %vm562, %v2475, -1e+09
        %v2477 = vsel %vm903, %v2476, -inf
        %2478 = vmax.xlane.f32.xlu0 %v2477
        %v2479 = vpop.xlane.xlu0 %2478
        %v2480 = vsub.f32 %v2476, %v2479
        %v2481 = vmul.f32 %v2480, 1.442695
        %v2482 = vpow.pop %v2481
        %v2483 = vsel %vm903, %v2482, 0.0
        %2484 = vadd.xlane.f32.xlu0 %v2483
        %v2485 = vpop.xlane.xlu0 %2484
        %v2486 = vrcp.pop %v2485
        %v2487 = vmul.f32 %v2482, %v2486
        %v2488 = vpack.c.bf16 %v2487, %v2487
        %v2490 = vsel %vm903, %v2488, 0
        %v2493 = vsel %vm919, %v2428, 0
        %2495 = vmatprep.subr.bf16.mxu0 0
        %2496 = vmatpush1.bf16.msra.mxu0 %v2493
        %2497 = vmatprep.subr.bf16.mxu0 0
        %2498 = vmatpush1.bf16.msra.mxu0 0
        %2499 = vmatprep.subr.bf16.mxu0 0
        %2500 = vmatpush1.bf16.msra.mxu0 0
        %2501 = vmatprep.subr.bf16.mxu0 0
        %2502 = vmatpush1.bf16.msra.mxu0 0
        %2503 = vmatprep.subr.bf16.mxu0 0
        %2504 = vmatpush1.bf16.msra.mxu0 0
        %2505 = vmatprep.subr.bf16.mxu0 0
        %2506 = vmatpush1.bf16.msra.mxu0 0
        %2507 = vmatprep.subr.bf16.mxu0 0
        %2508 = vmatpush1.bf16.msra.mxu0 0
        %2509 = vmatprep.subr.bf16.mxu0 0
        %2510 = vmatpush1.bf16.msra.mxu0 0
        %2511 = vmatprep.subr.bf16.mxu0 0
        %2512 = vmatpush1.bf16.msra.mxu0 0
        %2513 = vmatprep.subr.bf16.mxu0 0
        %2514 = vmatpush1.bf16.msra.mxu0 0
        %2515 = vmatprep.subr.bf16.mxu0 0
        %2516 = vmatpush1.bf16.msra.mxu0 0
        %2517 = vmatprep.subr.bf16.mxu0 0
        %2518 = vmatpush1.bf16.msra.mxu0 0
        %2519 = vmatprep.subr.bf16.mxu0 0
        %2520 = vmatpush1.bf16.msra.mxu0 0
        %2521 = vmatprep.subr.bf16.mxu0 0
        %2522 = vmatpush1.bf16.msra.mxu0 0
        %2523 = vmatprep.subr.bf16.mxu0 0
        %2524 = vmatpush1.bf16.msra.mxu0 0
        %2525 = vmatprep.subr.bf16.mxu0 0
        %2526 = vmatpush1.bf16.msra.mxu0 0
        %2527 = vmatprep.mubr.bf16.mxu0 0
        %2528 = vmatmul.mubr.bf16.gmra.mrb[0].mxu0 %v2490
        %v2529 = vpop.f32.mrb[0].mxu0
        %v2530 = vadd.f32 0.0, %v2529
        %v2531 = vpop.f32.mrb[0].mxu0
        %v2532 = vpop.f32.mrb[0].mxu0
        %v2533 = vpop.f32.mrb[0].mxu0
        %2534 = vdwg.mxu0
        %2536 = vrot.lane.b32.xlu0 %v2426, 96
        %v2537 = vpop.permute.xlu0 %2536
        %2539 = vrot.lane.b32.xlu0 %v2427, 96
        %v2540 = vpop.permute.xlu0 %2539
        %v2542 = vsel %vm854, %v2537, 0
        %v2545 = vsel %vm854, %v2540, 0
        %2547 = vmatprep.subr.bf16.mxu0 0
        %2548 = vmatpush1.bf16.xpose.msra.mxu0 %v2545
        %2549 = vmatprep.subr.bf16.mxu0 0
        %2550 = vmatpush1.bf16.xpose.msra.mxu0 0
        %2551 = vmatprep.subr.bf16.mxu0 0
        %2552 = vmatpush1.bf16.xpose.msra.mxu0 0
        %2553 = vmatprep.subr.bf16.mxu0 0
        %2554 = vmatpush1.bf16.xpose.msra.mxu0 0
        %2555 = vmatprep.subr.bf16.mxu0 0
        %2556 = vmatpush1.bf16.xpose.msra.mxu0 0
        %2557 = vmatprep.subr.bf16.mxu0 0
        %2558 = vmatpush1.bf16.xpose.msra.mxu0 0
        %2559 = vmatprep.subr.bf16.mxu0 0
        %2560 = vmatpush1.bf16.xpose.msra.mxu0 0
        %2561 = vmatprep.subr.bf16.mxu0 0
        %2562 = vmatpush1.bf16.xpose.msra.mxu0 0
        %2563 = vmatprep.subr.bf16.mxu0 0
        %2564 = vmatpush1.bf16.xpose.msra.mxu0 0
        %2565 = vmatprep.subr.bf16.mxu0 0
        %2566 = vmatpush1.bf16.xpose.msra.mxu0 0
        %2567 = vmatprep.subr.bf16.mxu0 0
        %2568 = vmatpush1.bf16.xpose.msra.mxu0 0
        %2569 = vmatprep.subr.bf16.mxu0 0
        %2570 = vmatpush1.bf16.xpose.msra.mxu0 0
        %2571 = vmatprep.subr.bf16.mxu0 0
        %2572 = vmatpush1.bf16.xpose.msra.mxu0 0
        %2573 = vmatprep.subr.bf16.mxu0 0
        %2574 = vmatpush1.bf16.xpose.msra.mxu0 0
        %2575 = vmatprep.subr.bf16.mxu0 0
        %2576 = vmatpush1.bf16.xpose.msra.mxu0 0
        %2577 = vmatprep.subr.bf16.mxu0 0
        %2578 = vmatpush1.bf16.xpose.msra.mxu0 0
        %2579 = vmatprep.mubr.bf16.mxu0 0
        %2580 = vmatmul.mubr.bf16.gmra.mrb[0].mxu0 %v2542
        %v2581 = vpop.f32.mrb[0].mxu0
        %v2582 = vadd.f32 0.0, %v2581
        %v2583 = vpop.f32.mrb[0].mxu0
        %v2584 = vpop.f32.mrb[0].mxu0
        %v2585 = vpop.f32.mrb[0].mxu0
        %2586 = vdwg.mxu0
        %v2587 = vmul.f32 %v2582, 0.17677669
        %v2588 = vsel %vm562, %v2587, -1e+09
        %v2589 = vsel %vm903, %v2588, -inf
        %2590 = vmax.xlane.f32.xlu0 %v2589
        %v2591 = vpop.xlane.xlu0 %2590
        %v2592 = vsub.f32 %v2588, %v2591
        %v2593 = vmul.f32 %v2592, 1.442695
        %v2594 = vpow.pop %v2593
        %v2595 = vsel %vm903, %v2594, 0.0
        %2596 = vadd.xlane.f32.xlu0 %v2595
        %v2597 = vpop.xlane.xlu0 %2596
        %v2598 = vrcp.pop %v2597
        %v2599 = vmul.f32 %v2594, %v2598
        %v2600 = vpack.c.bf16 %v2599, %v2599
        %2602 = vrot.lane.b32.xlu0 %v2428, 96
        %v2603 = vpop.permute.xlu0 %2602
        %v2605 = vsel %vm903, %v2600, 0
        %v2608 = vsel %vm919, %v2603, 0
        %2610 = vmatprep.subr.bf16.mxu0 0
        %2611 = vmatpush1.bf16.msra.mxu0 %v2608
        %2612 = vmatprep.subr.bf16.mxu0 0
        %2613 = vmatpush1.bf16.msra.mxu0 0
        %2614 = vmatprep.subr.bf16.mxu0 0
        %2615 = vmatpush1.bf16.msra.mxu0 0
        %2616 = vmatprep.subr.bf16.mxu0 0
        %2617 = vmatpush1.bf16.msra.mxu0 0
        %2618 = vmatprep.subr.bf16.mxu0 0
        %2619 = vmatpush1.bf16.msra.mxu0 0
        %2620 = vmatprep.subr.bf16.mxu0 0
        %2621 = vmatpush1.bf16.msra.mxu0 0
        %2622 = vmatprep.subr.bf16.mxu0 0
        %2623 = vmatpush1.bf16.msra.mxu0 0
        %2624 = vmatprep.subr.bf16.mxu0 0
        %2625 = vmatpush1.bf16.msra.mxu0 0
        %2626 = vmatprep.subr.bf16.mxu0 0
        %2627 = vmatpush1.bf16.msra.mxu0 0
        %2628 = vmatprep.subr.bf16.mxu0 0
        %2629 = vmatpush1.bf16.msra.mxu0 0
        %2630 = vmatprep.subr.bf16.mxu0 0
        %2631 = vmatpush1.bf16.msra.mxu0 0
        %2632 = vmatprep.subr.bf16.mxu0 0
        %2633 = vmatpush1.bf16.msra.mxu0 0
        %2634 = vmatprep.subr.bf16.mxu0 0
        %2635 = vmatpush1.bf16.msra.mxu0 0
        %2636 = vmatprep.subr.bf16.mxu0 0
        %2637 = vmatpush1.bf16.msra.mxu0 0
        %2638 = vmatprep.subr.bf16.mxu0 0
        %2639 = vmatpush1.bf16.msra.mxu0 0
        %2640 = vmatprep.subr.bf16.mxu0 0
        %2641 = vmatpush1.bf16.msra.mxu0 0
        %2642 = vmatprep.mubr.bf16.mxu0 0
        %2643 = vmatmul.mubr.bf16.gmra.mrb[0].mxu0 %v2605
        %v2644 = vpop.f32.mrb[0].mxu0
        %v2645 = vadd.f32 0.0, %v2644
        %v2646 = vpop.f32.mrb[0].mxu0
        %v2647 = vpop.f32.mrb[0].mxu0
        %v2648 = vpop.f32.mrb[0].mxu0
        %2649 = vdwg.mxu0
        %2650 = vrot.lane.b32.xlu0 %v2426, 64
        %v2651 = vpop.permute.xlu0 %2650
        %2652 = vrot.lane.b32.xlu0 %v2427, 64
        %v2653 = vpop.permute.xlu0 %2652
        %v2655 = vsel %vm854, %v2651, 0
        %v2658 = vsel %vm854, %v2653, 0
        %2660 = vmatprep.subr.bf16.mxu0 0
        %2661 = vmatpush1.bf16.xpose.msra.mxu0 %v2658
        %2662 = vmatprep.subr.bf16.mxu0 0
        %2663 = vmatpush1.bf16.xpose.msra.mxu0 0
        %2664 = vmatprep.subr.bf16.mxu0 0
        %2665 = vmatpush1.bf16.xpose.msra.mxu0 0
        %2666 = vmatprep.subr.bf16.mxu0 0
        %2667 = vmatpush1.bf16.xpose.msra.mxu0 0
        %2668 = vmatprep.subr.bf16.mxu0 0
        %2669 = vmatpush1.bf16.xpose.msra.mxu0 0
        %2670 = vmatprep.subr.bf16.mxu0 0
        %2671 = vmatpush1.bf16.xpose.msra.mxu0 0
        %2672 = vmatprep.subr.bf16.mxu0 0
        %2673 = vmatpush1.bf16.xpose.msra.mxu0 0
        %2674 = vmatprep.subr.bf16.mxu0 0
        %2675 = vmatpush1.bf16.xpose.msra.mxu0 0
        %2676 = vmatprep.subr.bf16.mxu0 0
        %2677 = vmatpush1.bf16.xpose.msra.mxu0 0
        %2678 = vmatprep.subr.bf16.mxu0 0
        %2679 = vmatpush1.bf16.xpose.msra.mxu0 0
        %2680 = vmatprep.subr.bf16.mxu0 0
        %2681 = vmatpush1.bf16.xpose.msra.mxu0 0
        %2682 = vmatprep.subr.bf16.mxu0 0
        %2683 = vmatpush1.bf16.xpose.msra.mxu0 0
        %2684 = vmatprep.subr.bf16.mxu0 0
        %2685 = vmatpush1.bf16.xpose.msra.mxu0 0
        %2686 = vmatprep.subr.bf16.mxu0 0
        %2687 = vmatpush1.bf16.xpose.msra.mxu0 0
        %2688 = vmatprep.subr.bf16.mxu0 0
        %2689 = vmatpush1.bf16.xpose.msra.mxu0 0
        %2690 = vmatprep.subr.bf16.mxu0 0
        %2691 = vmatpush1.bf16.xpose.msra.mxu0 0
        %2692 = vmatprep.mubr.bf16.mxu0 0
        %2693 = vmatmul.mubr.bf16.gmra.mrb[0].mxu0 %v2655
        %v2694 = vpop.f32.mrb[0].mxu0
        %v2695 = vadd.f32 0.0, %v2694
        %v2696 = vpop.f32.mrb[0].mxu0
        %v2697 = vpop.f32.mrb[0].mxu0
        %v2698 = vpop.f32.mrb[0].mxu0
        %2699 = vdwg.mxu0
        %v2700 = vmul.f32 %v2695, 0.17677669
        %v2701 = vsel %vm562, %v2700, -1e+09
        %v2702 = vsel %vm903, %v2701, -inf
        %2703 = vmax.xlane.f32.xlu0 %v2702
        %v2704 = vpop.xlane.xlu0 %2703
        %v2705 = vsub.f32 %v2701, %v2704
        %v2706 = vmul.f32 %v2705, 1.442695
        %v2707 = vpow.pop %v2706
        %v2708 = vsel %vm903, %v2707, 0.0
        %2709 = vadd.xlane.f32.xlu0 %v2708
        %v2710 = vpop.xlane.xlu0 %2709
        %v2711 = vrcp.pop %v2710
        %v2712 = vmul.f32 %v2707, %v2711
        %v2713 = vpack.c.bf16 %v2712, %v2712
        %2714 = vrot.lane.b32.xlu0 %v2428, 64
        %v2715 = vpop.permute.xlu0 %2714
        %v2717 = vsel %vm903, %v2713, 0
        %v2720 = vsel %vm919, %v2715, 0
        %2722 = vmatprep.subr.bf16.mxu0 0
        %2723 = vmatpush1.bf16.msra.mxu0 %v2720
        %2724 = vmatprep.subr.bf16.mxu0 0
        %2725 = vmatpush1.bf16.msra.mxu0 0
        %2726 = vmatprep.subr.bf16.mxu0 0
        %2727 = vmatpush1.bf16.msra.mxu0 0
        %2728 = vmatprep.subr.bf16.mxu0 0
        %2729 = vmatpush1.bf16.msra.mxu0 0
        %2730 = vmatprep.subr.bf16.mxu0 0
        %2731 = vmatpush1.bf16.msra.mxu0 0
        %2732 = vmatprep.subr.bf16.mxu0 0
        %2733 = vmatpush1.bf16.msra.mxu0 0
        %2734 = vmatprep.subr.bf16.mxu0 0
        %2735 = vmatpush1.bf16.msra.mxu0 0
        %2736 = vmatprep.subr.bf16.mxu0 0
        %2737 = vmatpush1.bf16.msra.mxu0 0
        %2738 = vmatprep.subr.bf16.mxu0 0
        %2739 = vmatpush1.bf16.msra.mxu0 0
        %2740 = vmatprep.subr.bf16.mxu0 0
        %2741 = vmatpush1.bf16.msra.mxu0 0
        %2742 = vmatprep.subr.bf16.mxu0 0
        %2743 = vmatpush1.bf16.msra.mxu0 0
        %2744 = vmatprep.subr.bf16.mxu0 0
        %2745 = vmatpush1.bf16.msra.mxu0 0
        %2746 = vmatprep.subr.bf16.mxu0 0
        %2747 = vmatpush1.bf16.msra.mxu0 0
        %2748 = vmatprep.subr.bf16.mxu0 0
        %2749 = vmatpush1.bf16.msra.mxu0 0
        %2750 = vmatprep.subr.bf16.mxu0 0
        %2751 = vmatpush1.bf16.msra.mxu0 0
        %2752 = vmatprep.subr.bf16.mxu0 0
        %2753 = vmatpush1.bf16.msra.mxu0 0
        %2754 = vmatprep.mubr.bf16.mxu0 0
        %2755 = vmatmul.mubr.bf16.gmra.mrb[0].mxu0 %v2717
        %v2756 = vpop.f32.mrb[0].mxu0
        %v2757 = vadd.f32 0.0, %v2756
        %v2758 = vpop.f32.mrb[0].mxu0
        %v2759 = vpop.f32.mrb[0].mxu0
        %v2760 = vpop.f32.mrb[0].mxu0
        %2761 = vdwg.mxu0
        %2762 = vrot.lane.b32.xlu0 %v2426, 32
        %v2763 = vpop.permute.xlu0 %2762
        %2764 = vrot.lane.b32.xlu0 %v2427, 32
        %v2765 = vpop.permute.xlu0 %2764
        %v2767 = vsel %vm854, %v2763, 0
        %v2770 = vsel %vm854, %v2765, 0
        %2772 = vmatprep.subr.bf16.mxu0 0
        %2773 = vmatpush1.bf16.xpose.msra.mxu0 %v2770
        %2774 = vmatprep.subr.bf16.mxu0 0
        %2775 = vmatpush1.bf16.xpose.msra.mxu0 0
        %2776 = vmatprep.subr.bf16.mxu0 0
        %2777 = vmatpush1.bf16.xpose.msra.mxu0 0
        %2778 = vmatprep.subr.bf16.mxu0 0
        %2779 = vmatpush1.bf16.xpose.msra.mxu0 0
        %2780 = vmatprep.subr.bf16.mxu0 0
        %2781 = vmatpush1.bf16.xpose.msra.mxu0 0
        %2782 = vmatprep.subr.bf16.mxu0 0
        %2783 = vmatpush1.bf16.xpose.msra.mxu0 0
        %2784 = vmatprep.subr.bf16.mxu0 0
        %2785 = vmatpush1.bf16.xpose.msra.mxu0 0
        %2786 = vmatprep.subr.bf16.mxu0 0
        %2787 = vmatpush1.bf16.xpose.msra.mxu0 0
        %2788 = vmatprep.subr.bf16.mxu0 0
        %2789 = vmatpush1.bf16.xpose.msra.mxu0 0
        %2790 = vmatprep.subr.bf16.mxu0 0
        %2791 = vmatpush1.bf16.xpose.msra.mxu0 0
        %2792 = vmatprep.subr.bf16.mxu0 0
        %2793 = vmatpush1.bf16.xpose.msra.mxu0 0
        %2794 = vmatprep.subr.bf16.mxu0 0
        %2795 = vmatpush1.bf16.xpose.msra.mxu0 0
        %2796 = vmatprep.subr.bf16.mxu0 0
        %2797 = vmatpush1.bf16.xpose.msra.mxu0 0
        %2798 = vmatprep.subr.bf16.mxu0 0
        %2799 = vmatpush1.bf16.xpose.msra.mxu0 0
        %2800 = vmatprep.subr.bf16.mxu0 0
        %2801 = vmatpush1.bf16.xpose.msra.mxu0 0
        %2802 = vmatprep.subr.bf16.mxu0 0
        %2803 = vmatpush1.bf16.xpose.msra.mxu0 0
        %2804 = vmatprep.mubr.bf16.mxu0 0
        %2805 = vmatmul.mubr.bf16.gmra.mrb[0].mxu0 %v2767
        %v2806 = vpop.f32.mrb[0].mxu0
        %v2807 = vadd.f32 0.0, %v2806
        %v2808 = vpop.f32.mrb[0].mxu0
        %v2809 = vpop.f32.mrb[0].mxu0
        %v2810 = vpop.f32.mrb[0].mxu0
        %2811 = vdwg.mxu0
        %v2812 = vmul.f32 %v2807, 0.17677669
        %v2813 = vsel %vm562, %v2812, -1e+09
        %v2814 = vsel %vm903, %v2813, -inf
        %2815 = vmax.xlane.f32.xlu0 %v2814
        %v2816 = vpop.xlane.xlu0 %2815
        %v2817 = vsub.f32 %v2813, %v2816
        %v2818 = vmul.f32 %v2817, 1.442695
        %v2819 = vpow.pop %v2818
        %v2820 = vsel %vm903, %v2819, 0.0
        %2821 = vadd.xlane.f32.xlu0 %v2820
        %v2822 = vpop.xlane.xlu0 %2821
        %v2823 = vrcp.pop %v2822
        %v2824 = vmul.f32 %v2819, %v2823
        %v2825 = vpack.c.bf16 %v2824, %v2824
        %2826 = vrot.lane.b32.xlu0 %v2428, 32
        %v2827 = vpop.permute.xlu0 %2826
        %v2829 = vsel %vm903, %v2825, 0
        %v2832 = vsel %vm919, %v2827, 0
        %2834 = vmatprep.subr.bf16.mxu0 0
        %2835 = vmatpush1.bf16.msra.mxu0 %v2832
        %2836 = vmatprep.subr.bf16.mxu0 0
        %2837 = vmatpush1.bf16.msra.mxu0 0
        %2838 = vmatprep.subr.bf16.mxu0 0
        %2839 = vmatpush1.bf16.msra.mxu0 0
        %2840 = vmatprep.subr.bf16.mxu0 0
        %2841 = vmatpush1.bf16.msra.mxu0 0
        %2842 = vmatprep.subr.bf16.mxu0 0
        %2843 = vmatpush1.bf16.msra.mxu0 0
        %2844 = vmatprep.subr.bf16.mxu0 0
        %2845 = vmatpush1.bf16.msra.mxu0 0
        %2846 = vmatprep.subr.bf16.mxu0 0
        %2847 = vmatpush1.bf16.msra.mxu0 0
        %2848 = vmatprep.subr.bf16.mxu0 0
        %2849 = vmatpush1.bf16.msra.mxu0 0
        %2850 = vmatprep.subr.bf16.mxu0 0
        %2851 = vmatpush1.bf16.msra.mxu0 0
        %2852 = vmatprep.subr.bf16.mxu0 0
        %2853 = vmatpush1.bf16.msra.mxu0 0
        %2854 = vmatprep.subr.bf16.mxu0 0
        %2855 = vmatpush1.bf16.msra.mxu0 0
        %2856 = vmatprep.subr.bf16.mxu0 0
        %2857 = vmatpush1.bf16.msra.mxu0 0
        %2858 = vmatprep.subr.bf16.mxu0 0
        %2859 = vmatpush1.bf16.msra.mxu0 0
        %2860 = vmatprep.subr.bf16.mxu0 0
        %2861 = vmatpush1.bf16.msra.mxu0 0
        %2862 = vmatprep.subr.bf16.mxu0 0
        %2863 = vmatpush1.bf16.msra.mxu0 0
        %2864 = vmatprep.subr.bf16.mxu0 0
        %2865 = vmatpush1.bf16.msra.mxu0 0
        %2866 = vmatprep.mubr.bf16.mxu0 0
        %2867 = vmatmul.mubr.bf16.gmra.mrb[0].mxu0 %v2829
        %v2868 = vpop.f32.mrb[0].mxu0
        %v2869 = vadd.f32 0.0, %v2868
        %v2870 = vpop.f32.mrb[0].mxu0
        %v2871 = vpop.f32.mrb[0].mxu0
        %v2872 = vpop.f32.mrb[0].mxu0
        %2873 = vdwg.mxu0
        %2875 = vrot.lane.b32.xlu0 %v2645, 32
        %v2876 = vpop.permute.xlu0 %2875
        %2879 = vrot.lane.b32.xlu0 %v2757, 64
        %v2880 = vpop.permute.xlu0 %2879
        %2883 = vrot.lane.b32.xlu0 %v2869, 96
        %v2884 = vpop.permute.xlu0 %2883
        %v2886 = vsel %vm854, %v2530, %v2876
        %v2887 = vsel %vm1315, %v2886, %v2880
        %v2888 = vsel %vm1317, %v2887, %v2884
        %v2889 = vpack.c.bf16 %v2888, %v2888
        %s2890 = scalar_lea.vmem %s6, 64
        %v2891 = vld [vmem:[%s2890] sm:$0xf]
        %v2892 = vld [vmem:[%s2890 + $0x4] sm:$0xf]
        %v2893 = vld [vmem:[%s2890 + $0x8] sm:$0xf]
        %v2894 = vld [vmem:[%s2890 + $0xc] sm:$0xf]
        %v2895 = vld [vmem:[%s2890 + $0x10] sm:$0xf]
        %v2896 = vld [vmem:[%s2890 + $0x14] sm:$0xf]
        %v2897 = vld [vmem:[%s2890 + $0x18] sm:$0xf]
        %v2898 = vld [vmem:[%s2890 + $0x1c] sm:$0xf]
        %v2899 = vld [vmem:[%s2890 + $0x20] sm:$0xf]
        %v2900 = vld [vmem:[%s2890 + $0x24] sm:$0xf]
        %v2901 = vld [vmem:[%s2890 + $0x28] sm:$0xf]
        %v2902 = vld [vmem:[%s2890 + $0x2c] sm:$0xf]
        %v2903 = vld [vmem:[%s2890 + $0x30] sm:$0xf]
        %v2904 = vld [vmem:[%s2890 + $0x34] sm:$0xf]
        %v2905 = vld [vmem:[%s2890 + $0x38] sm:$0xf]
        %v2906 = vld [vmem:[%s2890 + $0x3c] sm:$0xf]
        %s2907 = scalar_lea.vmem %s7, 1
        %v2908 = vld [vmem:[%s2907] sm:$0x1]
        %v2910 = vlaneseq
        %v2911 = vshrl.u32 %v2910, 7
        %v2912 = vsub.s32 0, %v2911
        %v2913 = vrot.slane %v2908, %v2912
        %v2931 = vunpack.c.l.b16 %v2891
        %v2932 = vunpack.c.l.b16 %v2892
        %v2933 = vunpack.c.l.b16 %v2893
        %v2934 = vunpack.c.l.b16 %v2894
        %v2935 = vunpack.c.l.b16 %v2895
        %v2936 = vunpack.c.l.b16 %v2896
        %v2937 = vunpack.c.l.b16 %v2897
        %v2938 = vunpack.c.l.b16 %v2898
        %v2939 = vunpack.c.l.b16 %v2899
        %v2940 = vunpack.c.l.b16 %v2900
        %v2941 = vunpack.c.l.b16 %v2901
        %v2942 = vunpack.c.l.b16 %v2902
        %v2943 = vunpack.c.l.b16 %v2903
        %v2944 = vunpack.c.l.b16 %v2904
        %v2945 = vunpack.c.l.b16 %v2905
        %v2946 = vunpack.c.l.b16 %v2906
        %v2947 = vpack.c.b16 %v2932, %v2931
        %v2948 = vpack.c.b16 %v2934, %v2933
        %v2949 = vpack.c.b16 %v2936, %v2935
        %v2950 = vpack.c.b16 %v2938, %v2937
        %v2951 = vpack.c.b16 %v2940, %v2939
        %v2952 = vpack.c.b16 %v2942, %v2941
        %v2953 = vpack.c.b16 %v2944, %v2943
        %v2954 = vpack.c.b16 %v2946, %v2945
        %2963 = vmatprep.subr.bf16.mxu0 0
        %2964 = vmatpush1.bf16.msra.mxu0 %v2947
        %2965 = vmatprep.subr.bf16.mxu0 0
        %2966 = vmatpush1.bf16.msra.mxu0 %v2948
        %2967 = vmatprep.subr.bf16.mxu0 0
        %2968 = vmatpush1.bf16.msra.mxu0 %v2949
        %2969 = vmatprep.subr.bf16.mxu0 0
        %2970 = vmatpush1.bf16.msra.mxu0 %v2950
        %2971 = vmatprep.subr.bf16.mxu0 0
        %2972 = vmatpush1.bf16.msra.mxu0 %v2951
        %2973 = vmatprep.subr.bf16.mxu0 0
        %2974 = vmatpush1.bf16.msra.mxu0 %v2952
        %2975 = vmatprep.subr.bf16.mxu0 0
        %2976 = vmatpush1.bf16.msra.mxu0 %v2953
        %2977 = vmatprep.subr.bf16.mxu0 0
        %2978 = vmatpush1.bf16.msra.mxu0 %v2954
        %2979 = vmatprep.subr.bf16.mxu0 0
        %2980 = vmatpush1.bf16.msra.mxu0 0
        %2981 = vmatprep.subr.bf16.mxu0 0
        %2982 = vmatpush1.bf16.msra.mxu0 0
        %2983 = vmatprep.subr.bf16.mxu0 0
        %2984 = vmatpush1.bf16.msra.mxu0 0
        %2985 = vmatprep.subr.bf16.mxu0 0
        %2986 = vmatpush1.bf16.msra.mxu0 0
        %2987 = vmatprep.subr.bf16.mxu0 0
        %2988 = vmatpush1.bf16.msra.mxu0 0
        %2989 = vmatprep.subr.bf16.mxu0 0
        %2990 = vmatpush1.bf16.msra.mxu0 0
        %2991 = vmatprep.subr.bf16.mxu0 0
        %2992 = vmatpush1.bf16.msra.mxu0 0
        %2993 = vmatprep.subr.bf16.mxu0 0
        %2994 = vmatpush1.bf16.msra.mxu0 0
        %2995 = vmatprep.mubr.bf16.mxu0 0
        %2996 = vmatmul.mubr.bf16.gmra.mrb[0].mxu0 %v2889
        %v2997 = vpop.f32.mrb[0].mxu0
        %v2998 = vadd.f32 %v2913, %v2997
        %v2999 = vpop.f32.mrb[0].mxu0
        %v3000 = vpop.f32.mrb[0].mxu0
        %v3001 = vpop.f32.mrb[0].mxu0
        %3002 = vdwg.mxu0
        %v3003 = vadd.f32 %v2998, %v2135
        %s3004 = scalar_lea.vmem %s8, 1
        %v3005 = vld [vmem:[%s3004] sm:$0x1]
        %s3006 = scalar_lea.vmem %s9, 1
        %v3007 = vld [vmem:[%s3006] sm:$0x1]
        %3008 = vadd.xlane.f32.xlu0 %v3003
        %v3009 = vpop.xlane.xlu0 %3008
        %v3010 = vmul.f32 %v3009, %v568
        %v3011 = vsub.f32 %v3003, %v3010
        %v3012 = vmul.f32 %v3011, %v3011
        %3013 = vadd.xlane.f32.xlu0 %v3012
        %v3014 = vpop.xlane.xlu0 %3013
        %v3015 = vmul.f32 %v3014, %v568
        %v3016 = vadd.f32 %v3015, 1e-05
        %v3017 = vrsqrt.pop %v3016
        %v3018 = vmul.f32 %v3011, %v3017
        %v3020 = vlaneseq
        %v3021 = vshrl.u32 %v3020, 7
        %v3022 = vsub.s32 0, %v3021
        %v3023 = vrot.slane %v3005, %v3022
        %v3025 = vmul.f32 %v3018, %v3023
        %v3027 = vlaneseq
        %v3028 = vshrl.u32 %v3027, 7
        %v3029 = vsub.s32 0, %v3028
        %v3030 = vrot.slane %v3007, %v3029
        %v3032 = vadd.f32 %v3025, %v3030
        %v3033 = vpack.c.bf16 %v3032, %v3032
        %s3034 = scalar_lea.vmem %s10, 256
        %v3035 = vld [vmem:[%s3034] sm:$0xff]
        %v3036 = vld [vmem:[%s3034 + $0x8] sm:$0xff]
        %v3037 = vld [vmem:[%s3034 + $0x10] sm:$0xff]
        %v3038 = vld [vmem:[%s3034 + $0x18] sm:$0xff]
        %v3039 = vld [vmem:[%s3034 + $0x20] sm:$0xff]
        %v3040 = vld [vmem:[%s3034 + $0x28] sm:$0xff]
        %v3041 = vld [vmem:[%s3034 + $0x30] sm:$0xff]
        %v3042 = vld [vmem:[%s3034 + $0x38] sm:$0xff]
        %v3043 = vld [vmem:[%s3034 + $0x40] sm:$0xff]
        %v3044 = vld [vmem:[%s3034 + $0x48] sm:$0xff]
        %v3045 = vld [vmem:[%s3034 + $0x50] sm:$0xff]
        %v3046 = vld [vmem:[%s3034 + $0x58] sm:$0xff]
        %v3047 = vld [vmem:[%s3034 + $0x60] sm:$0xff]
        %v3048 = vld [vmem:[%s3034 + $0x68] sm:$0xff]
        %v3049 = vld [vmem:[%s3034 + $0x70] sm:$0xff]
        %v3050 = vld [vmem:[%s3034 + $0x78] sm:$0xff]
        %v3051 = vld [vmem:[%s3034 + $0x80] sm:$0xff]
        %v3052 = vld [vmem:[%s3034 + $0x88] sm:$0xff]
        %v3053 = vld [vmem:[%s3034 + $0x90] sm:$0xff]
        %v3054 = vld [vmem:[%s3034 + $0x98] sm:$0xff]
        %v3055 = vld [vmem:[%s3034 + $0xa0] sm:$0xff]
        %v3056 = vld [vmem:[%s3034 + $0xa8] sm:$0xff]
        %v3057 = vld [vmem:[%s3034 + $0xb0] sm:$0xff]
        %v3058 = vld [vmem:[%s3034 + $0xb8] sm:$0xff]
        %v3059 = vld [vmem:[%s3034 + $0xc0] sm:$0xff]
        %v3060 = vld [vmem:[%s3034 + $0xc8] sm:$0xff]
        %v3061 = vld [vmem:[%s3034 + $0xd0] sm:$0xff]
        %v3062 = vld [vmem:[%s3034 + $0xd8] sm:$0xff]
        %v3063 = vld [vmem:[%s3034 + $0xe0] sm:$0xff]
        %v3064 = vld [vmem:[%s3034 + $0xe8] sm:$0xff]
        %v3065 = vld [vmem:[%s3034 + $0xf0] sm:$0xff]
        %v3066 = vld [vmem:[%s3034 + $0xf8] sm:$0xff]
        %s3067 = scalar_lea.vmem %s11, 4
        %v3068 = vld [vmem:[%s3067] sm:$0xf]
        %v3070 = vlaneseq
        %v3071 = vshrl.u32 %v3070, 7
        %v3072 = vsub.s32 0, %v3071
        %v3073 = vrot.slane %v3068, %v3072
        %v3074 = vlaneseq
        %v3075 = vshrl.u32 %v3074, 7
        %v3076 = vsub.s32 1, %v3075
        %v3077 = vrot.slane %v3068, %v3076
        %v3078 = vlaneseq
        %v3079 = vshrl.u32 %v3078, 7
        %v3080 = vsub.s32 2, %v3079
        %v3081 = vrot.slane %v3068, %v3080
        %v3082 = vlaneseq
        %v3083 = vshrl.u32 %v3082, 7
        %v3084 = vsub.s32 3, %v3083
        %v3085 = vrot.slane %v3068, %v3084
        %v3122 = vunpack.c.l.b16 %v3035
        %v3123 = vunpack.c.h.b16 %v3035
        %v3124 = vunpack.c.l.b16 %v3036
        %v3125 = vunpack.c.h.b16 %v3036
        %v3126 = vunpack.c.l.b16 %v3037
        %v3127 = vunpack.c.h.b16 %v3037
        %v3128 = vunpack.c.l.b16 %v3038
        %v3129 = vunpack.c.h.b16 %v3038
        %v3130 = vunpack.c.l.b16 %v3039
        %v3131 = vunpack.c.h.b16 %v3039
        %v3132 = vunpack.c.l.b16 %v3040
        %v3133 = vunpack.c.h.b16 %v3040
        %v3134 = vunpack.c.l.b16 %v3041
        %v3135 = vunpack.c.h.b16 %v3041
        %v3136 = vunpack.c.l.b16 %v3042
        %v3137 = vunpack.c.h.b16 %v3042
        %v3138 = vunpack.c.l.b16 %v3043
        %v3139 = vunpack.c.h.b16 %v3043
        %v3140 = vunpack.c.l.b16 %v3044
        %v3141 = vunpack.c.h.b16 %v3044
        %v3142 = vunpack.c.l.b16 %v3045
        %v3143 = vunpack.c.h.b16 %v3045
        %v3144 = vunpack.c.l.b16 %v3046
        %v3145 = vunpack.c.h.b16 %v3046
        %v3146 = vunpack.c.l.b16 %v3047
        %v3147 = vunpack.c.h.b16 %v3047
        %v3148 = vunpack.c.l.b16 %v3048
        %v3149 = vunpack.c.h.b16 %v3048
        %v3150 = vunpack.c.l.b16 %v3049
        %v3151 = vunpack.c.h.b16 %v3049
        %v3152 = vunpack.c.l.b16 %v3050
        %v3153 = vunpack.c.h.b16 %v3050
        %v3154 = vunpack.c.l.b16 %v3051
        %v3155 = vunpack.c.h.b16 %v3051
        %v3156 = vunpack.c.l.b16 %v3052
        %v3157 = vunpack.c.h.b16 %v3052
        %v3158 = vunpack.c.l.b16 %v3053
        %v3159 = vunpack.c.h.b16 %v3053
        %v3160 = vunpack.c.l.b16 %v3054
        %v3161 = vunpack.c.h.b16 %v3054
        %v3162 = vunpack.c.l.b16 %v3055
        %v3163 = vunpack.c.h.b16 %v3055
        %v3164 = vunpack.c.l.b16 %v3056
        %v3165 = vunpack.c.h.b16 %v3056
        %v3166 = vunpack.c.l.b16 %v3057
        %v3167 = vunpack.c.h.b16 %v3057
        %v3168 = vunpack.c.l.b16 %v3058
        %v3169 = vunpack.c.h.b16 %v3058
        %v3170 = vunpack.c.l.b16 %v3059
        %v3171 = vunpack.c.h.b16 %v3059
        %v3172 = vunpack.c.l.b16 %v3060
        %v3173 = vunpack.c.h.b16 %v3060
        %v3174 = vunpack.c.l.b16 %v3061
        %v3175 = vunpack.c.h.b16 %v3061
        %v3176 = vunpack.c.l.b16 %v3062
        %v3177 = vunpack.c.h.b16 %v3062
        %v3178 = vunpack.c.l.b16 %v3063
        %v3179 = vunpack.c.h.b16 %v3063
        %v3180 = vunpack.c.l.b16 %v3064
        %v3181 = vunpack.c.h.b16 %v3064
        %v3182 = vunpack.c.l.b16 %v3065
        %v3183 = vunpack.c.h.b16 %v3065
        %v3184 = vunpack.c.l.b16 %v3066
        %v3185 = vunpack.c.h.b16 %v3066
        %v3186 = vpack.c.b16 %v3126, %v3122
        %v3187 = vpack.c.b16 %v3127, %v3123
        %v3188 = vpack.c.b16 %v3128, %v3124
        %v3189 = vpack.c.b16 %v3129, %v3125
        %v3190 = vpack.c.b16 %v3134, %v3130
        %v3191 = vpack.c.b16 %v3135, %v3131
        %v3192 = vpack.c.b16 %v3136, %v3132
        %v3193 = vpack.c.b16 %v3137, %v3133
        %v3194 = vpack.c.b16 %v3142, %v3138
        %v3195 = vpack.c.b16 %v3143, %v3139
        %v3196 = vpack.c.b16 %v3144, %v3140
        %v3197 = vpack.c.b16 %v3145, %v3141
        %v3198 = vpack.c.b16 %v3150, %v3146
        %v3199 = vpack.c.b16 %v3151, %v3147
        %v3200 = vpack.c.b16 %v3152, %v3148
        %v3201 = vpack.c.b16 %v3153, %v3149
        %v3202 = vpack.c.b16 %v3158, %v3154
        %v3203 = vpack.c.b16 %v3159, %v3155
        %v3204 = vpack.c.b16 %v3160, %v3156
        %v3205 = vpack.c.b16 %v3161, %v3157
        %v3206 = vpack.c.b16 %v3166, %v3162
        %v3207 = vpack.c.b16 %v3167, %v3163
        %v3208 = vpack.c.b16 %v3168, %v3164
        %v3209 = vpack.c.b16 %v3169, %v3165
        %v3210 = vpack.c.b16 %v3174, %v3170
        %v3211 = vpack.c.b16 %v3175, %v3171
        %v3212 = vpack.c.b16 %v3176, %v3172
        %v3213 = vpack.c.b16 %v3177, %v3173
        %v3214 = vpack.c.b16 %v3182, %v3178
        %v3215 = vpack.c.b16 %v3183, %v3179
        %v3216 = vpack.c.b16 %v3184, %v3180
        %v3217 = vpack.c.b16 %v3185, %v3181
        %3250 = vmatprep.subr.bf16.mxu0 %v3187
        %3251 = vmatpush1.bf16.msra.mxu0 %v3186
        %3252 = vmatprep.subr.bf16.mxu0 %v3191
        %3253 = vmatpush1.bf16.msra.mxu0 %v3190
        %3254 = vmatprep.subr.bf16.mxu0 %v3195
        %3255 = vmatpush1.bf16.msra.mxu0 %v3194
        %3256 = vmatprep.subr.bf16.mxu0 %v3199
        %3257 = vmatpush1.bf16.msra.mxu0 %v3198
        %3258 = vmatprep.subr.bf16.mxu0 %v3203
        %3259 = vmatpush1.bf16.msra.mxu0 %v3202
        %3260 = vmatprep.subr.bf16.mxu0 %v3207
        %3261 = vmatpush1.bf16.msra.mxu0 %v3206
        %3262 = vmatprep.subr.bf16.mxu0 %v3211
        %3263 = vmatpush1.bf16.msra.mxu0 %v3210
        %3264 = vmatprep.subr.bf16.mxu0 %v3215
        %3265 = vmatpush1.bf16.msra.mxu0 %v3214
        %3266 = vmatprep.subr.bf16.mxu0 0
        %3267 = vmatpush1.bf16.msra.mxu0 0
        %3268 = vmatprep.subr.bf16.mxu0 0
        %3269 = vmatpush1.bf16.msra.mxu0 0
        %3270 = vmatprep.subr.bf16.mxu0 0
        %3271 = vmatpush1.bf16.msra.mxu0 0
        %3272 = vmatprep.subr.bf16.mxu0 0
        %3273 = vmatpush1.bf16.msra.mxu0 0
        %3274 = vmatprep.subr.bf16.mxu0 0
        %3275 = vmatpush1.bf16.msra.mxu0 0
        %3276 = vmatprep.subr.bf16.mxu0 0
        %3277 = vmatpush1.bf16.msra.mxu0 0
        %3278 = vmatprep.subr.bf16.mxu0 0
        %3279 = vmatpush1.bf16.msra.mxu0 0
        %3280 = vmatprep.subr.bf16.mxu0 0
        %3281 = vmatpush1.bf16.msra.mxu0 0
        %3282 = vmatprep.mubr.bf16.mxu0 0
        %3283 = vmatmul.mubr.bf16.gmra.mrb[0].mxu0 %v3033
        %v3284 = vpop.f32.mrb[0].mxu0
        %v3285 = vadd.f32 %v3073, %v3284
        %v3286 = vpop.f32.mrb[0].mxu0
        %v3287 = vadd.f32 %v3077, %v3286
        %v3288 = vpop.f32.mrb[0].mxu0
        %v3289 = vpop.f32.mrb[0].mxu0
        %3290 = vdwg.mxu0
        %3291 = vmatprep.subr.bf16.mxu0 %v3189
        %3292 = vmatpush1.bf16.msra.mxu0 %v3188
        %3293 = vmatprep.subr.bf16.mxu0 %v3193
        %3294 = vmatpush1.bf16.msra.mxu0 %v3192
        %3295 = vmatprep.subr.bf16.mxu0 %v3197
        %3296 = vmatpush1.bf16.msra.mxu0 %v3196
        %3297 = vmatprep.subr.bf16.mxu0 %v3201
        %3298 = vmatpush1.bf16.msra.mxu0 %v3200
        %3299 = vmatprep.subr.bf16.mxu0 %v3205
        %3300 = vmatpush1.bf16.msra.mxu0 %v3204
        %3301 = vmatprep.subr.bf16.mxu0 %v3209
        %3302 = vmatpush1.bf16.msra.mxu0 %v3208
        %3303 = vmatprep.subr.bf16.mxu0 %v3213
        %3304 = vmatpush1.bf16.msra.mxu0 %v3212
        %3305 = vmatprep.subr.bf16.mxu0 %v3217
        %3306 = vmatpush1.bf16.msra.mxu0 %v3216
        %3307 = vmatprep.subr.bf16.mxu0 0
        %3308 = vmatpush1.bf16.msra.mxu0 0
        %3309 = vmatprep.subr.bf16.mxu0 0
        %3310 = vmatpush1.bf16.msra.mxu0 0
        %3311 = vmatprep.subr.bf16.mxu0 0
        %3312 = vmatpush1.bf16.msra.mxu0 0
        %3313 = vmatprep.subr.bf16.mxu0 0
        %3314 = vmatpush1.bf16.msra.mxu0 0
        %3315 = vmatprep.subr.bf16.mxu0 0
        %3316 = vmatpush1.bf16.msra.mxu0 0
        %3317 = vmatprep.subr.bf16.mxu0 0
        %3318 = vmatpush1.bf16.msra.mxu0 0
        %3319 = vmatprep.subr.bf16.mxu0 0
        %3320 = vmatpush1.bf16.msra.mxu0 0
        %3321 = vmatprep.subr.bf16.mxu0 0
        %3322 = vmatpush1.bf16.msra.mxu0 0
        %3323 = vmatprep.mubr.bf16.mxu0 0
        %3324 = vmatmul.mubr.bf16.gmra.mrb[0].mxu0 %v3033
        %v3325 = vpop.f32.mrb[0].mxu0
        %v3326 = vadd.f32 %v3081, %v3325
        %v3327 = vpop.f32.mrb[0].mxu0
        %v3328 = vadd.f32 %v3085, %v3327
        %v3329 = vpop.f32.mrb[0].mxu0
        %v3330 = vpop.f32.mrb[0].mxu0
        %3331 = vdwg.mxu0
        %v3332 = vmul.f32 %v3285, 1.702
        %v3333 = vmul.f32 %v3287, 1.702
        %v3334 = vmul.f32 %v3326, 1.702
        %v3335 = vmul.f32 %v3328, 1.702
        %v3336 = vxor.u32 %v3332, 2147483648
        %v3337 = vxor.u32 %v3333, 2147483648
        %v3338 = vxor.u32 %v3334, 2147483648
        %v3339 = vxor.u32 %v3335, 2147483648
        %v3340 = vmul.f32 %v3336, 1.442695
        %v3341 = vpow.pop %v3340
        %v3342 = vmul.f32 %v3337, 1.442695
        %v3343 = vpow.pop %v3342
        %v3344 = vmul.f32 %v3338, 1.442695
        %v3345 = vpow.pop %v3344
        %v3346 = vmul.f32 %v3339, 1.442695
        %v3347 = vpow.pop %v3346
        %v3348 = vadd.f32 %v3341, 1.0
        %v3349 = vadd.f32 %v3343, 1.0
        %v3350 = vadd.f32 %v3345, 1.0
        %v3351 = vadd.f32 %v3347, 1.0
        %v3352 = vrcp.pop %v3348
        %v3353 = vmul.f32 1.0, %v3352
        %v3354 = vrcp.pop %v3349
        %v3355 = vmul.f32 1.0, %v3354
        %v3356 = vrcp.pop %v3350
        %v3357 = vmul.f32 1.0, %v3356
        %v3358 = vrcp.pop %v3351
        %v3359 = vmul.f32 1.0, %v3358
        %v3360 = vmul.f32 %v3285, %v3353
        %v3361 = vmul.f32 %v3287, %v3355
        %v3362 = vmul.f32 %v3326, %v3357
        %v3363 = vmul.f32 %v3328, %v3359
        %v3364 = vpack.c.bf16 %v3360, %v3360
        %v3365 = vpack.c.bf16 %v3361, %v3361
        %v3366 = vpack.c.bf16 %v3362, %v3362
        %v3367 = vpack.c.bf16 %v3363, %v3363
        %s3368 = scalar_lea.vmem %s12, 256
        %v3369 = vld [vmem:[%s3368] sm:$0xf]
        %v3370 = vld [vmem:[%s3368 + $0x4] sm:$0xf]
        %v3371 = vld [vmem:[%s3368 + $0x8] sm:$0xf]
        %v3372 = vld [vmem:[%s3368 + $0xc] sm:$0xf]
        %v3373 = vld [vmem:[%s3368 + $0x10] sm:$0xf]
        %v3374 = vld [vmem:[%s3368 + $0x14] sm:$0xf]
        %v3375 = vld [vmem:[%s3368 + $0x18] sm:$0xf]
        %v3376 = vld [vmem:[%s3368 + $0x1c] sm:$0xf]
        %v3377 = vld [vmem:[%s3368 + $0x20] sm:$0xf]
        %v3378 = vld [vmem:[%s3368 + $0x24] sm:$0xf]
        %v3379 = vld [vmem:[%s3368 + $0x28] sm:$0xf]
        %v3380 = vld [vmem:[%s3368 + $0x2c] sm:$0xf]
        %v3381 = vld [vmem:[%s3368 + $0x30] sm:$0xf]
        %v3382 = vld [vmem:[%s3368 + $0x34] sm:$0xf]
        %v3383 = vld [vmem:[%s3368 + $0x38] sm:$0xf]
        %v3384 = vld [vmem:[%s3368 + $0x3c] sm:$0xf]
        %v3385 = vld [vmem:[%s3368 + $0x40] sm:$0xf]
        %v3386 = vld [vmem:[%s3368 + $0x44] sm:$0xf]
        %v3387 = vld [vmem:[%s3368 + $0x48] sm:$0xf]
        %v3388 = vld [vmem:[%s3368 + $0x4c] sm:$0xf]
        %v3389 = vld [vmem:[%s3368 + $0x50] sm:$0xf]
        %v3390 = vld [vmem:[%s3368 + $0x54] sm:$0xf]
        %v3391 = vld [vmem:[%s3368 + $0x58] sm:$0xf]
        %v3392 = vld [vmem:[%s3368 + $0x5c] sm:$0xf]
        %v3393 = vld [vmem:[%s3368 + $0x60] sm:$0xf]
        %v3394 = vld [vmem:[%s3368 + $0x64] sm:$0xf]
        %v3395 = vld [vmem:[%s3368 + $0x68] sm:$0xf]
        %v3396 = vld [vmem:[%s3368 + $0x6c] sm:$0xf]
        %v3397 = vld [vmem:[%s3368 + $0x70] sm:$0xf]
        %v3398 = vld [vmem:[%s3368 + $0x74] sm:$0xf]
        %v3399 = vld [vmem:[%s3368 + $0x78] sm:$0xf]
        %v3400 = vld [vmem:[%s3368 + $0x7c] sm:$0xf]
        %v3401 = vld [vmem:[%s3368 + $0x80] sm:$0xf]
        %v3402 = vld [vmem:[%s3368 + $0x84] sm:$0xf]
        %v3403 = vld [vmem:[%s3368 + $0x88] sm:$0xf]
        %v3404 = vld [vmem:[%s3368 + $0x8c] sm:$0xf]
        %v3405 = vld [vmem:[%s3368 + $0x90] sm:$0xf]
        %v3406 = vld [vmem:[%s3368 + $0x94] sm:$0xf]
        %v3407 = vld [vmem:[%s3368 + $0x98] sm:$0xf]
        %v3408 = vld [vmem:[%s3368 + $0x9c] sm:$0xf]
        %v3409 = vld [vmem:[%s3368 + $0xa0] sm:$0xf]
        %v3410 = vld [vmem:[%s3368 + $0xa4] sm:$0xf]
        %v3411 = vld [vmem:[%s3368 + $0xa8] sm:$0xf]
        %v3412 = vld [vmem:[%s3368 + $0xac] sm:$0xf]
        %v3413 = vld [vmem:[%s3368 + $0xb0] sm:$0xf]
        %v3414 = vld [vmem:[%s3368 + $0xb4] sm:$0xf]
        %v3415 = vld [vmem:[%s3368 + $0xb8] sm:$0xf]
        %v3416 = vld [vmem:[%s3368 + $0xbc] sm:$0xf]
        %v3417 = vld [vmem:[%s3368 + $0xc0] sm:$0xf]
        %v3418 = vld [vmem:[%s3368 + $0xc4] sm:$0xf]
        %v3419 = vld [vmem:[%s3368 + $0xc8] sm:$0xf]
        %v3420 = vld [vmem:[%s3368 + $0xcc] sm:$0xf]
        %v3421 = vld [vmem:[%s3368 + $0xd0] sm:$0xf]
        %v3422 = vld [vmem:[%s3368 + $0xd4] sm:$0xf]
        %v3423 = vld [vmem:[%s3368 + $0xd8] sm:$0xf]
        %v3424 = vld [vmem:[%s3368 + $0xdc] sm:$0xf]
        %v3425 = vld [vmem:[%s3368 + $0xe0] sm:$0xf]
        %v3426 = vld [vmem:[%s3368 + $0xe4] sm:$0xf]
        %v3427 = vld [vmem:[%s3368 + $0xe8] sm:$0xf]
        %v3428 = vld [vmem:[%s3368 + $0xec] sm:$0xf]
        %v3429 = vld [vmem:[%s3368 + $0xf0] sm:$0xf]
        %v3430 = vld [vmem:[%s3368 + $0xf4] sm:$0xf]
        %v3431 = vld [vmem:[%s3368 + $0xf8] sm:$0xf]
        %v3432 = vld [vmem:[%s3368 + $0xfc] sm:$0xf]
        %s3433 = scalar_lea.vmem %s13, 1
        %v3434 = vld [vmem:[%s3433] sm:$0x1]
        %v3436 = vlaneseq
        %v3437 = vshrl.u32 %v3436, 7
        %v3438 = vsub.s32 0, %v3437
        %v3439 = vrot.slane %v3434, %v3438
        %v3505 = vunpack.c.l.b16 %v3369
        %v3506 = vunpack.c.l.b16 %v3370
        %v3507 = vunpack.c.l.b16 %v3371
        %v3508 = vunpack.c.l.b16 %v3372
        %v3509 = vunpack.c.l.b16 %v3373
        %v3510 = vunpack.c.l.b16 %v3374
        %v3511 = vunpack.c.l.b16 %v3375
        %v3512 = vunpack.c.l.b16 %v3376
        %v3513 = vunpack.c.l.b16 %v3377
        %v3514 = vunpack.c.l.b16 %v3378
        %v3515 = vunpack.c.l.b16 %v3379
        %v3516 = vunpack.c.l.b16 %v3380
        %v3517 = vunpack.c.l.b16 %v3381
        %v3518 = vunpack.c.l.b16 %v3382
        %v3519 = vunpack.c.l.b16 %v3383
        %v3520 = vunpack.c.l.b16 %v3384
        %v3521 = vunpack.c.l.b16 %v3385
        %v3522 = vunpack.c.l.b16 %v3386
        %v3523 = vunpack.c.l.b16 %v3387
        %v3524 = vunpack.c.l.b16 %v3388
        %v3525 = vunpack.c.l.b16 %v3389
        %v3526 = vunpack.c.l.b16 %v3390
        %v3527 = vunpack.c.l.b16 %v3391
        %v3528 = vunpack.c.l.b16 %v3392
        %v3529 = vunpack.c.l.b16 %v3393
        %v3530 = vunpack.c.l.b16 %v3394
        %v3531 = vunpack.c.l.b16 %v3395
        %v3532 = vunpack.c.l.b16 %v3396
        %v3533 = vunpack.c.l.b16 %v3397
        %v3534 = vunpack.c.l.b16 %v3398
        %v3535 = vunpack.c.l.b16 %v3399
        %v3536 = vunpack.c.l.b16 %v3400
        %v3537 = vunpack.c.l.b16 %v3401
        %v3538 = vunpack.c.l.b16 %v3402
        %v3539 = vunpack.c.l.b16 %v3403
        %v3540 = vunpack.c.l.b16 %v3404
        %v3541 = vunpack.c.l.b16 %v3405
        %v3542 = vunpack.c.l.b16 %v3406
        %v3543 = vunpack.c.l.b16 %v3407
        %v3544 = vunpack.c.l.b16 %v3408
        %v3545 = vunpack.c.l.b16 %v3409
        %v3546 = vunpack.c.l.b16 %v3410
        %v3547 = vunpack.c.l.b16 %v3411
        %v3548 = vunpack.c.l.b16 %v3412
        %v3549 = vunpack.c.l.b16 %v3413
        %v3550 = vunpack.c.l.b16 %v3414
        %v3551 = vunpack.c.l.b16 %v3415
        %v3552 = vunpack.c.l.b16 %v3416
        %v3553 = vunpack.c.l.b16 %v3417
        %v3554 = vunpack.c.l.b16 %v3418
        %v3555 = vunpack.c.l.b16 %v3419
        %v3556 = vunpack.c.l.b16 %v3420
        %v3557 = vunpack.c.l.b16 %v3421
        %v3558 = vunpack.c.l.b16 %v3422
        %v3559 = vunpack.c.l.b16 %v3423
        %v3560 = vunpack.c.l.b16 %v3424
        %v3561 = vunpack.c.l.b16 %v3425
        %v3562 = vunpack.c.l.b16 %v3426
        %v3563 = vunpack.c.l.b16 %v3427
        %v3564 = vunpack.c.l.b16 %v3428
        %v3565 = vunpack.c.l.b16 %v3429
        %v3566 = vunpack.c.l.b16 %v3430
        %v3567 = vunpack.c.l.b16 %v3431
        %v3568 = vunpack.c.l.b16 %v3432
        %v3569 = vpack.c.b16 %v3506, %v3505
        %v3570 = vpack.c.b16 %v3508, %v3507
        %v3571 = vpack.c.b16 %v3510, %v3509
        %v3572 = vpack.c.b16 %v3512, %v3511
        %v3573 = vpack.c.b16 %v3514, %v3513
        %v3574 = vpack.c.b16 %v3516, %v3515
        %v3575 = vpack.c.b16 %v3518, %v3517
        %v3576 = vpack.c.b16 %v3520, %v3519
        %v3577 = vpack.c.b16 %v3522, %v3521
        %v3578 = vpack.c.b16 %v3524, %v3523
        %v3579 = vpack.c.b16 %v3526, %v3525
        %v3580 = vpack.c.b16 %v3528, %v3527
        %v3581 = vpack.c.b16 %v3530, %v3529
        %v3582 = vpack.c.b16 %v3532, %v3531
        %v3583 = vpack.c.b16 %v3534, %v3533
        %v3584 = vpack.c.b16 %v3536, %v3535
        %v3585 = vpack.c.b16 %v3538, %v3537
        %v3586 = vpack.c.b16 %v3540, %v3539
        %v3587 = vpack.c.b16 %v3542, %v3541
        %v3588 = vpack.c.b16 %v3544, %v3543
        %v3589 = vpack.c.b16 %v3546, %v3545
        %v3590 = vpack.c.b16 %v3548, %v3547
        %v3591 = vpack.c.b16 %v3550, %v3549
        %v3592 = vpack.c.b16 %v3552, %v3551
        %v3593 = vpack.c.b16 %v3554, %v3553
        %v3594 = vpack.c.b16 %v3556, %v3555
        %v3595 = vpack.c.b16 %v3558, %v3557
        %v3596 = vpack.c.b16 %v3560, %v3559
        %v3597 = vpack.c.b16 %v3562, %v3561
        %v3598 = vpack.c.b16 %v3564, %v3563
        %v3599 = vpack.c.b16 %v3566, %v3565
        %v3600 = vpack.c.b16 %v3568, %v3567
        %3633 = vmatprep.subr.bf16.mxu0 0
        %3634 = vmatpush1.bf16.msra.mxu0 %v3569
        %3635 = vmatprep.subr.bf16.mxu0 0
        %3636 = vmatpush1.bf16.msra.mxu0 %v3570
        %3637 = vmatprep.subr.bf16.mxu0 0
        %3638 = vmatpush1.bf16.msra.mxu0 %v3571
        %3639 = vmatprep.subr.bf16.mxu0 0
        %3640 = vmatpush1.bf16.msra.mxu0 %v3572
        %3641 = vmatprep.subr.bf16.mxu0 0
        %3642 = vmatpush1.bf16.msra.mxu0 %v3573
        %3643 = vmatprep.subr.bf16.mxu0 0
        %3644 = vmatpush1.bf16.msra.mxu0 %v3574
        %3645 = vmatprep.subr.bf16.mxu0 0
        %3646 = vmatpush1.bf16.msra.mxu0 %v3575
        %3647 = vmatprep.subr.bf16.mxu0 0
        %3648 = vmatpush1.bf16.msra.mxu0 %v3576
        %3649 = vmatprep.subr.bf16.mxu0 0
        %3650 = vmatpush1.bf16.msra.mxu0 %v3577
        %3651 = vmatprep.subr.bf16.mxu0 0
        %3652 = vmatpush1.bf16.msra.mxu0 %v3578
        %3653 = vmatprep.subr.bf16.mxu0 0
        %3654 = vmatpush1.bf16.msra.mxu0 %v3579
        %3655 = vmatprep.subr.bf16.mxu0 0
        %3656 = vmatpush1.bf16.msra.mxu0 %v3580
        %3657 = vmatprep.subr.bf16.mxu0 0
        %3658 = vmatpush1.bf16.msra.mxu0 %v3581
        %3659 = vmatprep.subr.bf16.mxu0 0
        %3660 = vmatpush1.bf16.msra.mxu0 %v3582
        %3661 = vmatprep.subr.bf16.mxu0 0
        %3662 = vmatpush1.bf16.msra.mxu0 %v3583
        %3663 = vmatprep.subr.bf16.mxu0 0
        %3664 = vmatpush1.bf16.msra.mxu0 %v3584
        %3665 = vmatprep.mubr.bf16.mxu0 %v3365
        %3666 = vmatmul.mubr.bf16.gmra.mrb[0].mxu0 %v3364
        %v3667 = vpop.f32.mrb[0].mxu0
        %v3668 = vadd.f32 %v3439, %v3667
        %v3669 = vpop.f32.mrb[0].mxu0
        %v3670 = vpop.f32.mrb[0].mxu0
        %v3671 = vpop.f32.mrb[0].mxu0
        %3672 = vdwg.mxu0
        %3673 = vmatprep.subr.bf16.mxu0 0
        %3674 = vmatpush1.bf16.msra.mxu0 %v3585
        %3675 = vmatprep.subr.bf16.mxu0 0
        %3676 = vmatpush1.bf16.msra.mxu0 %v3586
        %3677 = vmatprep.subr.bf16.mxu0 0
        %3678 = vmatpush1.bf16.msra.mxu0 %v3587
        %3679 = vmatprep.subr.bf16.mxu0 0
        %3680 = vmatpush1.bf16.msra.mxu0 %v3588
        %3681 = vmatprep.subr.bf16.mxu0 0
        %3682 = vmatpush1.bf16.msra.mxu0 %v3589
        %3683 = vmatprep.subr.bf16.mxu0 0
        %3684 = vmatpush1.bf16.msra.mxu0 %v3590
        %3685 = vmatprep.subr.bf16.mxu0 0
        %3686 = vmatpush1.bf16.msra.mxu0 %v3591
        %3687 = vmatprep.subr.bf16.mxu0 0
        %3688 = vmatpush1.bf16.msra.mxu0 %v3592
        %3689 = vmatprep.subr.bf16.mxu0 0
        %3690 = vmatpush1.bf16.msra.mxu0 %v3593
        %3691 = vmatprep.subr.bf16.mxu0 0
        %3692 = vmatpush1.bf16.msra.mxu0 %v3594
        %3693 = vmatprep.subr.bf16.mxu0 0
        %3694 = vmatpush1.bf16.msra.mxu0 %v3595
        %3695 = vmatprep.subr.bf16.mxu0 0
        %3696 = vmatpush1.bf16.msra.mxu0 %v3596
        %3697 = vmatprep.subr.bf16.mxu0 0
        %3698 = vmatpush1.bf16.msra.mxu0 %v3597
        %3699 = vmatprep.subr.bf16.mxu0 0
        %3700 = vmatpush1.bf16.msra.mxu0 %v3598
        %3701 = vmatprep.subr.bf16.mxu0 0
        %3702 = vmatpush1.bf16.msra.mxu0 %v3599
        %3703 = vmatprep.subr.bf16.mxu0 0
        %3704 = vmatpush1.bf16.msra.mxu0 %v3600
        %3705 = vmatprep.mubr.bf16.mxu0 %v3367
        %3706 = vmatmul.mubr.bf16.gmra.mrb[0].mxu0 %v3366
        %v3707 = vpop.f32.mrb[0].mxu0
        %v3708 = vadd.f32 %v3668, %v3707
        %v3709 = vpop.f32.mrb[0].mxu0
        %v3710 = vpop.f32.mrb[0].mxu0
        %v3711 = vpop.f32.mrb[0].mxu0
        %3712 = vdwg.mxu0
        %v3713 = vadd.f32 %v3708, %v3003
        %v3714 = vld [vmem:[%s556] sm:$0x1]
        %v3716 = vsel %vm903, %v3714, 0
        %3718 = vmatprep.subr.mxu0 0.0
        %3719 = vmatpush1.msra.mxu0 %v3713
        %3720 = vmatprep.subr.mxu0 0.0
        %3721 = vmatpush1.msra.mxu0 0.0
        %3722 = vmatprep.subr.mxu0 0.0
        %3723 = vmatpush1.msra.mxu0 0.0
        %3724 = vmatprep.subr.mxu0 0.0
        %3725 = vmatpush1.msra.mxu0 0.0
        %3726 = vmatprep.subr.mxu0 0.0
        %3727 = vmatpush1.msra.mxu0 0.0
        %3728 = vmatprep.subr.mxu0 0.0
        %3729 = vmatpush1.msra.mxu0 0.0
        %3730 = vmatprep.subr.mxu0 0.0
        %3731 = vmatpush1.msra.mxu0 0.0
        %3732 = vmatprep.subr.mxu0 0.0
        %3733 = vmatpush1.msra.mxu0 0.0
        %3734 = vmatprep.subr.mxu0 0.0
        %3735 = vmatpush1.msra.mxu0 0.0
        %3736 = vmatprep.subr.mxu0 0.0
        %3737 = vmatpush1.msra.mxu0 0.0
        %3738 = vmatprep.subr.mxu0 0.0
        %3739 = vmatpush1.msra.mxu0 0.0
        %3740 = vmatprep.subr.mxu0 0.0
        %3741 = vmatpush1.msra.mxu0 0.0
        %3742 = vmatprep.subr.mxu0 0.0
        %3743 = vmatpush1.msra.mxu0 0.0
        %3744 = vmatprep.subr.mxu0 0.0
        %3745 = vmatpush1.msra.mxu0 0.0
        %3746 = vmatprep.subr.mxu0 0.0
        %3747 = vmatpush1.msra.mxu0 0.0
        %3748 = vmatprep.subr.mxu0 0.0
        %3749 = vmatpush1.msra.mxu0 0.0
        %3750 = vmatprep.subr.mxu0 0.0
        %3751 = vmatpush1.msra.mxu0 0.0
        %3752 = vmatprep.subr.mxu0 0.0
        %3753 = vmatpush1.msra.mxu0 0.0
        %3754 = vmatprep.subr.mxu0 0.0
        %3755 = vmatpush1.msra.mxu0 0.0
        %3756 = vmatprep.subr.mxu0 0.0
        %3757 = vmatpush1.msra.mxu0 0.0
        %3758 = vmatprep.subr.mxu0 0.0
        %3759 = vmatpush1.msra.mxu0 0.0
        %3760 = vmatprep.subr.mxu0 0.0
        %3761 = vmatpush1.msra.mxu0 0.0
        %3762 = vmatprep.subr.mxu0 0.0
        %3763 = vmatpush1.msra.mxu0 0.0
        %3764 = vmatprep.subr.mxu0 0.0
        %3765 = vmatpush1.msra.mxu0 0.0
        %3766 = vmatprep.subr.mxu0 0.0
        %3767 = vmatpush1.msra.mxu0 0.0
        %3768 = vmatprep.subr.mxu0 0.0
        %3769 = vmatpush1.msra.mxu0 0.0
        %3770 = vmatprep.subr.mxu0 0.0
        %3771 = vmatpush1.msra.mxu0 0.0
        %3772 = vmatprep.subr.mxu0 0.0
        %3773 = vmatpush1.msra.mxu0 0.0
        %3774 = vmatprep.subr.mxu0 0.0
        %3775 = vmatpush1.msra.mxu0 0.0
        %3776 = vmatprep.subr.mxu0 0.0
        %3777 = vmatpush1.msra.mxu0 0.0
        %3778 = vmatprep.subr.mxu0 0.0
        %3779 = vmatpush1.msra.mxu0 0.0
        %3780 = vmatprep.subr.mxu0 0.0
        %3781 = vmatpush1.msra.mxu0 0.0
        %3782 = vmatprep.mubr.f32.mxu0 0.0
        %3783 = vmatmul.mubr.f32.gmra.mrb[0].mxu0 %v3716
        %v3784 = vpop.f32.mrb[0].mxu0
        %v3785 = vadd.f32 0.0, %v3784
        %v3786 = vpop.f32.mrb[0].mxu0
        %3787 = vdwg.mxu0
        %v3788 = vld [vmem:[%s14] sm:$0x1]
        %v3789 = vld [vmem:[%s15] sm:$0x1]
        %vm3790 = vcmask 1040384
        %v3791 = vsel %vm3790, %v3785, 0.0
        %3792 = vadd.xlane.f32.xlu0 %v3791
        %v3793 = vpop.xlane.xlu0 %3792
        %v3794 = vmul.f32 %v3793, %v568
        %v3795 = vsub.f32 %v3785, %v3794
        %v3796 = vmul.f32 %v3795, %v3795
        %v3797 = vsel %vm3790, %v3796, 0.0
        %3798 = vadd.xlane.f32.xlu0 %v3797
        %v3799 = vpop.xlane.xlu0 %3798
        %v3800 = vmul.f32 %v3799, %v568
        %v3801 = vadd.f32 %v3800, 1e-05
        %v3802 = vrsqrt.pop %v3801
        %v3803 = vmul.f32 %v3795, %v3802
        %v3804 = vmul.f32 %v3803, %v3788
        %v3805 = vadd.f32 %v3804, %v3789
        %v3806 = vpack.c.bf16 %v3805, %v3805
        %v3807 = vld [vmem:[%s16] sm:$0xf]
        %v3808 = vld [vmem:[%s16 + $0x4] sm:$0xf]
        %v3809 = vld [vmem:[%s16 + $0x8] sm:$0xf]
        %v3810 = vld [vmem:[%s16 + $0xc] sm:$0xf]
        %v3811 = vld [vmem:[%s16 + $0x10] sm:$0xf]
        %v3812 = vld [vmem:[%s16 + $0x14] sm:$0xf]
        %v3813 = vld [vmem:[%s16 + $0x18] sm:$0xf]
        %v3814 = vld [vmem:[%s16 + $0x1c] sm:$0xf]
        %v3815 = vld [vmem:[%s16 + $0x20] sm:$0xf]
        %v3816 = vld [vmem:[%s16 + $0x24] sm:$0xf]
        %v3817 = vld [vmem:[%s16 + $0x28] sm:$0xf]
        %v3818 = vld [vmem:[%s16 + $0x2c] sm:$0xf]
        %v3819 = vld [vmem:[%s16 + $0x30] sm:$0xf]
        %v3820 = vld [vmem:[%s16 + $0x34] sm:$0xf]
        %v3821 = vld [vmem:[%s16 + $0x38] sm:$0xf]
        %v3822 = vld [vmem:[%s16 + $0x3c] sm:$0xf]
        %v3839 = vunpack.c.l.b16 %v3807
        %v3840 = vunpack.c.l.b16 %v3808
        %v3841 = vunpack.c.l.b16 %v3809
        %v3842 = vunpack.c.l.b16 %v3810
        %v3843 = vunpack.c.l.b16 %v3811
        %v3844 = vunpack.c.l.b16 %v3812
        %v3845 = vunpack.c.l.b16 %v3813
        %v3846 = vunpack.c.l.b16 %v3814
        %v3847 = vunpack.c.l.b16 %v3815
        %v3848 = vunpack.c.l.b16 %v3816
        %v3849 = vunpack.c.l.b16 %v3817
        %v3850 = vunpack.c.l.b16 %v3818
        %v3851 = vunpack.c.l.b16 %v3819
        %v3852 = vunpack.c.l.b16 %v3820
        %v3853 = vunpack.c.l.b16 %v3821
        %v3854 = vunpack.c.l.b16 %v3822
        %v3855 = vpack.c.b16 %v3840, %v3839
        %v3856 = vpack.c.b16 %v3842, %v3841
        %v3857 = vpack.c.b16 %v3844, %v3843
        %v3858 = vpack.c.b16 %v3846, %v3845
        %v3859 = vpack.c.b16 %v3848, %v3847
        %v3860 = vpack.c.b16 %v3850, %v3849
        %v3861 = vpack.c.b16 %v3852, %v3851
        %v3862 = vpack.c.b16 %v3854, %v3853
        %3871 = vmatprep.subr.bf16.mxu0 0
        %3872 = vmatpush1.bf16.msra.mxu0 %v3855
        %3873 = vmatprep.subr.bf16.mxu0 0
        %3874 = vmatpush1.bf16.msra.mxu0 %v3856
        %3875 = vmatprep.subr.bf16.mxu0 0
        %3876 = vmatpush1.bf16.msra.mxu0 %v3857
        %3877 = vmatprep.subr.bf16.mxu0 0
        %3878 = vmatpush1.bf16.msra.mxu0 %v3858
        %3879 = vmatprep.subr.bf16.mxu0 0
        %3880 = vmatpush1.bf16.msra.mxu0 %v3859
        %3881 = vmatprep.subr.bf16.mxu0 0
        %3882 = vmatpush1.bf16.msra.mxu0 %v3860
        %3883 = vmatprep.subr.bf16.mxu0 0
        %3884 = vmatpush1.bf16.msra.mxu0 %v3861
        %3885 = vmatprep.subr.bf16.mxu0 0
        %3886 = vmatpush1.bf16.msra.mxu0 %v3862
        %3887 = vmatprep.subr.bf16.mxu0 0
        %3888 = vmatpush1.bf16.msra.mxu0 0
        %3889 = vmatprep.subr.bf16.mxu0 0
        %3890 = vmatpush1.bf16.msra.mxu0 0
        %3891 = vmatprep.subr.bf16.mxu0 0
        %3892 = vmatpush1.bf16.msra.mxu0 0
        %3893 = vmatprep.subr.bf16.mxu0 0
        %3894 = vmatpush1.bf16.msra.mxu0 0
        %3895 = vmatprep.subr.bf16.mxu0 0
        %3896 = vmatpush1.bf16.msra.mxu0 0
        %3897 = vmatprep.subr.bf16.mxu0 0
        %3898 = vmatpush1.bf16.msra.mxu0 0
        %3899 = vmatprep.subr.bf16.mxu0 0
        %3900 = vmatpush1.bf16.msra.mxu0 0
        %3901 = vmatprep.subr.bf16.mxu0 0
        %3902 = vmatpush1.bf16.msra.mxu0 0
        %3903 = vmatprep.mubr.bf16.mxu0 0
        %3904 = vmatmul.mubr.bf16.gmra.mrb[0].mxu0 %v3806
        %v3905 = vpop.f32.mrb[0].mxu0
        %v3906 = vadd.f32 0.0, %v3905
        %v3907 = vpop.f32.mrb[0].mxu0
        %v3908 = vpop.f32.mrb[0].mxu0
        %v3909 = vpop.f32.mrb[0].mxu0
        %3910 = vdwg.mxu0
        %3911 = vst [vmem:[%s549] sm:$0x1] %v3906
        %s3912 = sand.u32 %s406, 1
        %s3913 = scalar_lea.sflag [#allocation3], %s3912
        %s3914 = sand.u32 %s406, 1
        %s3915 = scalar_lea.vmem [#allocation2], %s3914
        // Predicated region
        $region89: #{clip_text_encode.1} parent=87 // pred_check
          %p3916 = pneg %p416
        $region90: #{clip_text_encode.1} parent=87 // pred_check_branch
          %3918 = sbr.rel (%p3916) target = $region92
        $region91: #{clip_text_encode.1} parent=87 // pred_region
          %s3920 = ssub.s32 16, 16
          %3921 = vsyncadd %s3913, %s3920
          %s3922 = smul.addr %s31, 16
          %s3923 = scalar_lea.hbm %s17, %s3922
          %s3925 = sshll.u32 %s3915, 4
          %s3926 = int_to_ptr.vmem [resolvable:$true] %s3925
          %3928 = dma.vmem_to_hbm [thread:$0]  %s3926, 16, %s3923, %s3913
        $region92: #{clip_text_encode.1} parent=87 // pred_fallthru
          _
      $region88: #{clip_text_encode.1} parent=5 // pred_fallthru
        _
      %p3929 = scmp.le.s32.totalorder 2, %s26
      // Predicated region
      $region93: #{clip_text_encode.1} parent=5 // pred_check
        %p3930 = pneg %p3929
      $region94: #{clip_text_encode.1} parent=5 // pred_check_branch
        %3932 = sbr.rel (%p3930) target = $region96
      $region95: #{clip_text_encode.1} parent=5 // pred_region
        %s3933 = ssub.s32 %s26, 2
        // Predicated region
        $region97: #{clip_text_encode.1} parent=95 // pred_check
          %p3934 = pneg %p422
        $region98: #{clip_text_encode.1} parent=95 // pred_check_branch
          %3936 = sbr.rel (%p3934) target = $region100
        $region99: #{clip_text_encode.1} parent=95 // pred_region
          %s3937 = sand.u32 %s407, 1
          %s3938 = scalar_lea.sflag [#allocation3], %s3937
          %s3939 = sand.u32 %s407, 1
          %s3940 = scalar_lea.vmem [#allocation2], %s3939
          %3941 = dma.done %s3938, 16
        $region100: #{clip_text_encode.1} parent=95 // pred_fallthru
          _
      $region96: #{clip_text_encode.1} parent=5 // pred_fallthru
        _
    $region6: #{clip_text_encode.1} parent=1 // loop_footer
      %s30 = sadd.s32 1, %s26
    $region7: #{clip_text_encode.1} parent=1 // loop_footer_branch
      %25 = sbr.rel target = $region3
    $region8: #{clip_text_encode.1} parent=1 // loop_exit
      _
    %3942 = vsyncpa [#allocation3], 1
    %s3943 = scalar_lea.sflag [#allocation3], 1
    %3944 = vsyncpa %s3943, 1

</llo_original>
